<compile_context>
chip_gen: v6e
topology: v6e:2x2x1
jax: 0.10.0
libtpu: 0.0.40
codegen_flags: <defaults>
</compile_context>

<pallas_src>
import functools

import jax
import jax.numpy as jnp
import numpy as np
from jax import lax
from jax.experimental import pallas as pl
from jax.experimental.pallas import tpu as pltpu


def _vq_kernel(z_ref, win_ref, bin_ref, cb_ref, cbsq_ref, cbw_ref, bout_ref,
               out_ref, part_ref, *, n_valid, token_tile):
    i = pl.program_id(0)

    z = z_ref[...]                                                  # (tn, Din)

    # --- project_in: 1x1 conv == per-token matmul + bias (MXU) ---
    z_e = jnp.dot(z, win_ref[...],
                  preferred_element_type=jnp.float32) + bin_ref[...]   # (tn, Dc)

    cb = cb_ref[...]                                                # (K, Dc)
    k = cb.shape[0]

    # --- euclidean argmin: z_sq is constant per row, so argmin over
    #     (||E||^2 - 2 z_e.E^T) is identical to argmin over the full distance.
    cross = lax.dot_general(z_e, cb, (((1,), (1,)), ((), ())),
                            preferred_element_type=jnp.float32)     # (tn, K)
    d_part = cbsq_ref[...] - 2.0 * cross                            # (tn, K)
    min_part = jnp.min(d_part, axis=-1, keepdims=True)              # (tn, 1)

    # first-occurrence argmin (torch.argmin semantics)
    iota_k = lax.broadcasted_iota(jnp.int32, d_part.shape, 1)
    idx = jnp.min(jnp.where(d_part == min_part, iota_k, k),
                  axis=-1, keepdims=True)                           # (tn, 1)
    onehot = (iota_k == idx).astype(jnp.float32)                    # (tn, K)

    # --- fused embedding lookup + project_out:
    #     out = codebook[idx] @ W_out + b_out == onehot @ (codebook @ W_out) + b_out
    #     (single contraction-K matmul; straight-through output is value-wise z_q)
    out_ref[...] = (jnp.dot(onehot, cbw_ref[...],
                            preferred_element_type=jnp.float32)
                    + bout_ref[...]).astype(out_ref.dtype)

    # --- VQ loss: ||z_q - z_e||^2 per token equals the selected distance, so
    #     accumulate min_d directly (no z_q materialization, no diff-square).
    z_sq = jnp.sum(z_e * z_e, axis=-1, keepdims=True)               # (tn, 1)
    min_d = z_sq + min_part                                         # (tn, 1)

    # mask zero-padded tail tokens out of the loss
    tok = i * token_tile + lax.broadcasted_iota(jnp.int32, min_d.shape, 0)
    partial = jnp.sum(jnp.where(tok < n_valid, min_d, 0.0))

    # per-tile partial sum -> independent output block (grid axis is parallel)
    part_ref[...] = jnp.full(part_ref.shape, partial, dtype=jnp.float32)


def _round_up(x, m):
    return (x + m - 1) // m * m


def vector_quantizer_forward(z_nchw, w_in, b_in, codebook, w_out, b_out,
                             *, beta=0.25, token_tile=1024):
    b, c, h, w = z_nchw.shape
    din = c
    k, dc = codebook.shape
    n = b * h * w

    # large tiles (sweepable); pad token count so any shape is accepted
    tn = _round_up(min(int(token_tile), _round_up(n, 8)), 8)
    n_pad = _round_up(n, tn)
    num_tiles = n_pad // tn

    z_tok = jnp.transpose(z_nchw, (0, 2, 3, 1)).reshape(n, din).astype(jnp.float32)
    if n_pad != n:
        z_tok = jnp.pad(z_tok, ((0, n_pad - n), (0, 0)))

    cb = codebook.astype(jnp.float32)
    cb_sq = jnp.sum(cb * cb, axis=-1)[None, :]                      # (1, K)
    w_in32 = w_in.astype(jnp.float32)
    w_out32 = w_out.astype(jnp.float32)
    cb_wout = jnp.dot(cb, w_out32)                                  # (K, Din) fused lookup+project_out

    kernel = functools.partial(_vq_kernel, n_valid=n, token_tile=tn)

    # explicit VMEM budget: double-buffered IO tiles + invariant operands + temps
    f32 = 4
    est = (2 * tn * din + 2 * tn * din + 2 * 8 * 128                # z / out / partial tiles (x2 buf)
           + 2 * (din * dc + dc + k * dc + k + k * din + din)       # invariant operands (x2 buf)
           + 2 * tn * k + tn * dc + 2 * tn * din + 4 * tn           # d_part/onehot/z_e/out temporaries
           ) * f32
    vmem_limit = int(min(64 * 1024 * 1024, max(32 * 1024 * 1024, 2 * est)))

    out_tok, partials = pl.pallas_call(
        kernel,
        out_shape=(jax.ShapeDtypeStruct((n_pad, din), jnp.float32),
                   jax.ShapeDtypeStruct((num_tiles, 8, 128), jnp.float32)),
        grid_spec=pltpu.PrefetchScalarGridSpec(
            num_scalar_prefetch=0,
            grid=(num_tiles,),
            in_specs=[
                pl.BlockSpec((tn, din), lambda i: (i, 0)),          # z tokens
                pl.BlockSpec((din, dc), lambda i: (0, 0)),          # W_in
                pl.BlockSpec((1, dc), lambda i: (0, 0)),            # b_in
                pl.BlockSpec((k, dc), lambda i: (0, 0)),            # codebook
                pl.BlockSpec((1, k), lambda i: (0, 0)),             # ||E||^2
                pl.BlockSpec((k, din), lambda i: (0, 0)),           # codebook @ W_out
                pl.BlockSpec((1, din), lambda i: (0, 0)),           # b_out
            ],
            out_specs=(
                pl.BlockSpec((tn, din), lambda i: (i, 0)),          # project_out(z_q)
                pl.BlockSpec((1, 8, 128), lambda i: (i, 0, 0)),     # per-tile loss partials
            ),
        ),
        compiler_params=pltpu.CompilerParams(
            dimension_semantics=("parallel",),                      # loss is per-tile -> safe
            vmem_limit_bytes=vmem_limit),
    )(z_tok, w_in32, b_in.reshape(1, dc).astype(jnp.float32),
      cb, cb_sq, cb_wout, b_out.reshape(1, din).astype(jnp.float32))

    loss = jnp.sum(partials[:, 0, 0]) * (1.0 + float(beta)) / jnp.float32(n * dc)
    out_tok = out_tok[:n]
    z_q_nchw = jnp.transpose(out_tok.reshape(b, h, w, din), (0, 3, 1, 2))
    return loss, z_q_nchw


def _reference_forward(z_nchw, w_in, b_in, codebook, w_out, b_out, beta):
    b, c, h, w = z_nchw.shape
    z_tok = jnp.transpose(z_nchw, (0, 2, 3, 1)).reshape(-1, c)
    z_e = z_tok @ w_in + b_in
    dist = (jnp.sum(z_e ** 2, axis=1, keepdims=True)
            - 2.0 * z_e @ codebook.T
            + jnp.sum(codebook ** 2, axis=1))
    idx = jnp.argmin(dist, axis=1)
    z_q = codebook[idx]
    loss = (1.0 + beta) * jnp.mean((z_q - z_e) ** 2)
    out = z_q @ w_out + b_out
    out = jnp.transpose(out.reshape(b, h, w, -1), (0, 3, 1, 2))
    return loss, out


if __name__ == "__main__":
    # Small, VectorQuantizer-consistent shapes.
    batch, latent_dim, H, W = 2, 32, 16, 16
    codebook_dim, code_dim = 128, 16
    beta = 0.25

    key = jax.random.PRNGKey(0)
    k1, k2, k3, k4, k5, k6 = jax.random.split(key, 6)

    z = jax.random.normal(k1, (batch, latent_dim, H, W), jnp.float32)
    # project_in: Conv2d(latent_dim, code_dim, 1) -> weight as (latent_dim, code_dim)
    w_in = jax.random.normal(k2, (latent_dim, code_dim), jnp.float32) * 0.1
    b_in = jax.random.normal(k3, (code_dim,), jnp.float32) * 0.1
    # codebook: Embedding(codebook_dim, code_dim), uniform(-1/K, 1/K) init
    codebook = jax.random.uniform(
        k4, (codebook_dim, code_dim), jnp.float32,
        minval=-1.0 / codebook_dim, maxval=1.0 / codebook_dim)
    # project_out: Conv2d(code_dim, latent_dim, 1) -> weight as (code_dim, latent_dim)
    w_out = jax.random.normal(k5, (code_dim, latent_dim), jnp.float32) * 0.1
    b_out = jax.random.normal(k6, (latent_dim,), jnp.float32) * 0.1

    loss, z_q = vector_quantizer_forward(
        z, w_in, b_in, codebook, w_out, b_out, beta=beta)
    (loss, z_q) = jax.block_until_ready((loss, z_q))

    ref_loss, ref_zq = _reference_forward(
        z, w_in, b_in, codebook, w_out, b_out, beta)

    assert z_q.shape == (batch, latent_dim, H, W), z_q.shape
    np.testing.assert_allclose(np.asarray(loss), np.asarray(ref_loss),
                               rtol=1e-3, atol=1e-4)
    np.testing.assert_allclose(np.asarray(z_q), np.asarray(ref_zq),
                               rtol=1e-3, atol=1e-3)
    print("KERNEL_OK")
</pallas_src>

<mosaic_0001>
module attributes {stable_mosaic.version = 11 : i64} {
  func.func @_vq_kernel(%arg0: i32, %arg1: memref<512x32xf32, #tpu.memory_space<vmem>>, %arg2: memref<32x16xf32, #tpu.memory_space<vmem>>, %arg3: memref<1x16xf32, #tpu.memory_space<vmem>>, %arg4: memref<128x16xf32, #tpu.memory_space<vmem>>, %arg5: memref<1x128xf32, #tpu.memory_space<vmem>>, %arg6: memref<128x32xf32, #tpu.memory_space<vmem>>, %arg7: memref<1x32xf32, #tpu.memory_space<vmem>>, %arg8: memref<512x32xf32, #tpu.memory_space<vmem>>, %arg9: memref<1x8x128xf32, #tpu.memory_space<vmem>>) attributes {dimension_semantics = [#tpu.dimension_semantics<parallel>], iteration_bounds = array<i64: 1>, scalar_prefetch = 0 : i64, scratch_operands = 0 : i64, tpu.core_type = #tpu.core_type<tc>, window_params = [{transform_indices = @transform_0, window_bounds = array<i64: 512, 32>}, {pipeline_mode = #tpu.pipeline_mode<synchronous>, transform_indices = @transform_1, window_bounds = array<i64: 32, 16>}, {pipeline_mode = #tpu.pipeline_mode<synchronous>, transform_indices = @transform_2, window_bounds = array<i64: 1, 16>}, {pipeline_mode = #tpu.pipeline_mode<synchronous>, transform_indices = @transform_3, window_bounds = array<i64: 128, 16>}, {pipeline_mode = #tpu.pipeline_mode<synchronous>, transform_indices = @transform_4, window_bounds = array<i64: 1, 128>}, {pipeline_mode = #tpu.pipeline_mode<synchronous>, transform_indices = @transform_5, window_bounds = array<i64: 128, 32>}, {pipeline_mode = #tpu.pipeline_mode<synchronous>, transform_indices = @transform_6, window_bounds = array<i64: 1, 32>}, {transform_indices = @transform_7, window_bounds = array<i64: 512, 32>}, {transform_indices = @transform_8, window_bounds = array<i64: 1, 8, 128>}]} {
    %c0 = arith.constant 0 : index
    %c0_0 = arith.constant 0 : index
    %0 = vector.load %arg1[%c0, %c0_0] : memref<512x32xf32, #tpu.memory_space<vmem>>, vector<512x32xf32>
    %c0_1 = arith.constant 0 : index
    %c0_2 = arith.constant 0 : index
    %1 = vector.load %arg2[%c0_1, %c0_2] : memref<32x16xf32, #tpu.memory_space<vmem>>, vector<32x16xf32>
    %cst = arith.constant dense<0.000000e+00> : vector<512x16xf32>
    %2 = tpu.matmul %0, %1, %cst {dimension_numbers = #tpu.dot_dimension_numbers<[1], [0], [0], [1], [0, 0, 1, 1], [], []>} : vector<512x32xf32>, vector<32x16xf32>, vector<512x16xf32> -> vector<512x16xf32>
    %c0_3 = arith.constant 0 : index
    %c0_4 = arith.constant 0 : index
    %3 = vector.load %arg3[%c0_3, %c0_4] : memref<1x16xf32, #tpu.memory_space<vmem>>, vector<1x16xf32>
    %4 = vector.broadcast %3 : vector<1x16xf32> to vector<512x16xf32>
    %5 = arith.addf %2, %4 : vector<512x16xf32>
    %c0_5 = arith.constant 0 : index
    %c0_6 = arith.constant 0 : index
    %6 = vector.load %arg4[%c0_5, %c0_6] : memref<128x16xf32, #tpu.memory_space<vmem>>, vector<128x16xf32>
    %cst_7 = arith.constant dense<0.000000e+00> : vector<512x128xf32>
    %7 = tpu.matmul %5, %6, %cst_7 {dimension_numbers = #tpu.dot_dimension_numbers<[1], [1], [0], [0], [0, 0, 1, 0], [], []>} : vector<512x16xf32>, vector<128x16xf32>, vector<512x128xf32> -> vector<512x128xf32>
    %c0_8 = arith.constant 0 : index
    %c0_9 = arith.constant 0 : index
    %8 = vector.load %arg5[%c0_8, %c0_9] : memref<1x128xf32, #tpu.memory_space<vmem>>, vector<1x128xf32>
    %cst_10 = arith.constant 2.000000e+00 : f32
    %9 = vector.broadcast %cst_10 : f32 to vector<512x128xf32>
    %10 = arith.mulf %9, %7 : vector<512x128xf32>
    %11 = vector.broadcast %8 : vector<1x128xf32> to vector<512x128xf32>
    %12 = arith.subf %11, %10 : vector<512x128xf32>
    %cst_11 = arith.constant dense<0x7F800000> : vector<512xf32>
    %13 = vector.multi_reduction <minimumf>, %12, %cst_11 [1] : vector<512x128xf32> to vector<512xf32>
    %14 = vector.shape_cast %13 : vector<512xf32> to vector<512x1xf32>
    %15 = tpu.iota {dimensions = array<i32: 1>} : vector<512x128xi32>
    %16 = vector.broadcast %14 : vector<512x1xf32> to vector<512x128xf32>
    %17 = arith.cmpf oeq, %12, %16 : vector<512x128xf32>
    %c128_i32 = arith.constant 128 : i32
    %18 = vector.broadcast %c128_i32 : i32 to vector<512x128xi32>
    %19 = arith.select %17, %15, %18 : vector<512x128xi1>, vector<512x128xi32>
    %cst_12 = arith.constant dense<2147483647> : vector<512xi32>
    %20 = vector.multi_reduction <minsi>, %19, %cst_12 [1] : vector<512x128xi32> to vector<512xi32>
    %21 = vector.shape_cast %20 : vector<512xi32> to vector<512x1xi32>
    %22 = vector.broadcast %21 : vector<512x1xi32> to vector<512x128xi32>
    %23 = arith.cmpi eq, %15, %22 : vector<512x128xi32>
    %24 = arith.extui %23 : vector<512x128xi1> to vector<512x128xi32>
    %25 = arith.sitofp %24 : vector<512x128xi32> to vector<512x128xf32>
    %c0_13 = arith.constant 0 : index
    %c0_14 = arith.constant 0 : index
    %26 = vector.load %arg6[%c0_13, %c0_14] : memref<128x32xf32, #tpu.memory_space<vmem>>, vector<128x32xf32>
    %cst_15 = arith.constant dense<0.000000e+00> : vector<512x32xf32>
    %27 = tpu.matmul %25, %26, %cst_15 {dimension_numbers = #tpu.dot_dimension_numbers<[1], [0], [0], [1], [0, 0, 1, 1], [], []>} : vector<512x128xf32>, vector<128x32xf32>, vector<512x32xf32> -> vector<512x32xf32>
    %c0_16 = arith.constant 0 : index
    %c0_17 = arith.constant 0 : index
    %28 = vector.load %arg7[%c0_16, %c0_17] : memref<1x32xf32, #tpu.memory_space<vmem>>, vector<1x32xf32>
    %29 = vector.broadcast %28 : vector<1x32xf32> to vector<512x32xf32>
    %30 = arith.addf %27, %29 : vector<512x32xf32>
    %c0_18 = arith.constant 0 : index
    %c0_19 = arith.constant 0 : index
    %31 = vector.load %arg8[%c0_18, %c0_19] : memref<512x32xf32, #tpu.memory_space<vmem>>, vector<512x32xf32>
    tpu.vector_store %arg8[%c0_18, %c0_19], %30 {strides = array<i32>} : memref<512x32xf32, #tpu.memory_space<vmem>>, vector<512x32xf32>,
    %32 = arith.mulf %5, %5 : vector<512x16xf32>
    %cst_20 = arith.constant dense<0.000000e+00> : vector<512xf32>
    %33 = vector.multi_reduction <add>, %32, %cst_20 [1] : vector<512x16xf32> to vector<512xf32>
    %34 = vector.shape_cast %33 : vector<512xf32> to vector<512x1xf32>
    %35 = arith.addf %34, %14 : vector<512x1xf32>
    %c512_i32 = arith.constant 512 : i32
    %36 = arith.muli %arg0, %c512_i32 : i32
    %37 = tpu.iota {dimensions = array<i32: 0>} : vector<512x1xi32>
    %38 = vector.broadcast %36 : i32 to vector<512x1xi32>
    %39 = arith.addi %38, %37 : vector<512x1xi32>
    %c512_i32_21 = arith.constant 512 : i32
    %40 = vector.broadcast %c512_i32_21 : i32 to vector<512x1xi32>
    %41 = arith.cmpi slt, %39, %40 : vector<512x1xi32>
    %cst_22 = arith.constant 0.000000e+00 : f32
    %42 = vector.broadcast %cst_22 : f32 to vector<512x1xf32>
    %43 = arith.select %41, %35, %42 : vector<512x1xi1>, vector<512x1xf32>
    %44 = vector.shape_cast %43 : vector<512x1xf32> to vector<1x512x1xf32>
    %cst_23 = arith.constant dense<0.000000e+00> : vector<1xf32>
    %45 = vector.multi_reduction <add>, %44, %cst_23 [1, 2] : vector<1x512x1xf32> to vector<1xf32>
    %46 = vector.shape_cast %45 : vector<1xf32> to vector<1x1x1xf32>
    %47 = vector.extract %46[0, 0, 0] : f32 from vector<1x1x1xf32>
    %48 = vector.broadcast %47 : f32 to vector<1x8x128xf32>
    %c0_24 = arith.constant 0 : index
    %c0_25 = arith.constant 0 : index
    %c0_26 = arith.constant 0 : index
    %49 = vector.load %arg9[%c0_24, %c0_25, %c0_26] : memref<1x8x128xf32, #tpu.memory_space<vmem>>, vector<1x8x128xf32>
    tpu.vector_store %arg9[%c0_24, %c0_25, %c0_26], %48 {strides = array<i32>} : memref<1x8x128xf32, #tpu.memory_space<vmem>>, vector<1x8x128xf32>,
    return
  }
  func.func @transform_0(%arg0: i32) -> (i32, i32) {
    %c0_i32 = arith.constant 0 : i32
    %c0_i32_0 = arith.constant 0 : i32
    return %arg0, %c0_i32 : i32, i32
  }
  func.func @transform_1(%arg0: i32) -> (i32, i32) {
    %c0_i32 = arith.constant 0 : i32
    %c0_i32_0 = arith.constant 0 : i32
    %c0_i32_1 = arith.constant 0 : i32
    return %c0_i32, %c0_i32_0 : i32, i32
  }
  func.func @transform_2(%arg0: i32) -> (i32, i32) {
    %c0_i32 = arith.constant 0 : i32
    %c0_i32_0 = arith.constant 0 : i32
    %c0_i32_1 = arith.constant 0 : i32
    return %c0_i32, %c0_i32_0 : i32, i32
  }
  func.func @transform_3(%arg0: i32) -> (i32, i32) {
    %c0_i32 = arith.constant 0 : i32
    %c0_i32_0 = arith.constant 0 : i32
    %c0_i32_1 = arith.constant 0 : i32
    return %c0_i32, %c0_i32_0 : i32, i32
  }
  func.func @transform_4(%arg0: i32) -> (i32, i32) {
    %c0_i32 = arith.constant 0 : i32
    %c0_i32_0 = arith.constant 0 : i32
    %c0_i32_1 = arith.constant 0 : i32
    return %c0_i32, %c0_i32_0 : i32, i32
  }
  func.func @transform_5(%arg0: i32) -> (i32, i32) {
    %c0_i32 = arith.constant 0 : i32
    %c0_i32_0 = arith.constant 0 : i32
    %c0_i32_1 = arith.constant 0 : i32
    return %c0_i32, %c0_i32_0 : i32, i32
  }
  func.func @transform_6(%arg0: i32) -> (i32, i32) {
    %c0_i32 = arith.constant 0 : i32
    %c0_i32_0 = arith.constant 0 : i32
    %c0_i32_1 = arith.constant 0 : i32
    return %c0_i32, %c0_i32_0 : i32, i32
  }
  func.func @transform_7(%arg0: i32) -> (i32, i32) {
    %c0_i32 = arith.constant 0 : i32
    %c0_i32_0 = arith.constant 0 : i32
    return %arg0, %c0_i32 : i32, i32
  }
  func.func @transform_8(%arg0: i32) -> (i32, i32, i32) {
    %c0_i32 = arith.constant 0 : i32
    %c0_i32_0 = arith.constant 0 : i32
    %c0_i32_1 = arith.constant 0 : i32
    return %arg0, %c0_i32, %c0_i32_0 : i32, i32, i32
  }
}

</mosaic_0001>

<llo_original>
// kernel: tpu_custom_call.1
$region0: #{tpu_custom_call.1}
  #allocation0 [shape = 'u32[]', space=smem, size = 0x4, offset = 0x4, fixed_abs, tag = 'smem constant byte address 0x4 - core index']
  #allocation1 [shape = 'u32[144,128]{1,0:T(1,128)}', space=vmem, size = 0x12000, scoped, tag = 'internal scratch']
  %s0 = inlined_call_operand.vmem [shape: f32[512,32], index: 0, kind: input, shape index: {}]
  %s1 = inlined_call_operand.vmem [shape: f32[32,16], index: 1, kind: input, shape index: {}]
  %s2 = inlined_call_operand.vmem [shape: f32[1,16], index: 2, kind: input, shape index: {}]
  %s3 = inlined_call_operand.vmem [shape: f32[128,16], index: 3, kind: input, shape index: {}]
  %s4 = inlined_call_operand.vmem [shape: f32[1,128], index: 4, kind: input, shape index: {}]
  %s5 = inlined_call_operand.vmem [shape: f32[128,32], index: 5, kind: input, shape index: {}]
  %s6 = inlined_call_operand.vmem [shape: f32[1,32], index: 6, kind: input, shape index: {}]
  %s7 = inlined_call_operand.vmem [shape: f32[512,32], index: 7, kind: output, shape index: {0}]
  %s8 = inlined_call_operand.hbm [shape: f32[1,8,128], index: 8, kind: output, shape index: {1}]
  %9 = xla_tuple %s7, %s8
  %s10 = sld [smem:[#allocation0]]
  $region46: #{tpu_custom_call.1} parent=0
    _
  %s12 = ssub.s32 1, %s10
  %s13 = scalar_select 0, %s12, %s10
  $region1: #{tpu_custom_call.1} parent=0
    #allocation2 [shape = 'u8[4096]{0}', space=vmem, size = 0x1000, scoped, tag = 'output window, operand 1, single buffered']
    #allocation3 [shape = 's32[1]{0}', space=sflag, size = 0x4, scoped, tag = 'scoped memory for tpu_custom_call.1']
    %14 = vsyncpa [#allocation3], 0
    // Predicated region
    $region2: #{tpu_custom_call.1} parent=1 // pred_check
      _
    $region3: #{tpu_custom_call.1} parent=1 // pred_check_branch
      %16 = sbr.rel (0) target = $region5
    $region4: #{tpu_custom_call.1} parent=1 // pred_region
      _
    $region5: #{tpu_custom_call.1} parent=1 // pred_fallthru
      _
    // Predicated region
    $region6: #{tpu_custom_call.1} parent=1 // pred_check
      _
    $region7: #{tpu_custom_call.1} parent=1 // pred_check_branch
      %18 = sbr.rel (0) target = $region9
    $region8: #{tpu_custom_call.1} parent=1 // pred_region
      _
    $region9: #{tpu_custom_call.1} parent=1 // pred_fallthru
      _
    // Predicated region
    $region10: #{tpu_custom_call.1} parent=1 // pred_check
      _
    $region11: #{tpu_custom_call.1} parent=1 // pred_check_branch
      %20 = sbr.rel (0) target = $region13
    $region12: #{tpu_custom_call.1} parent=1 // pred_region
      _
    $region13: #{tpu_custom_call.1} parent=1 // pred_fallthru
      _
    // Predicated region
    $region14: #{tpu_custom_call.1} parent=1 // pred_check
      _
    $region15: #{tpu_custom_call.1} parent=1 // pred_check_branch
      %22 = sbr.rel (0) target = $region17
    $region16: #{tpu_custom_call.1} parent=1 // pred_region
      _
    $region17: #{tpu_custom_call.1} parent=1 // pred_fallthru
      _
    // Predicated region
    $region18: #{tpu_custom_call.1} parent=1 // pred_check
      _
    $region19: #{tpu_custom_call.1} parent=1 // pred_check_branch
      %24 = sbr.rel (0) target = $region21
    $region20: #{tpu_custom_call.1} parent=1 // pred_region
      _
    $region21: #{tpu_custom_call.1} parent=1 // pred_fallthru
      _
    // Predicated region
    $region22: #{tpu_custom_call.1} parent=1 // pred_check
      _
    $region23: #{tpu_custom_call.1} parent=1 // pred_check_branch
      %26 = sbr.rel (0) target = $region25
    $region24: #{tpu_custom_call.1} parent=1 // pred_region
      _
    $region25: #{tpu_custom_call.1} parent=1 // pred_fallthru
      _
    // Predicated region
    $region26: #{tpu_custom_call.1} parent=1 // pred_check
      _
    $region27: #{tpu_custom_call.1} parent=1 // pred_check_branch
      %28 = sbr.rel (0) target = $region29
    $region28: #{tpu_custom_call.1} parent=1 // pred_region
      _
    $region29: #{tpu_custom_call.1} parent=1 // pred_fallthru
      _
    %v29 = vld [vmem:[%s0] sm:$0xff]
    %v30 = vld [vmem:[%s0 + $0x8] sm:$0xff]
    %v31 = vld [vmem:[%s0 + $0x10] sm:$0xff]
    %v32 = vld [vmem:[%s0 + $0x18] sm:$0xff]
    %v33 = vld [vmem:[%s0 + $0x20] sm:$0xff]
    %v34 = vld [vmem:[%s0 + $0x28] sm:$0xff]
    %v35 = vld [vmem:[%s0 + $0x30] sm:$0xff]
    %v36 = vld [vmem:[%s0 + $0x38] sm:$0xff]
    %v37 = vld [vmem:[%s0 + $0x40] sm:$0xff]
    %v38 = vld [vmem:[%s0 + $0x48] sm:$0xff]
    %v39 = vld [vmem:[%s0 + $0x50] sm:$0xff]
    %v40 = vld [vmem:[%s0 + $0x58] sm:$0xff]
    %v41 = vld [vmem:[%s0 + $0x60] sm:$0xff]
    %v42 = vld [vmem:[%s0 + $0x68] sm:$0xff]
    %v43 = vld [vmem:[%s0 + $0x70] sm:$0xff]
    %v44 = vld [vmem:[%s0 + $0x78] sm:$0xff]
    %v45 = vld [vmem:[%s0 + $0x80] sm:$0xff]
    %v46 = vld [vmem:[%s0 + $0x88] sm:$0xff]
    %v47 = vld [vmem:[%s0 + $0x90] sm:$0xff]
    %v48 = vld [vmem:[%s0 + $0x98] sm:$0xff]
    %v49 = vld [vmem:[%s0 + $0xa0] sm:$0xff]
    %v50 = vld [vmem:[%s0 + $0xa8] sm:$0xff]
    %v51 = vld [vmem:[%s0 + $0xb0] sm:$0xff]
    %v52 = vld [vmem:[%s0 + $0xb8] sm:$0xff]
    %v53 = vld [vmem:[%s0 + $0xc0] sm:$0xff]
    %v54 = vld [vmem:[%s0 + $0xc8] sm:$0xff]
    %v55 = vld [vmem:[%s0 + $0xd0] sm:$0xff]
    %v56 = vld [vmem:[%s0 + $0xd8] sm:$0xff]
    %v57 = vld [vmem:[%s0 + $0xe0] sm:$0xff]
    %v58 = vld [vmem:[%s0 + $0xe8] sm:$0xff]
    %v59 = vld [vmem:[%s0 + $0xf0] sm:$0xff]
    %v60 = vld [vmem:[%s0 + $0xf8] sm:$0xff]
    %v61 = vld [vmem:[%s0 + $0x100] sm:$0xff]
    %v62 = vld [vmem:[%s0 + $0x108] sm:$0xff]
    %v63 = vld [vmem:[%s0 + $0x110] sm:$0xff]
    %v64 = vld [vmem:[%s0 + $0x118] sm:$0xff]
    %v65 = vld [vmem:[%s0 + $0x120] sm:$0xff]
    %v66 = vld [vmem:[%s0 + $0x128] sm:$0xff]
    %v67 = vld [vmem:[%s0 + $0x130] sm:$0xff]
    %v68 = vld [vmem:[%s0 + $0x138] sm:$0xff]
    %v69 = vld [vmem:[%s0 + $0x140] sm:$0xff]
    %v70 = vld [vmem:[%s0 + $0x148] sm:$0xff]
    %v71 = vld [vmem:[%s0 + $0x150] sm:$0xff]
    %v72 = vld [vmem:[%s0 + $0x158] sm:$0xff]
    %v73 = vld [vmem:[%s0 + $0x160] sm:$0xff]
    %v74 = vld [vmem:[%s0 + $0x168] sm:$0xff]
    %v75 = vld [vmem:[%s0 + $0x170] sm:$0xff]
    %v76 = vld [vmem:[%s0 + $0x178] sm:$0xff]
    %v77 = vld [vmem:[%s0 + $0x180] sm:$0xff]
    %v78 = vld [vmem:[%s0 + $0x188] sm:$0xff]
    %v79 = vld [vmem:[%s0 + $0x190] sm:$0xff]
    %v80 = vld [vmem:[%s0 + $0x198] sm:$0xff]
    %v81 = vld [vmem:[%s0 + $0x1a0] sm:$0xff]
    %v82 = vld [vmem:[%s0 + $0x1a8] sm:$0xff]
    %v83 = vld [vmem:[%s0 + $0x1b0] sm:$0xff]
    %v84 = vld [vmem:[%s0 + $0x1b8] sm:$0xff]
    %v85 = vld [vmem:[%s0 + $0x1c0] sm:$0xff]
    %v86 = vld [vmem:[%s0 + $0x1c8] sm:$0xff]
    %v87 = vld [vmem:[%s0 + $0x1d0] sm:$0xff]
    %v88 = vld [vmem:[%s0 + $0x1d8] sm:$0xff]
    %v89 = vld [vmem:[%s0 + $0x1e0] sm:$0xff]
    %v90 = vld [vmem:[%s0 + $0x1e8] sm:$0xff]
    %v91 = vld [vmem:[%s0 + $0x1f0] sm:$0xff]
    %v92 = vld [vmem:[%s0 + $0x1f8] sm:$0xff]
    %v93 = vld [vmem:[%s1] sm:$0xff]
    %v94 = vld [vmem:[%s1 + $0x8] sm:$0xff]
    %v95 = vld [vmem:[%s1 + $0x10] sm:$0xff]
    %v96 = vld [vmem:[%s1 + $0x18] sm:$0xff]
    %v97 = vld [vmem:[%s2] sm:$0x1]
    %v99 = vlaneseq
    %v100 = vshrl.u32 %v99, 7
    %v101 = vsub.s32 0, %v100
    %v102 = vrot.slane %v97, %v101
    %vm104 = vcmask 261120
    %v106 = vsel %vm104, %v29, 0
    %v109 = vsel %vm104, %v30, 0
    %v112 = vsel %vm104, %v31, 0
    %v115 = vsel %vm104, %v32, 0
    %v118 = vsel %vm104, %v33, 0
    %v121 = vsel %vm104, %v34, 0
    %v124 = vsel %vm104, %v35, 0
    %v127 = vsel %vm104, %v36, 0
    %v130 = vsel %vm104, %v37, 0
    %v133 = vsel %vm104, %v38, 0
    %v136 = vsel %vm104, %v39, 0
    %v139 = vsel %vm104, %v40, 0
    %v142 = vsel %vm104, %v41, 0
    %v145 = vsel %vm104, %v42, 0
    %v148 = vsel %vm104, %v43, 0
    %v151 = vsel %vm104, %v44, 0
    %v154 = vsel %vm104, %v45, 0
    %v157 = vsel %vm104, %v46, 0
    %v160 = vsel %vm104, %v47, 0
    %v163 = vsel %vm104, %v48, 0
    %v166 = vsel %vm104, %v49, 0
    %v169 = vsel %vm104, %v50, 0
    %v172 = vsel %vm104, %v51, 0
    %v175 = vsel %vm104, %v52, 0
    %v178 = vsel %vm104, %v53, 0
    %v181 = vsel %vm104, %v54, 0
    %v184 = vsel %vm104, %v55, 0
    %v187 = vsel %vm104, %v56, 0
    %v190 = vsel %vm104, %v57, 0
    %v193 = vsel %vm104, %v58, 0
    %v196 = vsel %vm104, %v59, 0
    %v199 = vsel %vm104, %v60, 0
    %v202 = vsel %vm104, %v61, 0
    %v205 = vsel %vm104, %v62, 0
    %v208 = vsel %vm104, %v63, 0
    %v211 = vsel %vm104, %v64, 0
    %v214 = vsel %vm104, %v65, 0
    %v217 = vsel %vm104, %v66, 0
    %v220 = vsel %vm104, %v67, 0
    %v223 = vsel %vm104, %v68, 0
    %v226 = vsel %vm104, %v69, 0
    %v229 = vsel %vm104, %v70, 0
    %v232 = vsel %vm104, %v71, 0
    %v235 = vsel %vm104, %v72, 0
    %v238 = vsel %vm104, %v73, 0
    %v241 = vsel %vm104, %v74, 0
    %v244 = vsel %vm104, %v75, 0
    %v247 = vsel %vm104, %v76, 0
    %v250 = vsel %vm104, %v77, 0
    %v253 = vsel %vm104, %v78, 0
    %v256 = vsel %vm104, %v79, 0
    %v259 = vsel %vm104, %v80, 0
    %v262 = vsel %vm104, %v81, 0
    %v265 = vsel %vm104, %v82, 0
    %v268 = vsel %vm104, %v83, 0
    %v271 = vsel %vm104, %v84, 0
    %v274 = vsel %vm104, %v85, 0
    %v277 = vsel %vm104, %v86, 0
    %v280 = vsel %vm104, %v87, 0
    %v283 = vsel %vm104, %v88, 0
    %v286 = vsel %vm104, %v89, 0
    %v289 = vsel %vm104, %v90, 0
    %v292 = vsel %vm104, %v91, 0
    %v295 = vsel %vm104, %v92, 0
    %297 = vmatprep.subr.mxu0 0.0
    %298 = vmatpush1.msra.mxu0 0.0
    %299 = vmatprep.subr.mxu0 0.0
    %300 = vmatpush1.msra.mxu0 0.0
    %301 = vmatprep.subr.mxu0 0.0
    %302 = vmatpush1.msra.mxu0 0.0
    %303 = vmatprep.subr.mxu0 0.0
    %304 = vmatpush1.msra.mxu0 0.0
    %305 = vmatprep.subr.mxu0 0.0
    %306 = vmatpush1.msra.mxu0 0.0
    %307 = vmatprep.subr.mxu0 0.0
    %308 = vmatpush1.msra.mxu0 0.0
    %309 = vmatprep.subr.mxu0 0.0
    %310 = vmatpush1.msra.mxu0 0.0
    %311 = vmatprep.subr.mxu0 0.0
    %312 = vmatpush1.msra.mxu0 0.0
    %313 = vmatprep.subr.mxu0 0.0
    %314 = vmatpush1.msra.mxu0 0.0
    %315 = vmatprep.subr.mxu0 0.0
    %316 = vmatpush1.msra.mxu0 0.0
    %317 = vmatprep.subr.mxu0 0.0
    %318 = vmatpush1.msra.mxu0 0.0
    %319 = vmatprep.subr.mxu0 0.0
    %320 = vmatpush1.msra.mxu0 0.0
    %321 = vmatprep.subr.mxu0 0.0
    %322 = vmatpush1.msra.mxu0 %v96
    %323 = vmatprep.subr.mxu0 0.0
    %324 = vmatpush1.msra.mxu0 %v95
    %325 = vmatprep.subr.mxu0 0.0
    %326 = vmatpush1.msra.mxu0 %v94
    %327 = vmatprep.subr.mxu0 0.0
    %328 = vmatpush1.msra.mxu0 %v93
    %329 = vmatprep.subr.mxu0 0.0
    %330 = vmatpush2.msra.mxu0 0.0
    %331 = vmatprep.subr.mxu0 0.0
    %332 = vmatpush2.msra.mxu0 0.0
    %333 = vmatprep.subr.mxu0 0.0
    %334 = vmatpush2.msra.mxu0 0.0
    %335 = vmatprep.subr.mxu0 0.0
    %336 = vmatpush2.msra.mxu0 0.0
    %337 = vmatprep.subr.mxu0 0.0
    %338 = vmatpush2.msra.mxu0 0.0
    %339 = vmatprep.subr.mxu0 0.0
    %340 = vmatpush2.msra.mxu0 0.0
    %341 = vmatprep.subr.mxu0 0.0
    %342 = vmatpush2.msra.mxu0 0.0
    %343 = vmatprep.subr.mxu0 0.0
    %344 = vmatpush2.msra.mxu0 0.0
    %345 = vmatprep.subr.mxu0 0.0
    %346 = vmatpush2.msra.mxu0 0.0
    %347 = vmatprep.subr.mxu0 0.0
    %348 = vmatpush2.msra.mxu0 0.0
    %349 = vmatprep.subr.mxu0 0.0
    %350 = vmatpush2.msra.mxu0 0.0
    %351 = vmatprep.subr.mxu0 0.0
    %352 = vmatpush2.msra.mxu0 0.0
    %353 = vmatprep.subr.mxu0 0.0
    %354 = vmatpush2.msra.mxu0 0.0
    %355 = vmatprep.subr.mxu0 0.0
    %356 = vmatpush2.msra.mxu0 0.0
    %357 = vmatprep.subr.mxu0 0.0
    %358 = vmatpush2.msra.mxu0 0.0
    %359 = vmatprep.subr.mxu0 0.0
    %360 = vmatpush2.msra.mxu0 0.0
    %361 = vmatprep.mubr.f32.mxu0 0.0
    %362 = vmatmul.mubr.f32.gmra.mxu0 %v106
    %v363 = vpop.f32.mrf.mxu0
    %v364 = vadd.f32 %v102, %v363
    %v365 = vpop.f32.mrf.mxu0
    %366 = vmatprep.mubr.f32.mxu0 0.0
    %367 = vmatmul.mubr.f32.gmra.mxu0 %v109
    %v368 = vpop.f32.mrf.mxu0
    %v369 = vadd.f32 %v102, %v368
    %v370 = vpop.f32.mrf.mxu0
    %371 = vmatprep.mubr.f32.mxu0 0.0
    %372 = vmatmul.mubr.f32.gmra.mxu0 %v112
    %v373 = vpop.f32.mrf.mxu0
    %v374 = vadd.f32 %v102, %v373
    %v375 = vpop.f32.mrf.mxu0
    %376 = vmatprep.mubr.f32.mxu0 0.0
    %377 = vmatmul.mubr.f32.gmra.mxu0 %v115
    %v378 = vpop.f32.mrf.mxu0
    %v379 = vadd.f32 %v102, %v378
    %v380 = vpop.f32.mrf.mxu0
    %381 = vmatprep.mubr.f32.mxu0 0.0
    %382 = vmatmul.mubr.f32.gmra.mxu0 %v118
    %v383 = vpop.f32.mrf.mxu0
    %v384 = vadd.f32 %v102, %v383
    %v385 = vpop.f32.mrf.mxu0
    %386 = vmatprep.mubr.f32.mxu0 0.0
    %387 = vmatmul.mubr.f32.gmra.mxu0 %v121
    %v388 = vpop.f32.mrf.mxu0
    %v389 = vadd.f32 %v102, %v388
    %v390 = vpop.f32.mrf.mxu0
    %391 = vmatprep.mubr.f32.mxu0 0.0
    %392 = vmatmul.mubr.f32.gmra.mxu0 %v124
    %v393 = vpop.f32.mrf.mxu0
    %v394 = vadd.f32 %v102, %v393
    %v395 = vpop.f32.mrf.mxu0
    %396 = vmatprep.mubr.f32.mxu0 0.0
    %397 = vmatmul.mubr.f32.gmra.mxu0 %v127
    %v398 = vpop.f32.mrf.mxu0
    %v399 = vadd.f32 %v102, %v398
    %v400 = vpop.f32.mrf.mxu0
    %401 = vmatprep.mubr.f32.mxu0 0.0
    %402 = vmatmul.mubr.f32.gmra.mxu0 %v130
    %v403 = vpop.f32.mrf.mxu0
    %v404 = vadd.f32 %v102, %v403
    %v405 = vpop.f32.mrf.mxu0
    %406 = vmatprep.mubr.f32.mxu0 0.0
    %407 = vmatmul.mubr.f32.gmra.mxu0 %v133
    %v408 = vpop.f32.mrf.mxu0
    %v409 = vadd.f32 %v102, %v408
    %v410 = vpop.f32.mrf.mxu0
    %411 = vmatprep.mubr.f32.mxu0 0.0
    %412 = vmatmul.mubr.f32.gmra.mxu0 %v136
    %v413 = vpop.f32.mrf.mxu0
    %v414 = vadd.f32 %v102, %v413
    %v415 = vpop.f32.mrf.mxu0
    %416 = vmatprep.mubr.f32.mxu0 0.0
    %417 = vmatmul.mubr.f32.gmra.mxu0 %v139
    %v418 = vpop.f32.mrf.mxu0
    %v419 = vadd.f32 %v102, %v418
    %v420 = vpop.f32.mrf.mxu0
    %421 = vmatprep.mubr.f32.mxu0 0.0
    %422 = vmatmul.mubr.f32.gmra.mxu0 %v142
    %v423 = vpop.f32.mrf.mxu0
    %v424 = vadd.f32 %v102, %v423
    %v425 = vpop.f32.mrf.mxu0
    %426 = vmatprep.mubr.f32.mxu0 0.0
    %427 = vmatmul.mubr.f32.gmra.mxu0 %v145
    %v428 = vpop.f32.mrf.mxu0
    %v429 = vadd.f32 %v102, %v428
    %v430 = vpop.f32.mrf.mxu0
    %431 = vmatprep.mubr.f32.mxu0 0.0
    %432 = vmatmul.mubr.f32.gmra.mxu0 %v148
    %v433 = vpop.f32.mrf.mxu0
    %v434 = vadd.f32 %v102, %v433
    %v435 = vpop.f32.mrf.mxu0
    %436 = vmatprep.mubr.f32.mxu0 0.0
    %437 = vmatmul.mubr.f32.gmra.mxu0 %v151
    %v438 = vpop.f32.mrf.mxu0
    %v439 = vadd.f32 %v102, %v438
    %v440 = vpop.f32.mrf.mxu0
    %441 = vmatprep.mubr.f32.mxu0 0.0
    %442 = vmatmul.mubr.f32.gmra.mxu0 %v154
    %v443 = vpop.f32.mrf.mxu0
    %v444 = vadd.f32 %v102, %v443
    %v445 = vpop.f32.mrf.mxu0
    %446 = vmatprep.mubr.f32.mxu0 0.0
    %447 = vmatmul.mubr.f32.gmra.mxu0 %v157
    %v448 = vpop.f32.mrf.mxu0
    %v449 = vadd.f32 %v102, %v448
    %v450 = vpop.f32.mrf.mxu0
    %451 = vmatprep.mubr.f32.mxu0 0.0
    %452 = vmatmul.mubr.f32.gmra.mxu0 %v160
    %v453 = vpop.f32.mrf.mxu0
    %v454 = vadd.f32 %v102, %v453
    %v455 = vpop.f32.mrf.mxu0
    %456 = vmatprep.mubr.f32.mxu0 0.0
    %457 = vmatmul.mubr.f32.gmra.mxu0 %v163
    %v458 = vpop.f32.mrf.mxu0
    %v459 = vadd.f32 %v102, %v458
    %v460 = vpop.f32.mrf.mxu0
    %461 = vmatprep.mubr.f32.mxu0 0.0
    %462 = vmatmul.mubr.f32.gmra.mxu0 %v166
    %v463 = vpop.f32.mrf.mxu0
    %v464 = vadd.f32 %v102, %v463
    %v465 = vpop.f32.mrf.mxu0
    %466 = vmatprep.mubr.f32.mxu0 0.0
    %467 = vmatmul.mubr.f32.gmra.mxu0 %v169
    %v468 = vpop.f32.mrf.mxu0
    %v469 = vadd.f32 %v102, %v468
    %v470 = vpop.f32.mrf.mxu0
    %471 = vmatprep.mubr.f32.mxu0 0.0
    %472 = vmatmul.mubr.f32.gmra.mxu0 %v172
    %v473 = vpop.f32.mrf.mxu0
    %v474 = vadd.f32 %v102, %v473
    %v475 = vpop.f32.mrf.mxu0
    %476 = vmatprep.mubr.f32.mxu0 0.0
    %477 = vmatmul.mubr.f32.gmra.mxu0 %v175
    %v478 = vpop.f32.mrf.mxu0
    %v479 = vadd.f32 %v102, %v478
    %v480 = vpop.f32.mrf.mxu0
    %481 = vmatprep.mubr.f32.mxu0 0.0
    %482 = vmatmul.mubr.f32.gmra.mxu0 %v178
    %v483 = vpop.f32.mrf.mxu0
    %v484 = vadd.f32 %v102, %v483
    %v485 = vpop.f32.mrf.mxu0
    %486 = vmatprep.mubr.f32.mxu0 0.0
    %487 = vmatmul.mubr.f32.gmra.mxu0 %v181
    %v488 = vpop.f32.mrf.mxu0
    %v489 = vadd.f32 %v102, %v488
    %v490 = vpop.f32.mrf.mxu0
    %491 = vmatprep.mubr.f32.mxu0 0.0
    %492 = vmatmul.mubr.f32.gmra.mxu0 %v184
    %v493 = vpop.f32.mrf.mxu0
    %v494 = vadd.f32 %v102, %v493
    %v495 = vpop.f32.mrf.mxu0
    %496 = vmatprep.mubr.f32.mxu0 0.0
    %497 = vmatmul.mubr.f32.gmra.mxu0 %v187
    %v498 = vpop.f32.mrf.mxu0
    %v499 = vadd.f32 %v102, %v498
    %v500 = vpop.f32.mrf.mxu0
    %501 = vmatprep.mubr.f32.mxu0 0.0
    %502 = vmatmul.mubr.f32.gmra.mxu0 %v190
    %v503 = vpop.f32.mrf.mxu0
    %v504 = vadd.f32 %v102, %v503
    %v505 = vpop.f32.mrf.mxu0
    %506 = vmatprep.mubr.f32.mxu0 0.0
    %507 = vmatmul.mubr.f32.gmra.mxu0 %v193
    %v508 = vpop.f32.mrf.mxu0
    %v509 = vadd.f32 %v102, %v508
    %v510 = vpop.f32.mrf.mxu0
    %511 = vmatprep.mubr.f32.mxu0 0.0
    %512 = vmatmul.mubr.f32.gmra.mxu0 %v196
    %v513 = vpop.f32.mrf.mxu0
    %v514 = vadd.f32 %v102, %v513
    %v515 = vpop.f32.mrf.mxu0
    %516 = vmatprep.mubr.f32.mxu0 0.0
    %517 = vmatmul.mubr.f32.gmra.mxu0 %v199
    %v518 = vpop.f32.mrf.mxu0
    %v519 = vadd.f32 %v102, %v518
    %v520 = vpop.f32.mrf.mxu0
    %521 = vmatprep.mubr.f32.mxu0 0.0
    %522 = vmatmul.mubr.f32.gmra.mxu0 %v202
    %v523 = vpop.f32.mrf.mxu0
    %v524 = vadd.f32 %v102, %v523
    %v525 = vpop.f32.mrf.mxu0
    %526 = vmatprep.mubr.f32.mxu0 0.0
    %527 = vmatmul.mubr.f32.gmra.mxu0 %v205
    %v528 = vpop.f32.mrf.mxu0
    %v529 = vadd.f32 %v102, %v528
    %v530 = vpop.f32.mrf.mxu0
    %531 = vmatprep.mubr.f32.mxu0 0.0
    %532 = vmatmul.mubr.f32.gmra.mxu0 %v208
    %v533 = vpop.f32.mrf.mxu0
    %v534 = vadd.f32 %v102, %v533
    %v535 = vpop.f32.mrf.mxu0
    %536 = vmatprep.mubr.f32.mxu0 0.0
    %537 = vmatmul.mubr.f32.gmra.mxu0 %v211
    %v538 = vpop.f32.mrf.mxu0
    %v539 = vadd.f32 %v102, %v538
    %v540 = vpop.f32.mrf.mxu0
    %541 = vmatprep.mubr.f32.mxu0 0.0
    %542 = vmatmul.mubr.f32.gmra.mxu0 %v214
    %v543 = vpop.f32.mrf.mxu0
    %v544 = vadd.f32 %v102, %v543
    %v545 = vpop.f32.mrf.mxu0
    %546 = vmatprep.mubr.f32.mxu0 0.0
    %547 = vmatmul.mubr.f32.gmra.mxu0 %v217
    %v548 = vpop.f32.mrf.mxu0
    %v549 = vadd.f32 %v102, %v548
    %v550 = vpop.f32.mrf.mxu0
    %551 = vmatprep.mubr.f32.mxu0 0.0
    %552 = vmatmul.mubr.f32.gmra.mxu0 %v220
    %v553 = vpop.f32.mrf.mxu0
    %v554 = vadd.f32 %v102, %v553
    %v555 = vpop.f32.mrf.mxu0
    %556 = vmatprep.mubr.f32.mxu0 0.0
    %557 = vmatmul.mubr.f32.gmra.mxu0 %v223
    %v558 = vpop.f32.mrf.mxu0
    %v559 = vadd.f32 %v102, %v558
    %v560 = vpop.f32.mrf.mxu0
    %561 = vmatprep.mubr.f32.mxu0 0.0
    %562 = vmatmul.mubr.f32.gmra.mxu0 %v226
    %v563 = vpop.f32.mrf.mxu0
    %v564 = vadd.f32 %v102, %v563
    %v565 = vpop.f32.mrf.mxu0
    %566 = vmatprep.mubr.f32.mxu0 0.0
    %567 = vmatmul.mubr.f32.gmra.mxu0 %v229
    %v568 = vpop.f32.mrf.mxu0
    %v569 = vadd.f32 %v102, %v568
    %v570 = vpop.f32.mrf.mxu0
    %571 = vmatprep.mubr.f32.mxu0 0.0
    %572 = vmatmul.mubr.f32.gmra.mxu0 %v232
    %v573 = vpop.f32.mrf.mxu0
    %v574 = vadd.f32 %v102, %v573
    %v575 = vpop.f32.mrf.mxu0
    %576 = vmatprep.mubr.f32.mxu0 0.0
    %577 = vmatmul.mubr.f32.gmra.mxu0 %v235
    %v578 = vpop.f32.mrf.mxu0
    %v579 = vadd.f32 %v102, %v578
    %v580 = vpop.f32.mrf.mxu0
    %581 = vmatprep.mubr.f32.mxu0 0.0
    %582 = vmatmul.mubr.f32.gmra.mxu0 %v238
    %v583 = vpop.f32.mrf.mxu0
    %v584 = vadd.f32 %v102, %v583
    %v585 = vpop.f32.mrf.mxu0
    %586 = vmatprep.mubr.f32.mxu0 0.0
    %587 = vmatmul.mubr.f32.gmra.mxu0 %v241
    %v588 = vpop.f32.mrf.mxu0
    %v589 = vadd.f32 %v102, %v588
    %v590 = vpop.f32.mrf.mxu0
    %591 = vmatprep.mubr.f32.mxu0 0.0
    %592 = vmatmul.mubr.f32.gmra.mxu0 %v244
    %v593 = vpop.f32.mrf.mxu0
    %v594 = vadd.f32 %v102, %v593
    %v595 = vpop.f32.mrf.mxu0
    %596 = vmatprep.mubr.f32.mxu0 0.0
    %597 = vmatmul.mubr.f32.gmra.mxu0 %v247
    %v598 = vpop.f32.mrf.mxu0
    %v599 = vadd.f32 %v102, %v598
    %v600 = vpop.f32.mrf.mxu0
    %601 = vmatprep.mubr.f32.mxu0 0.0
    %602 = vmatmul.mubr.f32.gmra.mxu0 %v250
    %v603 = vpop.f32.mrf.mxu0
    %v604 = vadd.f32 %v102, %v603
    %v605 = vpop.f32.mrf.mxu0
    %606 = vmatprep.mubr.f32.mxu0 0.0
    %607 = vmatmul.mubr.f32.gmra.mxu0 %v253
    %v608 = vpop.f32.mrf.mxu0
    %v609 = vadd.f32 %v102, %v608
    %v610 = vpop.f32.mrf.mxu0
    %611 = vmatprep.mubr.f32.mxu0 0.0
    %612 = vmatmul.mubr.f32.gmra.mxu0 %v256
    %v613 = vpop.f32.mrf.mxu0
    %v614 = vadd.f32 %v102, %v613
    %v615 = vpop.f32.mrf.mxu0
    %616 = vmatprep.mubr.f32.mxu0 0.0
    %617 = vmatmul.mubr.f32.gmra.mxu0 %v259
    %v618 = vpop.f32.mrf.mxu0
    %v619 = vadd.f32 %v102, %v618
    %v620 = vpop.f32.mrf.mxu0
    %621 = vmatprep.mubr.f32.mxu0 0.0
    %622 = vmatmul.mubr.f32.gmra.mxu0 %v262
    %v623 = vpop.f32.mrf.mxu0
    %v624 = vadd.f32 %v102, %v623
    %v625 = vpop.f32.mrf.mxu0
    %626 = vmatprep.mubr.f32.mxu0 0.0
    %627 = vmatmul.mubr.f32.gmra.mxu0 %v265
    %v628 = vpop.f32.mrf.mxu0
    %v629 = vadd.f32 %v102, %v628
    %v630 = vpop.f32.mrf.mxu0
    %631 = vmatprep.mubr.f32.mxu0 0.0
    %632 = vmatmul.mubr.f32.gmra.mxu0 %v268
    %v633 = vpop.f32.mrf.mxu0
    %v634 = vadd.f32 %v102, %v633
    %v635 = vpop.f32.mrf.mxu0
    %636 = vmatprep.mubr.f32.mxu0 0.0
    %637 = vmatmul.mubr.f32.gmra.mxu0 %v271
    %v638 = vpop.f32.mrf.mxu0
    %v639 = vadd.f32 %v102, %v638
    %v640 = vpop.f32.mrf.mxu0
    %641 = vmatprep.mubr.f32.mxu0 0.0
    %642 = vmatmul.mubr.f32.gmra.mxu0 %v274
    %v643 = vpop.f32.mrf.mxu0
    %v644 = vadd.f32 %v102, %v643
    %v645 = vpop.f32.mrf.mxu0
    %646 = vmatprep.mubr.f32.mxu0 0.0
    %647 = vmatmul.mubr.f32.gmra.mxu0 %v277
    %v648 = vpop.f32.mrf.mxu0
    %v649 = vadd.f32 %v102, %v648
    %v650 = vpop.f32.mrf.mxu0
    %651 = vmatprep.mubr.f32.mxu0 0.0
    %652 = vmatmul.mubr.f32.gmra.mxu0 %v280
    %v653 = vpop.f32.mrf.mxu0
    %v654 = vadd.f32 %v102, %v653
    %v655 = vpop.f32.mrf.mxu0
    %656 = vmatprep.mubr.f32.mxu0 0.0
    %657 = vmatmul.mubr.f32.gmra.mxu0 %v283
    %v658 = vpop.f32.mrf.mxu0
    %v659 = vadd.f32 %v102, %v658
    %v660 = vpop.f32.mrf.mxu0
    %661 = vmatprep.mubr.f32.mxu0 0.0
    %662 = vmatmul.mubr.f32.gmra.mxu0 %v286
    %v663 = vpop.f32.mrf.mxu0
    %v664 = vadd.f32 %v102, %v663
    %v665 = vpop.f32.mrf.mxu0
    %666 = vmatprep.mubr.f32.mxu0 0.0
    %667 = vmatmul.mubr.f32.gmra.mxu0 %v289
    %v668 = vpop.f32.mrf.mxu0
    %v669 = vadd.f32 %v102, %v668
    %v670 = vpop.f32.mrf.mxu0
    %671 = vmatprep.mubr.f32.mxu0 0.0
    %672 = vmatmul.mubr.f32.gmra.mxu0 %v292
    %v673 = vpop.f32.mrf.mxu0
    %v674 = vadd.f32 %v102, %v673
    %v675 = vpop.f32.mrf.mxu0
    %676 = vmatprep.mubr.f32.mxu0 0.0
    %677 = vmatmul.mubr.f32.gmra.mxu0 %v295
    %v678 = vpop.f32.mrf.mxu0
    %v679 = vadd.f32 %v102, %v678
    %v680 = vpop.f32.mrf.mxu0
    %681 = vdwg.mxu0
    %v682 = vld [vmem:[%s3] sm:$0xff]
    %v683 = vld [vmem:[%s3 + $0x8] sm:$0xff]
    %v684 = vld [vmem:[%s3 + $0x10] sm:$0xff]
    %v685 = vld [vmem:[%s3 + $0x18] sm:$0xff]
    %v686 = vld [vmem:[%s3 + $0x20] sm:$0xff]
    %v687 = vld [vmem:[%s3 + $0x28] sm:$0xff]
    %v688 = vld [vmem:[%s3 + $0x30] sm:$0xff]
    %v689 = vld [vmem:[%s3 + $0x38] sm:$0xff]
    %v690 = vld [vmem:[%s3 + $0x40] sm:$0xff]
    %v691 = vld [vmem:[%s3 + $0x48] sm:$0xff]
    %v692 = vld [vmem:[%s3 + $0x50] sm:$0xff]
    %v693 = vld [vmem:[%s3 + $0x58] sm:$0xff]
    %v694 = vld [vmem:[%s3 + $0x60] sm:$0xff]
    %v695 = vld [vmem:[%s3 + $0x68] sm:$0xff]
    %v696 = vld [vmem:[%s3 + $0x70] sm:$0xff]
    %v697 = vld [vmem:[%s3 + $0x78] sm:$0xff]
    %vm698 = vcmask 130048
    %v700 = vsel %vm698, %v364, 0
    %v703 = vsel %vm698, %v369, 0
    %v706 = vsel %vm698, %v374, 0
    %v709 = vsel %vm698, %v379, 0
    %v712 = vsel %vm698, %v384, 0
    %v715 = vsel %vm698, %v389, 0
    %v718 = vsel %vm698, %v394, 0
    %v721 = vsel %vm698, %v399, 0
    %v724 = vsel %vm698, %v404, 0
    %v727 = vsel %vm698, %v409, 0
    %v730 = vsel %vm698, %v414, 0
    %v733 = vsel %vm698, %v419, 0
    %v736 = vsel %vm698, %v424, 0
    %v739 = vsel %vm698, %v429, 0
    %v742 = vsel %vm698, %v434, 0
    %v745 = vsel %vm698, %v439, 0
    %v748 = vsel %vm698, %v444, 0
    %v751 = vsel %vm698, %v449, 0
    %v754 = vsel %vm698, %v454, 0
    %v757 = vsel %vm698, %v459, 0
    %v760 = vsel %vm698, %v464, 0
    %v763 = vsel %vm698, %v469, 0
    %v766 = vsel %vm698, %v474, 0
    %v769 = vsel %vm698, %v479, 0
    %v772 = vsel %vm698, %v484, 0
    %v775 = vsel %vm698, %v489, 0
    %v778 = vsel %vm698, %v494, 0
    %v781 = vsel %vm698, %v499, 0
    %v784 = vsel %vm698, %v504, 0
    %v787 = vsel %vm698, %v509, 0
    %v790 = vsel %vm698, %v514, 0
    %v793 = vsel %vm698, %v519, 0
    %v796 = vsel %vm698, %v524, 0
    %v799 = vsel %vm698, %v529, 0
    %v802 = vsel %vm698, %v534, 0
    %v805 = vsel %vm698, %v539, 0
    %v808 = vsel %vm698, %v544, 0
    %v811 = vsel %vm698, %v549, 0
    %v814 = vsel %vm698, %v554, 0
    %v817 = vsel %vm698, %v559, 0
    %v820 = vsel %vm698, %v564, 0
    %v823 = vsel %vm698, %v569, 0
    %v826 = vsel %vm698, %v574, 0
    %v829 = vsel %vm698, %v579, 0
    %v832 = vsel %vm698, %v584, 0
    %v835 = vsel %vm698, %v589, 0
    %v838 = vsel %vm698, %v594, 0
    %v841 = vsel %vm698, %v599, 0
    %v844 = vsel %vm698, %v604, 0
    %v847 = vsel %vm698, %v609, 0
    %v850 = vsel %vm698, %v614, 0
    %v853 = vsel %vm698, %v619, 0
    %v856 = vsel %vm698, %v624, 0
    %v859 = vsel %vm698, %v629, 0
    %v862 = vsel %vm698, %v634, 0
    %v865 = vsel %vm698, %v639, 0
    %v868 = vsel %vm698, %v644, 0
    %v871 = vsel %vm698, %v649, 0
    %v874 = vsel %vm698, %v654, 0
    %v877 = vsel %vm698, %v659, 0
    %v880 = vsel %vm698, %v664, 0
    %v883 = vsel %vm698, %v669, 0
    %v886 = vsel %vm698, %v674, 0
    %v889 = vsel %vm698, %v679, 0
    %v892 = vsel %vm698, %v682, 0
    %v895 = vsel %vm698, %v683, 0
    %v898 = vsel %vm698, %v684, 0
    %v901 = vsel %vm698, %v685, 0
    %v904 = vsel %vm698, %v686, 0
    %v907 = vsel %vm698, %v687, 0
    %v910 = vsel %vm698, %v688, 0
    %v913 = vsel %vm698, %v689, 0
    %v916 = vsel %vm698, %v690, 0
    %v919 = vsel %vm698, %v691, 0
    %v922 = vsel %vm698, %v692, 0
    %v925 = vsel %vm698, %v693, 0
    %v928 = vsel %vm698, %v694, 0
    %v931 = vsel %vm698, %v695, 0
    %v934 = vsel %vm698, %v696, 0
    %v937 = vsel %vm698, %v697, 0
    %939 = vmatprep.subr.mxu0 0.0
    %940 = vmatpush1.xpose.msra.mxu0 %v937
    %941 = vmatprep.subr.mxu0 0.0
    %942 = vmatpush1.xpose.msra.mxu0 %v934
    %943 = vmatprep.subr.mxu0 0.0
    %944 = vmatpush1.xpose.msra.mxu0 %v931
    %945 = vmatprep.subr.mxu0 0.0
    %946 = vmatpush1.xpose.msra.mxu0 %v928
    %947 = vmatprep.subr.mxu0 0.0
    %948 = vmatpush1.xpose.msra.mxu0 %v925
    %949 = vmatprep.subr.mxu0 0.0
    %950 = vmatpush1.xpose.msra.mxu0 %v922
    %951 = vmatprep.subr.mxu0 0.0
    %952 = vmatpush1.xpose.msra.mxu0 %v919
    %953 = vmatprep.subr.mxu0 0.0
    %954 = vmatpush1.xpose.msra.mxu0 %v916
    %955 = vmatprep.subr.mxu0 0.0
    %956 = vmatpush1.xpose.msra.mxu0 %v913
    %957 = vmatprep.subr.mxu0 0.0
    %958 = vmatpush1.xpose.msra.mxu0 %v910
    %959 = vmatprep.subr.mxu0 0.0
    %960 = vmatpush1.xpose.msra.mxu0 %v907
    %961 = vmatprep.subr.mxu0 0.0
    %962 = vmatpush1.xpose.msra.mxu0 %v904
    %963 = vmatprep.subr.mxu0 0.0
    %964 = vmatpush1.xpose.msra.mxu0 %v901
    %965 = vmatprep.subr.mxu0 0.0
    %966 = vmatpush1.xpose.msra.mxu0 %v898
    %967 = vmatprep.subr.mxu0 0.0
    %968 = vmatpush1.xpose.msra.mxu0 %v895
    %969 = vmatprep.subr.mxu0 0.0
    %970 = vmatpush1.xpose.msra.mxu0 %v892
    %971 = vmatprep.subr.mxu0 0.0
    %972 = vmatpush2.xpose.msra.mxu0 0.0
    %973 = vmatprep.subr.mxu0 0.0
    %974 = vmatpush2.xpose.msra.mxu0 0.0
    %975 = vmatprep.subr.mxu0 0.0
    %976 = vmatpush2.xpose.msra.mxu0 0.0
    %977 = vmatprep.subr.mxu0 0.0
    %978 = vmatpush2.xpose.msra.mxu0 0.0
    %979 = vmatprep.subr.mxu0 0.0
    %980 = vmatpush2.xpose.msra.mxu0 0.0
    %981 = vmatprep.subr.mxu0 0.0
    %982 = vmatpush2.xpose.msra.mxu0 0.0
    %983 = vmatprep.subr.mxu0 0.0
    %984 = vmatpush2.xpose.msra.mxu0 0.0
    %985 = vmatprep.subr.mxu0 0.0
    %986 = vmatpush2.xpose.msra.mxu0 0.0
    %987 = vmatprep.subr.mxu0 0.0
    %988 = vmatpush2.xpose.msra.mxu0 0.0
    %989 = vmatprep.subr.mxu0 0.0
    %990 = vmatpush2.xpose.msra.mxu0 0.0
    %991 = vmatprep.subr.mxu0 0.0
    %992 = vmatpush2.xpose.msra.mxu0 0.0
    %993 = vmatprep.subr.mxu0 0.0
    %994 = vmatpush2.xpose.msra.mxu0 0.0
    %995 = vmatprep.subr.mxu0 0.0
    %996 = vmatpush2.xpose.msra.mxu0 0.0
    %997 = vmatprep.subr.mxu0 0.0
    %998 = vmatpush2.xpose.msra.mxu0 0.0
    %999 = vmatprep.subr.mxu0 0.0
    %1000 = vmatpush2.xpose.msra.mxu0 0.0
    %1001 = vmatprep.subr.mxu0 0.0
    %1002 = vmatpush2.xpose.msra.mxu0 0.0
    %1003 = vmatprep.mubr.f32.mxu0 0.0
    %1004 = vmatmul.mubr.f32.gmra.mxu0 %v700
    %v1005 = vpop.f32.mrf.mxu0
    %v1006 = vadd.f32 0.0, %v1005
    %v1007 = vpop.f32.mrf.mxu0
    %1008 = vmatprep.mubr.f32.mxu0 0.0
    %1009 = vmatmul.mubr.f32.gmra.mxu0 %v703
    %v1010 = vpop.f32.mrf.mxu0
    %v1011 = vadd.f32 0.0, %v1010
    %v1012 = vpop.f32.mrf.mxu0
    %1013 = vmatprep.mubr.f32.mxu0 0.0
    %1014 = vmatmul.mubr.f32.gmra.mxu0 %v706
    %v1015 = vpop.f32.mrf.mxu0
    %v1016 = vadd.f32 0.0, %v1015
    %v1017 = vpop.f32.mrf.mxu0
    %1018 = vmatprep.mubr.f32.mxu0 0.0
    %1019 = vmatmul.mubr.f32.gmra.mxu0 %v709
    %v1020 = vpop.f32.mrf.mxu0
    %v1021 = vadd.f32 0.0, %v1020
    %v1022 = vpop.f32.mrf.mxu0
    %1023 = vmatprep.mubr.f32.mxu0 0.0
    %1024 = vmatmul.mubr.f32.gmra.mxu0 %v712
    %v1025 = vpop.f32.mrf.mxu0
    %v1026 = vadd.f32 0.0, %v1025
    %v1027 = vpop.f32.mrf.mxu0
    %1028 = vmatprep.mubr.f32.mxu0 0.0
    %1029 = vmatmul.mubr.f32.gmra.mxu0 %v715
    %v1030 = vpop.f32.mrf.mxu0
    %v1031 = vadd.f32 0.0, %v1030
    %v1032 = vpop.f32.mrf.mxu0
    %1033 = vmatprep.mubr.f32.mxu0 0.0
    %1034 = vmatmul.mubr.f32.gmra.mxu0 %v718
    %v1035 = vpop.f32.mrf.mxu0
    %v1036 = vadd.f32 0.0, %v1035
    %v1037 = vpop.f32.mrf.mxu0
    %1038 = vmatprep.mubr.f32.mxu0 0.0
    %1039 = vmatmul.mubr.f32.gmra.mxu0 %v721
    %v1040 = vpop.f32.mrf.mxu0
    %v1041 = vadd.f32 0.0, %v1040
    %v1042 = vpop.f32.mrf.mxu0
    %1043 = vmatprep.mubr.f32.mxu0 0.0
    %1044 = vmatmul.mubr.f32.gmra.mxu0 %v724
    %v1045 = vpop.f32.mrf.mxu0
    %v1046 = vadd.f32 0.0, %v1045
    %v1047 = vpop.f32.mrf.mxu0
    %1048 = vmatprep.mubr.f32.mxu0 0.0
    %1049 = vmatmul.mubr.f32.gmra.mxu0 %v727
    %v1050 = vpop.f32.mrf.mxu0
    %v1051 = vadd.f32 0.0, %v1050
    %v1052 = vpop.f32.mrf.mxu0
    %1053 = vmatprep.mubr.f32.mxu0 0.0
    %1054 = vmatmul.mubr.f32.gmra.mxu0 %v730
    %v1055 = vpop.f32.mrf.mxu0
    %v1056 = vadd.f32 0.0, %v1055
    %v1057 = vpop.f32.mrf.mxu0
    %1058 = vmatprep.mubr.f32.mxu0 0.0
    %1059 = vmatmul.mubr.f32.gmra.mxu0 %v733
    %v1060 = vpop.f32.mrf.mxu0
    %v1061 = vadd.f32 0.0, %v1060
    %v1062 = vpop.f32.mrf.mxu0
    %1063 = vmatprep.mubr.f32.mxu0 0.0
    %1064 = vmatmul.mubr.f32.gmra.mxu0 %v736
    %v1065 = vpop.f32.mrf.mxu0
    %v1066 = vadd.f32 0.0, %v1065
    %v1067 = vpop.f32.mrf.mxu0
    %1068 = vmatprep.mubr.f32.mxu0 0.0
    %1069 = vmatmul.mubr.f32.gmra.mxu0 %v739
    %v1070 = vpop.f32.mrf.mxu0
    %v1071 = vadd.f32 0.0, %v1070
    %v1072 = vpop.f32.mrf.mxu0
    %1073 = vmatprep.mubr.f32.mxu0 0.0
    %1074 = vmatmul.mubr.f32.gmra.mxu0 %v742
    %v1075 = vpop.f32.mrf.mxu0
    %v1076 = vadd.f32 0.0, %v1075
    %v1077 = vpop.f32.mrf.mxu0
    %1078 = vmatprep.mubr.f32.mxu0 0.0
    %1079 = vmatmul.mubr.f32.gmra.mxu0 %v745
    %v1080 = vpop.f32.mrf.mxu0
    %v1081 = vadd.f32 0.0, %v1080
    %v1082 = vpop.f32.mrf.mxu0
    %1083 = vmatprep.mubr.f32.mxu0 0.0
    %1084 = vmatmul.mubr.f32.gmra.mxu0 %v748
    %v1085 = vpop.f32.mrf.mxu0
    %v1086 = vadd.f32 0.0, %v1085
    %v1087 = vpop.f32.mrf.mxu0
    %1088 = vmatprep.mubr.f32.mxu0 0.0
    %1089 = vmatmul.mubr.f32.gmra.mxu0 %v751
    %v1090 = vpop.f32.mrf.mxu0
    %v1091 = vadd.f32 0.0, %v1090
    %v1092 = vpop.f32.mrf.mxu0
    %1093 = vmatprep.mubr.f32.mxu0 0.0
    %1094 = vmatmul.mubr.f32.gmra.mxu0 %v754
    %v1095 = vpop.f32.mrf.mxu0
    %v1096 = vadd.f32 0.0, %v1095
    %v1097 = vpop.f32.mrf.mxu0
    %1098 = vmatprep.mubr.f32.mxu0 0.0
    %1099 = vmatmul.mubr.f32.gmra.mxu0 %v757
    %v1100 = vpop.f32.mrf.mxu0
    %v1101 = vadd.f32 0.0, %v1100
    %v1102 = vpop.f32.mrf.mxu0
    %1103 = vmatprep.mubr.f32.mxu0 0.0
    %1104 = vmatmul.mubr.f32.gmra.mxu0 %v760
    %v1105 = vpop.f32.mrf.mxu0
    %v1106 = vadd.f32 0.0, %v1105
    %v1107 = vpop.f32.mrf.mxu0
    %1108 = vmatprep.mubr.f32.mxu0 0.0
    %1109 = vmatmul.mubr.f32.gmra.mxu0 %v763
    %v1110 = vpop.f32.mrf.mxu0
    %v1111 = vadd.f32 0.0, %v1110
    %v1112 = vpop.f32.mrf.mxu0
    %1113 = vmatprep.mubr.f32.mxu0 0.0
    %1114 = vmatmul.mubr.f32.gmra.mxu0 %v766
    %v1115 = vpop.f32.mrf.mxu0
    %v1116 = vadd.f32 0.0, %v1115
    %v1117 = vpop.f32.mrf.mxu0
    %1118 = vmatprep.mubr.f32.mxu0 0.0
    %1119 = vmatmul.mubr.f32.gmra.mxu0 %v769
    %v1120 = vpop.f32.mrf.mxu0
    %v1121 = vadd.f32 0.0, %v1120
    %v1122 = vpop.f32.mrf.mxu0
    %1123 = vmatprep.mubr.f32.mxu0 0.0
    %1124 = vmatmul.mubr.f32.gmra.mxu0 %v772
    %v1125 = vpop.f32.mrf.mxu0
    %v1126 = vadd.f32 0.0, %v1125
    %v1127 = vpop.f32.mrf.mxu0
    %1128 = vmatprep.mubr.f32.mxu0 0.0
    %1129 = vmatmul.mubr.f32.gmra.mxu0 %v775
    %v1130 = vpop.f32.mrf.mxu0
    %v1131 = vadd.f32 0.0, %v1130
    %v1132 = vpop.f32.mrf.mxu0
    %1133 = vmatprep.mubr.f32.mxu0 0.0
    %1134 = vmatmul.mubr.f32.gmra.mxu0 %v778
    %v1135 = vpop.f32.mrf.mxu0
    %v1136 = vadd.f32 0.0, %v1135
    %v1137 = vpop.f32.mrf.mxu0
    %1138 = vmatprep.mubr.f32.mxu0 0.0
    %1139 = vmatmul.mubr.f32.gmra.mxu0 %v781
    %v1140 = vpop.f32.mrf.mxu0
    %v1141 = vadd.f32 0.0, %v1140
    %v1142 = vpop.f32.mrf.mxu0
    %1143 = vmatprep.mubr.f32.mxu0 0.0
    %1144 = vmatmul.mubr.f32.gmra.mxu0 %v784
    %v1145 = vpop.f32.mrf.mxu0
    %v1146 = vadd.f32 0.0, %v1145
    %v1147 = vpop.f32.mrf.mxu0
    %1148 = vmatprep.mubr.f32.mxu0 0.0
    %1149 = vmatmul.mubr.f32.gmra.mxu0 %v787
    %v1150 = vpop.f32.mrf.mxu0
    %v1151 = vadd.f32 0.0, %v1150
    %v1152 = vpop.f32.mrf.mxu0
    %1153 = vmatprep.mubr.f32.mxu0 0.0
    %1154 = vmatmul.mubr.f32.gmra.mxu0 %v790
    %v1155 = vpop.f32.mrf.mxu0
    %v1156 = vadd.f32 0.0, %v1155
    %v1157 = vpop.f32.mrf.mxu0
    %1158 = vmatprep.mubr.f32.mxu0 0.0
    %1159 = vmatmul.mubr.f32.gmra.mxu0 %v793
    %v1160 = vpop.f32.mrf.mxu0
    %v1161 = vadd.f32 0.0, %v1160
    %v1162 = vpop.f32.mrf.mxu0
    %1163 = vmatprep.mubr.f32.mxu0 0.0
    %1164 = vmatmul.mubr.f32.gmra.mxu0 %v796
    %v1165 = vpop.f32.mrf.mxu0
    %v1166 = vadd.f32 0.0, %v1165
    %v1167 = vpop.f32.mrf.mxu0
    %1168 = vmatprep.mubr.f32.mxu0 0.0
    %1169 = vmatmul.mubr.f32.gmra.mxu0 %v799
    %v1170 = vpop.f32.mrf.mxu0
    %v1171 = vadd.f32 0.0, %v1170
    %v1172 = vpop.f32.mrf.mxu0
    %1173 = vmatprep.mubr.f32.mxu0 0.0
    %1174 = vmatmul.mubr.f32.gmra.mxu0 %v802
    %v1175 = vpop.f32.mrf.mxu0
    %v1176 = vadd.f32 0.0, %v1175
    %v1177 = vpop.f32.mrf.mxu0
    %1178 = vmatprep.mubr.f32.mxu0 0.0
    %1179 = vmatmul.mubr.f32.gmra.mxu0 %v805
    %v1180 = vpop.f32.mrf.mxu0
    %v1181 = vadd.f32 0.0, %v1180
    %v1182 = vpop.f32.mrf.mxu0
    %1183 = vmatprep.mubr.f32.mxu0 0.0
    %1184 = vmatmul.mubr.f32.gmra.mxu0 %v808
    %v1185 = vpop.f32.mrf.mxu0
    %v1186 = vadd.f32 0.0, %v1185
    %v1187 = vpop.f32.mrf.mxu0
    %1188 = vmatprep.mubr.f32.mxu0 0.0
    %1189 = vmatmul.mubr.f32.gmra.mxu0 %v811
    %v1190 = vpop.f32.mrf.mxu0
    %v1191 = vadd.f32 0.0, %v1190
    %v1192 = vpop.f32.mrf.mxu0
    %1193 = vmatprep.mubr.f32.mxu0 0.0
    %1194 = vmatmul.mubr.f32.gmra.mxu0 %v814
    %v1195 = vpop.f32.mrf.mxu0
    %v1196 = vadd.f32 0.0, %v1195
    %v1197 = vpop.f32.mrf.mxu0
    %1198 = vmatprep.mubr.f32.mxu0 0.0
    %1199 = vmatmul.mubr.f32.gmra.mxu0 %v817
    %v1200 = vpop.f32.mrf.mxu0
    %v1201 = vadd.f32 0.0, %v1200
    %v1202 = vpop.f32.mrf.mxu0
    %1203 = vmatprep.mubr.f32.mxu0 0.0
    %1204 = vmatmul.mubr.f32.gmra.mxu0 %v820
    %v1205 = vpop.f32.mrf.mxu0
    %v1206 = vadd.f32 0.0, %v1205
    %v1207 = vpop.f32.mrf.mxu0
    %1208 = vmatprep.mubr.f32.mxu0 0.0
    %1209 = vmatmul.mubr.f32.gmra.mxu0 %v823
    %v1210 = vpop.f32.mrf.mxu0
    %v1211 = vadd.f32 0.0, %v1210
    %v1212 = vpop.f32.mrf.mxu0
    %1213 = vmatprep.mubr.f32.mxu0 0.0
    %1214 = vmatmul.mubr.f32.gmra.mxu0 %v826
    %v1215 = vpop.f32.mrf.mxu0
    %v1216 = vadd.f32 0.0, %v1215
    %v1217 = vpop.f32.mrf.mxu0
    %1218 = vmatprep.mubr.f32.mxu0 0.0
    %1219 = vmatmul.mubr.f32.gmra.mxu0 %v829
    %v1220 = vpop.f32.mrf.mxu0
    %v1221 = vadd.f32 0.0, %v1220
    %v1222 = vpop.f32.mrf.mxu0
    %1223 = vmatprep.mubr.f32.mxu0 0.0
    %1224 = vmatmul.mubr.f32.gmra.mxu0 %v832
    %v1225 = vpop.f32.mrf.mxu0
    %v1226 = vadd.f32 0.0, %v1225
    %v1227 = vpop.f32.mrf.mxu0
    %1228 = vmatprep.mubr.f32.mxu0 0.0
    %1229 = vmatmul.mubr.f32.gmra.mxu0 %v835
    %v1230 = vpop.f32.mrf.mxu0
    %v1231 = vadd.f32 0.0, %v1230
    %v1232 = vpop.f32.mrf.mxu0
    %1233 = vmatprep.mubr.f32.mxu0 0.0
    %1234 = vmatmul.mubr.f32.gmra.mxu0 %v838
    %v1235 = vpop.f32.mrf.mxu0
    %v1236 = vadd.f32 0.0, %v1235
    %v1237 = vpop.f32.mrf.mxu0
    %1238 = vmatprep.mubr.f32.mxu0 0.0
    %1239 = vmatmul.mubr.f32.gmra.mxu0 %v841
    %v1240 = vpop.f32.mrf.mxu0
    %v1241 = vadd.f32 0.0, %v1240
    %v1242 = vpop.f32.mrf.mxu0
    %1243 = vmatprep.mubr.f32.mxu0 0.0
    %1244 = vmatmul.mubr.f32.gmra.mxu0 %v844
    %v1245 = vpop.f32.mrf.mxu0
    %v1246 = vadd.f32 0.0, %v1245
    %v1247 = vpop.f32.mrf.mxu0
    %1248 = vmatprep.mubr.f32.mxu0 0.0
    %1249 = vmatmul.mubr.f32.gmra.mxu0 %v847
    %v1250 = vpop.f32.mrf.mxu0
    %v1251 = vadd.f32 0.0, %v1250
    %v1252 = vpop.f32.mrf.mxu0
    %1253 = vmatprep.mubr.f32.mxu0 0.0
    %1254 = vmatmul.mubr.f32.gmra.mxu0 %v850
    %v1255 = vpop.f32.mrf.mxu0
    %v1256 = vadd.f32 0.0, %v1255
    %v1257 = vpop.f32.mrf.mxu0
    %1258 = vmatprep.mubr.f32.mxu0 0.0
    %1259 = vmatmul.mubr.f32.gmra.mxu0 %v853
    %v1260 = vpop.f32.mrf.mxu0
    %v1261 = vadd.f32 0.0, %v1260
    %v1262 = vpop.f32.mrf.mxu0
    %1263 = vmatprep.mubr.f32.mxu0 0.0
    %1264 = vmatmul.mubr.f32.gmra.mxu0 %v856
    %v1265 = vpop.f32.mrf.mxu0
    %v1266 = vadd.f32 0.0, %v1265
    %v1267 = vpop.f32.mrf.mxu0
    %1268 = vmatprep.mubr.f32.mxu0 0.0
    %1269 = vmatmul.mubr.f32.gmra.mxu0 %v859
    %v1270 = vpop.f32.mrf.mxu0
    %v1271 = vadd.f32 0.0, %v1270
    %v1272 = vpop.f32.mrf.mxu0
    %1273 = vmatprep.mubr.f32.mxu0 0.0
    %1274 = vmatmul.mubr.f32.gmra.mxu0 %v862
    %v1275 = vpop.f32.mrf.mxu0
    %v1276 = vadd.f32 0.0, %v1275
    %v1277 = vpop.f32.mrf.mxu0
    %1278 = vmatprep.mubr.f32.mxu0 0.0
    %1279 = vmatmul.mubr.f32.gmra.mxu0 %v865
    %v1280 = vpop.f32.mrf.mxu0
    %v1281 = vadd.f32 0.0, %v1280
    %v1282 = vpop.f32.mrf.mxu0
    %1283 = vmatprep.mubr.f32.mxu0 0.0
    %1284 = vmatmul.mubr.f32.gmra.mxu0 %v868
    %v1285 = vpop.f32.mrf.mxu0
    %v1286 = vadd.f32 0.0, %v1285
    %v1287 = vpop.f32.mrf.mxu0
    %1288 = vmatprep.mubr.f32.mxu0 0.0
    %1289 = vmatmul.mubr.f32.gmra.mxu0 %v871
    %v1290 = vpop.f32.mrf.mxu0
    %v1291 = vadd.f32 0.0, %v1290
    %v1292 = vpop.f32.mrf.mxu0
    %1293 = vmatprep.mubr.f32.mxu0 0.0
    %1294 = vmatmul.mubr.f32.gmra.mxu0 %v874
    %v1295 = vpop.f32.mrf.mxu0
    %v1296 = vadd.f32 0.0, %v1295
    %v1297 = vpop.f32.mrf.mxu0
    %1298 = vmatprep.mubr.f32.mxu0 0.0
    %1299 = vmatmul.mubr.f32.gmra.mxu0 %v877
    %v1300 = vpop.f32.mrf.mxu0
    %v1301 = vadd.f32 0.0, %v1300
    %v1302 = vpop.f32.mrf.mxu0
    %1303 = vmatprep.mubr.f32.mxu0 0.0
    %1304 = vmatmul.mubr.f32.gmra.mxu0 %v880
    %v1305 = vpop.f32.mrf.mxu0
    %v1306 = vadd.f32 0.0, %v1305
    %v1307 = vpop.f32.mrf.mxu0
    %1308 = vmatprep.mubr.f32.mxu0 0.0
    %1309 = vmatmul.mubr.f32.gmra.mxu0 %v883
    %v1310 = vpop.f32.mrf.mxu0
    %v1311 = vadd.f32 0.0, %v1310
    %v1312 = vpop.f32.mrf.mxu0
    %1313 = vmatprep.mubr.f32.mxu0 0.0
    %1314 = vmatmul.mubr.f32.gmra.mxu0 %v886
    %v1315 = vpop.f32.mrf.mxu0
    %v1316 = vadd.f32 0.0, %v1315
    %v1317 = vpop.f32.mrf.mxu0
    %1318 = vmatprep.mubr.f32.mxu0 0.0
    %1319 = vmatmul.mubr.f32.gmra.mxu0 %v889
    %v1320 = vpop.f32.mrf.mxu0
    %v1321 = vadd.f32 0.0, %v1320
    %v1322 = vpop.f32.mrf.mxu0
    %1323 = vdwg.mxu0
    %v1324 = vld [vmem:[%s4] sm:$0x1]
    %v1325 = vmul.f32 %v1006, 2.0
    %v1326 = vmul.f32 %v1011, 2.0
    %v1327 = vmul.f32 %v1016, 2.0
    %v1328 = vmul.f32 %v1021, 2.0
    %v1329 = vmul.f32 %v1026, 2.0
    %v1330 = vmul.f32 %v1031, 2.0
    %v1331 = vmul.f32 %v1036, 2.0
    %v1332 = vmul.f32 %v1041, 2.0
    %v1333 = vmul.f32 %v1046, 2.0
    %v1334 = vmul.f32 %v1051, 2.0
    %v1335 = vmul.f32 %v1056, 2.0
    %v1336 = vmul.f32 %v1061, 2.0
    %v1337 = vmul.f32 %v1066, 2.0
    %v1338 = vmul.f32 %v1071, 2.0
    %v1339 = vmul.f32 %v1076, 2.0
    %v1340 = vmul.f32 %v1081, 2.0
    %v1341 = vmul.f32 %v1086, 2.0
    %v1342 = vmul.f32 %v1091, 2.0
    %v1343 = vmul.f32 %v1096, 2.0
    %v1344 = vmul.f32 %v1101, 2.0
    %v1345 = vmul.f32 %v1106, 2.0
    %v1346 = vmul.f32 %v1111, 2.0
    %v1347 = vmul.f32 %v1116, 2.0
    %v1348 = vmul.f32 %v1121, 2.0
    %v1349 = vmul.f32 %v1126, 2.0
    %v1350 = vmul.f32 %v1131, 2.0
    %v1351 = vmul.f32 %v1136, 2.0
    %v1352 = vmul.f32 %v1141, 2.0
    %v1353 = vmul.f32 %v1146, 2.0
    %v1354 = vmul.f32 %v1151, 2.0
    %v1355 = vmul.f32 %v1156, 2.0
    %v1356 = vmul.f32 %v1161, 2.0
    %v1357 = vmul.f32 %v1166, 2.0
    %v1358 = vmul.f32 %v1171, 2.0
    %v1359 = vmul.f32 %v1176, 2.0
    %v1360 = vmul.f32 %v1181, 2.0
    %v1361 = vmul.f32 %v1186, 2.0
    %v1362 = vmul.f32 %v1191, 2.0
    %v1363 = vmul.f32 %v1196, 2.0
    %v1364 = vmul.f32 %v1201, 2.0
    %v1365 = vmul.f32 %v1206, 2.0
    %v1366 = vmul.f32 %v1211, 2.0
    %v1367 = vmul.f32 %v1216, 2.0
    %v1368 = vmul.f32 %v1221, 2.0
    %v1369 = vmul.f32 %v1226, 2.0
    %v1370 = vmul.f32 %v1231, 2.0
    %v1371 = vmul.f32 %v1236, 2.0
    %v1372 = vmul.f32 %v1241, 2.0
    %v1373 = vmul.f32 %v1246, 2.0
    %v1374 = vmul.f32 %v1251, 2.0
    %v1375 = vmul.f32 %v1256, 2.0
    %v1376 = vmul.f32 %v1261, 2.0
    %v1377 = vmul.f32 %v1266, 2.0
    %v1378 = vmul.f32 %v1271, 2.0
    %v1379 = vmul.f32 %v1276, 2.0
    %v1380 = vmul.f32 %v1281, 2.0
    %v1381 = vmul.f32 %v1286, 2.0
    %v1382 = vmul.f32 %v1291, 2.0
    %v1383 = vmul.f32 %v1296, 2.0
    %v1384 = vmul.f32 %v1301, 2.0
    %v1385 = vmul.f32 %v1306, 2.0
    %v1386 = vmul.f32 %v1311, 2.0
    %v1387 = vmul.f32 %v1316, 2.0
    %v1388 = vmul.f32 %v1321, 2.0
    %v1390 = vlaneseq
    %v1391 = vshrl.u32 %v1390, 7
    %v1392 = vsub.s32 0, %v1391
    %v1393 = vrot.slane %v1324, %v1392
    %v1395 = vsub.f32 %v1393, %v1325
    %v1396 = vsub.f32 %v1393, %v1326
    %v1397 = vsub.f32 %v1393, %v1327
    %v1398 = vsub.f32 %v1393, %v1328
    %v1399 = vsub.f32 %v1393, %v1329
    %v1400 = vsub.f32 %v1393, %v1330
    %v1401 = vsub.f32 %v1393, %v1331
    %v1402 = vsub.f32 %v1393, %v1332
    %v1403 = vsub.f32 %v1393, %v1333
    %v1404 = vsub.f32 %v1393, %v1334
    %v1405 = vsub.f32 %v1393, %v1335
    %v1406 = vsub.f32 %v1393, %v1336
    %v1407 = vsub.f32 %v1393, %v1337
    %v1408 = vsub.f32 %v1393, %v1338
    %v1409 = vsub.f32 %v1393, %v1339
    %v1410 = vsub.f32 %v1393, %v1340
    %v1411 = vsub.f32 %v1393, %v1341
    %v1412 = vsub.f32 %v1393, %v1342
    %v1413 = vsub.f32 %v1393, %v1343
    %v1414 = vsub.f32 %v1393, %v1344
    %v1415 = vsub.f32 %v1393, %v1345
    %v1416 = vsub.f32 %v1393, %v1346
    %v1417 = vsub.f32 %v1393, %v1347
    %v1418 = vsub.f32 %v1393, %v1348
    %v1419 = vsub.f32 %v1393, %v1349
    %v1420 = vsub.f32 %v1393, %v1350
    %v1421 = vsub.f32 %v1393, %v1351
    %v1422 = vsub.f32 %v1393, %v1352
    %v1423 = vsub.f32 %v1393, %v1353
    %v1424 = vsub.f32 %v1393, %v1354
    %v1425 = vsub.f32 %v1393, %v1355
    %v1426 = vsub.f32 %v1393, %v1356
    %v1427 = vsub.f32 %v1393, %v1357
    %v1428 = vsub.f32 %v1393, %v1358
    %v1429 = vsub.f32 %v1393, %v1359
    %v1430 = vsub.f32 %v1393, %v1360
    %v1431 = vsub.f32 %v1393, %v1361
    %v1432 = vsub.f32 %v1393, %v1362
    %v1433 = vsub.f32 %v1393, %v1363
    %v1434 = vsub.f32 %v1393, %v1364
    %v1435 = vsub.f32 %v1393, %v1365
    %v1436 = vsub.f32 %v1393, %v1366
    %v1437 = vsub.f32 %v1393, %v1367
    %v1438 = vsub.f32 %v1393, %v1368
    %v1439 = vsub.f32 %v1393, %v1369
    %v1440 = vsub.f32 %v1393, %v1370
    %v1441 = vsub.f32 %v1393, %v1371
    %v1442 = vsub.f32 %v1393, %v1372
    %v1443 = vsub.f32 %v1393, %v1373
    %v1444 = vsub.f32 %v1393, %v1374
    %v1445 = vsub.f32 %v1393, %v1375
    %v1446 = vsub.f32 %v1393, %v1376
    %v1447 = vsub.f32 %v1393, %v1377
    %v1448 = vsub.f32 %v1393, %v1378
    %v1449 = vsub.f32 %v1393, %v1379
    %v1450 = vsub.f32 %v1393, %v1380
    %v1451 = vsub.f32 %v1393, %v1381
    %v1452 = vsub.f32 %v1393, %v1382
    %v1453 = vsub.f32 %v1393, %v1383
    %v1454 = vsub.f32 %v1393, %v1384
    %v1455 = vsub.f32 %v1393, %v1385
    %v1456 = vsub.f32 %v1393, %v1386
    %v1457 = vsub.f32 %v1393, %v1387
    %v1458 = vsub.f32 %v1393, %v1388
    %1459 = vmin.xlane.f32.xlu0 %v1395
    %v1460 = vpop.xlane.xlu0 %1459
    %1461 = vmin.xlane.f32.xlu0 %v1396
    %v1462 = vpop.xlane.xlu0 %1461
    %1463 = vmin.xlane.f32.xlu0 %v1397
    %v1464 = vpop.xlane.xlu0 %1463
    %1465 = vmin.xlane.f32.xlu0 %v1398
    %v1466 = vpop.xlane.xlu0 %1465
    %1467 = vmin.xlane.f32.xlu0 %v1399
    %v1468 = vpop.xlane.xlu0 %1467
    %1469 = vmin.xlane.f32.xlu0 %v1400
    %v1470 = vpop.xlane.xlu0 %1469
    %1471 = vmin.xlane.f32.xlu0 %v1401
    %v1472 = vpop.xlane.xlu0 %1471
    %1473 = vmin.xlane.f32.xlu0 %v1402
    %v1474 = vpop.xlane.xlu0 %1473
    %1475 = vmin.xlane.f32.xlu0 %v1403
    %v1476 = vpop.xlane.xlu0 %1475
    %1477 = vmin.xlane.f32.xlu0 %v1404
    %v1478 = vpop.xlane.xlu0 %1477
    %1479 = vmin.xlane.f32.xlu0 %v1405
    %v1480 = vpop.xlane.xlu0 %1479
    %1481 = vmin.xlane.f32.xlu0 %v1406
    %v1482 = vpop.xlane.xlu0 %1481
    %1483 = vmin.xlane.f32.xlu0 %v1407
    %v1484 = vpop.xlane.xlu0 %1483
    %1485 = vmin.xlane.f32.xlu0 %v1408
    %v1486 = vpop.xlane.xlu0 %1485
    %1487 = vmin.xlane.f32.xlu0 %v1409
    %v1488 = vpop.xlane.xlu0 %1487
    %1489 = vmin.xlane.f32.xlu0 %v1410
    %v1490 = vpop.xlane.xlu0 %1489
    %1491 = vmin.xlane.f32.xlu0 %v1411
    %v1492 = vpop.xlane.xlu0 %1491
    %1493 = vmin.xlane.f32.xlu0 %v1412
    %v1494 = vpop.xlane.xlu0 %1493
    %1495 = vmin.xlane.f32.xlu0 %v1413
    %v1496 = vpop.xlane.xlu0 %1495
    %1497 = vmin.xlane.f32.xlu0 %v1414
    %v1498 = vpop.xlane.xlu0 %1497
    %1499 = vmin.xlane.f32.xlu0 %v1415
    %v1500 = vpop.xlane.xlu0 %1499
    %1501 = vmin.xlane.f32.xlu0 %v1416
    %v1502 = vpop.xlane.xlu0 %1501
    %1503 = vmin.xlane.f32.xlu0 %v1417
    %v1504 = vpop.xlane.xlu0 %1503
    %1505 = vmin.xlane.f32.xlu0 %v1418
    %v1506 = vpop.xlane.xlu0 %1505
    %1507 = vmin.xlane.f32.xlu0 %v1419
    %v1508 = vpop.xlane.xlu0 %1507
    %1509 = vmin.xlane.f32.xlu0 %v1420
    %v1510 = vpop.xlane.xlu0 %1509
    %1511 = vmin.xlane.f32.xlu0 %v1421
    %v1512 = vpop.xlane.xlu0 %1511
    %1513 = vmin.xlane.f32.xlu0 %v1422
    %v1514 = vpop.xlane.xlu0 %1513
    %1515 = vmin.xlane.f32.xlu0 %v1423
    %v1516 = vpop.xlane.xlu0 %1515
    %1517 = vmin.xlane.f32.xlu0 %v1424
    %v1518 = vpop.xlane.xlu0 %1517
    %1519 = vmin.xlane.f32.xlu0 %v1425
    %v1520 = vpop.xlane.xlu0 %1519
    %1521 = vmin.xlane.f32.xlu0 %v1426
    %v1522 = vpop.xlane.xlu0 %1521
    %1523 = vmin.xlane.f32.xlu0 %v1427
    %v1524 = vpop.xlane.xlu0 %1523
    %1525 = vmin.xlane.f32.xlu0 %v1428
    %v1526 = vpop.xlane.xlu0 %1525
    %1527 = vmin.xlane.f32.xlu0 %v1429
    %v1528 = vpop.xlane.xlu0 %1527
    %1529 = vmin.xlane.f32.xlu0 %v1430
    %v1530 = vpop.xlane.xlu0 %1529
    %1531 = vmin.xlane.f32.xlu0 %v1431
    %v1532 = vpop.xlane.xlu0 %1531
    %1533 = vmin.xlane.f32.xlu0 %v1432
    %v1534 = vpop.xlane.xlu0 %1533
    %1535 = vmin.xlane.f32.xlu0 %v1433
    %v1536 = vpop.xlane.xlu0 %1535
    %1537 = vmin.xlane.f32.xlu0 %v1434
    %v1538 = vpop.xlane.xlu0 %1537
    %1539 = vmin.xlane.f32.xlu0 %v1435
    %v1540 = vpop.xlane.xlu0 %1539
    %1541 = vmin.xlane.f32.xlu0 %v1436
    %v1542 = vpop.xlane.xlu0 %1541
    %1543 = vmin.xlane.f32.xlu0 %v1437
    %v1544 = vpop.xlane.xlu0 %1543
    %1545 = vmin.xlane.f32.xlu0 %v1438
    %v1546 = vpop.xlane.xlu0 %1545
    %1547 = vmin.xlane.f32.xlu0 %v1439
    %v1548 = vpop.xlane.xlu0 %1547
    %1549 = vmin.xlane.f32.xlu0 %v1440
    %v1550 = vpop.xlane.xlu0 %1549
    %1551 = vmin.xlane.f32.xlu0 %v1441
    %v1552 = vpop.xlane.xlu0 %1551
    %1553 = vmin.xlane.f32.xlu0 %v1442
    %v1554 = vpop.xlane.xlu0 %1553
    %1555 = vmin.xlane.f32.xlu0 %v1443
    %v1556 = vpop.xlane.xlu0 %1555
    %1557 = vmin.xlane.f32.xlu0 %v1444
    %v1558 = vpop.xlane.xlu0 %1557
    %1559 = vmin.xlane.f32.xlu0 %v1445
    %v1560 = vpop.xlane.xlu0 %1559
    %1561 = vmin.xlane.f32.xlu0 %v1446
    %v1562 = vpop.xlane.xlu0 %1561
    %1563 = vmin.xlane.f32.xlu0 %v1447
    %v1564 = vpop.xlane.xlu0 %1563
    %1565 = vmin.xlane.f32.xlu0 %v1448
    %v1566 = vpop.xlane.xlu0 %1565
    %1567 = vmin.xlane.f32.xlu0 %v1449
    %v1568 = vpop.xlane.xlu0 %1567
    %1569 = vmin.xlane.f32.xlu0 %v1450
    %v1570 = vpop.xlane.xlu0 %1569
    %1571 = vmin.xlane.f32.xlu0 %v1451
    %v1572 = vpop.xlane.xlu0 %1571
    %1573 = vmin.xlane.f32.xlu0 %v1452
    %v1574 = vpop.xlane.xlu0 %1573
    %1575 = vmin.xlane.f32.xlu0 %v1453
    %v1576 = vpop.xlane.xlu0 %1575
    %1577 = vmin.xlane.f32.xlu0 %v1454
    %v1578 = vpop.xlane.xlu0 %1577
    %1579 = vmin.xlane.f32.xlu0 %v1455
    %v1580 = vpop.xlane.xlu0 %1579
    %1581 = vmin.xlane.f32.xlu0 %v1456
    %v1582 = vpop.xlane.xlu0 %1581
    %1583 = vmin.xlane.f32.xlu0 %v1457
    %v1584 = vpop.xlane.xlu0 %1583
    %1585 = vmin.xlane.f32.xlu0 %v1458
    %v1586 = vpop.xlane.xlu0 %1585
    %v1587 = vlaneseq
    %v1588 = vand.u32 %v1587, 127
    %vm1589 = vcmp.eq.f32.partialorder %v1395, %v1460
    %vm1590 = vcmp.eq.f32.partialorder %v1396, %v1462
    %vm1591 = vcmp.eq.f32.partialorder %v1397, %v1464
    %vm1592 = vcmp.eq.f32.partialorder %v1398, %v1466
    %vm1593 = vcmp.eq.f32.partialorder %v1399, %v1468
    %vm1594 = vcmp.eq.f32.partialorder %v1400, %v1470
    %vm1595 = vcmp.eq.f32.partialorder %v1401, %v1472
    %vm1596 = vcmp.eq.f32.partialorder %v1402, %v1474
    %vm1597 = vcmp.eq.f32.partialorder %v1403, %v1476
    %vm1598 = vcmp.eq.f32.partialorder %v1404, %v1478
    %vm1599 = vcmp.eq.f32.partialorder %v1405, %v1480
    %vm1600 = vcmp.eq.f32.partialorder %v1406, %v1482
    %vm1601 = vcmp.eq.f32.partialorder %v1407, %v1484
    %vm1602 = vcmp.eq.f32.partialorder %v1408, %v1486
    %vm1603 = vcmp.eq.f32.partialorder %v1409, %v1488
    %vm1604 = vcmp.eq.f32.partialorder %v1410, %v1490
    %vm1605 = vcmp.eq.f32.partialorder %v1411, %v1492
    %vm1606 = vcmp.eq.f32.partialorder %v1412, %v1494
    %vm1607 = vcmp.eq.f32.partialorder %v1413, %v1496
    %vm1608 = vcmp.eq.f32.partialorder %v1414, %v1498
    %vm1609 = vcmp.eq.f32.partialorder %v1415, %v1500
    %vm1610 = vcmp.eq.f32.partialorder %v1416, %v1502
    %vm1611 = vcmp.eq.f32.partialorder %v1417, %v1504
    %vm1612 = vcmp.eq.f32.partialorder %v1418, %v1506
    %vm1613 = vcmp.eq.f32.partialorder %v1419, %v1508
    %vm1614 = vcmp.eq.f32.partialorder %v1420, %v1510
    %vm1615 = vcmp.eq.f32.partialorder %v1421, %v1512
    %vm1616 = vcmp.eq.f32.partialorder %v1422, %v1514
    %vm1617 = vcmp.eq.f32.partialorder %v1423, %v1516
    %vm1618 = vcmp.eq.f32.partialorder %v1424, %v1518
    %vm1619 = vcmp.eq.f32.partialorder %v1425, %v1520
    %vm1620 = vcmp.eq.f32.partialorder %v1426, %v1522
    %vm1621 = vcmp.eq.f32.partialorder %v1427, %v1524
    %vm1622 = vcmp.eq.f32.partialorder %v1428, %v1526
    %vm1623 = vcmp.eq.f32.partialorder %v1429, %v1528
    %vm1624 = vcmp.eq.f32.partialorder %v1430, %v1530
    %vm1625 = vcmp.eq.f32.partialorder %v1431, %v1532
    %vm1626 = vcmp.eq.f32.partialorder %v1432, %v1534
    %vm1627 = vcmp.eq.f32.partialorder %v1433, %v1536
    %vm1628 = vcmp.eq.f32.partialorder %v1434, %v1538
    %vm1629 = vcmp.eq.f32.partialorder %v1435, %v1540
    %vm1630 = vcmp.eq.f32.partialorder %v1436, %v1542
    %vm1631 = vcmp.eq.f32.partialorder %v1437, %v1544
    %vm1632 = vcmp.eq.f32.partialorder %v1438, %v1546
    %vm1633 = vcmp.eq.f32.partialorder %v1439, %v1548
    %vm1634 = vcmp.eq.f32.partialorder %v1440, %v1550
    %vm1635 = vcmp.eq.f32.partialorder %v1441, %v1552
    %vm1636 = vcmp.eq.f32.partialorder %v1442, %v1554
    %vm1637 = vcmp.eq.f32.partialorder %v1443, %v1556
    %vm1638 = vcmp.eq.f32.partialorder %v1444, %v1558
    %vm1639 = vcmp.eq.f32.partialorder %v1445, %v1560
    %vm1640 = vcmp.eq.f32.partialorder %v1446, %v1562
    %vm1641 = vcmp.eq.f32.partialorder %v1447, %v1564
    %vm1642 = vcmp.eq.f32.partialorder %v1448, %v1566
    %vm1643 = vcmp.eq.f32.partialorder %v1449, %v1568
    %vm1644 = vcmp.eq.f32.partialorder %v1450, %v1570
    %vm1645 = vcmp.eq.f32.partialorder %v1451, %v1572
    %vm1646 = vcmp.eq.f32.partialorder %v1452, %v1574
    %vm1647 = vcmp.eq.f32.partialorder %v1453, %v1576
    %vm1648 = vcmp.eq.f32.partialorder %v1454, %v1578
    %vm1649 = vcmp.eq.f32.partialorder %v1455, %v1580
    %vm1650 = vcmp.eq.f32.partialorder %v1456, %v1582
    %vm1651 = vcmp.eq.f32.partialorder %v1457, %v1584
    %vm1652 = vcmp.eq.f32.partialorder %v1458, %v1586
    %v1653 = vsel %vm1589, %v1588, 128
    %v1654 = vsel %vm1590, %v1588, 128
    %v1655 = vsel %vm1591, %v1588, 128
    %v1656 = vsel %vm1592, %v1588, 128
    %v1657 = vsel %vm1593, %v1588, 128
    %v1658 = vsel %vm1594, %v1588, 128
    %v1659 = vsel %vm1595, %v1588, 128
    %v1660 = vsel %vm1596, %v1588, 128
    %v1661 = vsel %vm1597, %v1588, 128
    %v1662 = vsel %vm1598, %v1588, 128
    %v1663 = vsel %vm1599, %v1588, 128
    %v1664 = vsel %vm1600, %v1588, 128
    %v1665 = vsel %vm1601, %v1588, 128
    %v1666 = vsel %vm1602, %v1588, 128
    %v1667 = vsel %vm1603, %v1588, 128
    %v1668 = vsel %vm1604, %v1588, 128
    %v1669 = vsel %vm1605, %v1588, 128
    %v1670 = vsel %vm1606, %v1588, 128
    %v1671 = vsel %vm1607, %v1588, 128
    %v1672 = vsel %vm1608, %v1588, 128
    %v1673 = vsel %vm1609, %v1588, 128
    %v1674 = vsel %vm1610, %v1588, 128
    %v1675 = vsel %vm1611, %v1588, 128
    %v1676 = vsel %vm1612, %v1588, 128
    %v1677 = vsel %vm1613, %v1588, 128
    %v1678 = vsel %vm1614, %v1588, 128
    %v1679 = vsel %vm1615, %v1588, 128
    %v1680 = vsel %vm1616, %v1588, 128
    %v1681 = vsel %vm1617, %v1588, 128
    %v1682 = vsel %vm1618, %v1588, 128
    %v1683 = vsel %vm1619, %v1588, 128
    %v1684 = vsel %vm1620, %v1588, 128
    %v1685 = vsel %vm1621, %v1588, 128
    %v1686 = vsel %vm1622, %v1588, 128
    %v1687 = vsel %vm1623, %v1588, 128
    %v1688 = vsel %vm1624, %v1588, 128
    %v1689 = vsel %vm1625, %v1588, 128
    %v1690 = vsel %vm1626, %v1588, 128
    %v1691 = vsel %vm1627, %v1588, 128
    %v1692 = vsel %vm1628, %v1588, 128
    %v1693 = vsel %vm1629, %v1588, 128
    %v1694 = vsel %vm1630, %v1588, 128
    %v1695 = vsel %vm1631, %v1588, 128
    %v1696 = vsel %vm1632, %v1588, 128
    %v1697 = vsel %vm1633, %v1588, 128
    %v1698 = vsel %vm1634, %v1588, 128
    %v1699 = vsel %vm1635, %v1588, 128
    %v1700 = vsel %vm1636, %v1588, 128
    %v1701 = vsel %vm1637, %v1588, 128
    %v1702 = vsel %vm1638, %v1588, 128
    %v1703 = vsel %vm1639, %v1588, 128
    %v1704 = vsel %vm1640, %v1588, 128
    %v1705 = vsel %vm1641, %v1588, 128
    %v1706 = vsel %vm1642, %v1588, 128
    %v1707 = vsel %vm1643, %v1588, 128
    %v1708 = vsel %vm1644, %v1588, 128
    %v1709 = vsel %vm1645, %v1588, 128
    %v1710 = vsel %vm1646, %v1588, 128
    %v1711 = vsel %vm1647, %v1588, 128
    %v1712 = vsel %vm1648, %v1588, 128
    %v1713 = vsel %vm1649, %v1588, 128
    %v1714 = vsel %vm1650, %v1588, 128
    %v1715 = vsel %vm1651, %v1588, 128
    %v1716 = vsel %vm1652, %v1588, 128
    %v1717 = vand.u32 %v1653, 65535
    %v1718 = vshra.s32 %v1653, 16
    %v1719 = vcvt.s32.f32 %v1717
    %v1720 = vcvt.s32.f32 %v1718
    %1721 = vmin.xlane.f32.xlu0 %v1720
    %v1722 = vpop.xlane.xlu0 %1721
    %vm1723 = vcmp.eq.f32.partialorder %v1720, %v1722
    %v1724 = vsel %vm1723, %v1719, inf
    %1725 = vmin.xlane.f32.xlu0 %v1724
    %v1726 = vpop.xlane.xlu0 %1725
    %v1727 = vcvt.f32.s32 %v1726
    %v1728 = vcvt.f32.s32 %v1722
    %v1729 = vshll.u32 %v1728, 16
    %v1730 = vadd.s32 %v1729, %v1727
    %v1731 = vand.u32 %v1654, 65535
    %v1732 = vshra.s32 %v1654, 16
    %v1733 = vcvt.s32.f32 %v1731
    %v1734 = vcvt.s32.f32 %v1732
    %1735 = vmin.xlane.f32.xlu0 %v1734
    %v1736 = vpop.xlane.xlu0 %1735
    %vm1737 = vcmp.eq.f32.partialorder %v1734, %v1736
    %v1738 = vsel %vm1737, %v1733, inf
    %1739 = vmin.xlane.f32.xlu0 %v1738
    %v1740 = vpop.xlane.xlu0 %1739
    %v1741 = vcvt.f32.s32 %v1740
    %v1742 = vcvt.f32.s32 %v1736
    %v1743 = vshll.u32 %v1742, 16
    %v1744 = vadd.s32 %v1743, %v1741
    %v1745 = vand.u32 %v1655, 65535
    %v1746 = vshra.s32 %v1655, 16
    %v1747 = vcvt.s32.f32 %v1745
    %v1748 = vcvt.s32.f32 %v1746
    %1749 = vmin.xlane.f32.xlu0 %v1748
    %v1750 = vpop.xlane.xlu0 %1749
    %vm1751 = vcmp.eq.f32.partialorder %v1748, %v1750
    %v1752 = vsel %vm1751, %v1747, inf
    %1753 = vmin.xlane.f32.xlu0 %v1752
    %v1754 = vpop.xlane.xlu0 %1753
    %v1755 = vcvt.f32.s32 %v1754
    %v1756 = vcvt.f32.s32 %v1750
    %v1757 = vshll.u32 %v1756, 16
    %v1758 = vadd.s32 %v1757, %v1755
    %v1759 = vand.u32 %v1656, 65535
    %v1760 = vshra.s32 %v1656, 16
    %v1761 = vcvt.s32.f32 %v1759
    %v1762 = vcvt.s32.f32 %v1760
    %1763 = vmin.xlane.f32.xlu0 %v1762
    %v1764 = vpop.xlane.xlu0 %1763
    %vm1765 = vcmp.eq.f32.partialorder %v1762, %v1764
    %v1766 = vsel %vm1765, %v1761, inf
    %1767 = vmin.xlane.f32.xlu0 %v1766
    %v1768 = vpop.xlane.xlu0 %1767
    %v1769 = vcvt.f32.s32 %v1768
    %v1770 = vcvt.f32.s32 %v1764
    %v1771 = vshll.u32 %v1770, 16
    %v1772 = vadd.s32 %v1771, %v1769
    %v1773 = vand.u32 %v1657, 65535
    %v1774 = vshra.s32 %v1657, 16
    %v1775 = vcvt.s32.f32 %v1773
    %v1776 = vcvt.s32.f32 %v1774
    %1777 = vmin.xlane.f32.xlu0 %v1776
    %v1778 = vpop.xlane.xlu0 %1777
    %vm1779 = vcmp.eq.f32.partialorder %v1776, %v1778
    %v1780 = vsel %vm1779, %v1775, inf
    %1781 = vmin.xlane.f32.xlu0 %v1780
    %v1782 = vpop.xlane.xlu0 %1781
    %v1783 = vcvt.f32.s32 %v1782
    %v1784 = vcvt.f32.s32 %v1778
    %v1785 = vshll.u32 %v1784, 16
    %v1786 = vadd.s32 %v1785, %v1783
    %v1787 = vand.u32 %v1658, 65535
    %v1788 = vshra.s32 %v1658, 16
    %v1789 = vcvt.s32.f32 %v1787
    %v1790 = vcvt.s32.f32 %v1788
    %1791 = vmin.xlane.f32.xlu0 %v1790
    %v1792 = vpop.xlane.xlu0 %1791
    %vm1793 = vcmp.eq.f32.partialorder %v1790, %v1792
    %v1794 = vsel %vm1793, %v1789, inf
    %1795 = vmin.xlane.f32.xlu0 %v1794
    %v1796 = vpop.xlane.xlu0 %1795
    %v1797 = vcvt.f32.s32 %v1796
    %v1798 = vcvt.f32.s32 %v1792
    %v1799 = vshll.u32 %v1798, 16
    %v1800 = vadd.s32 %v1799, %v1797
    %v1801 = vand.u32 %v1659, 65535
    %v1802 = vshra.s32 %v1659, 16
    %v1803 = vcvt.s32.f32 %v1801
    %v1804 = vcvt.s32.f32 %v1802
    %1805 = vmin.xlane.f32.xlu0 %v1804
    %v1806 = vpop.xlane.xlu0 %1805
    %vm1807 = vcmp.eq.f32.partialorder %v1804, %v1806
    %v1808 = vsel %vm1807, %v1803, inf
    %1809 = vmin.xlane.f32.xlu0 %v1808
    %v1810 = vpop.xlane.xlu0 %1809
    %v1811 = vcvt.f32.s32 %v1810
    %v1812 = vcvt.f32.s32 %v1806
    %v1813 = vshll.u32 %v1812, 16
    %v1814 = vadd.s32 %v1813, %v1811
    %v1815 = vand.u32 %v1660, 65535
    %v1816 = vshra.s32 %v1660, 16
    %v1817 = vcvt.s32.f32 %v1815
    %v1818 = vcvt.s32.f32 %v1816
    %1819 = vmin.xlane.f32.xlu0 %v1818
    %v1820 = vpop.xlane.xlu0 %1819
    %vm1821 = vcmp.eq.f32.partialorder %v1818, %v1820
    %v1822 = vsel %vm1821, %v1817, inf
    %1823 = vmin.xlane.f32.xlu0 %v1822
    %v1824 = vpop.xlane.xlu0 %1823
    %v1825 = vcvt.f32.s32 %v1824
    %v1826 = vcvt.f32.s32 %v1820
    %v1827 = vshll.u32 %v1826, 16
    %v1828 = vadd.s32 %v1827, %v1825
    %v1829 = vand.u32 %v1661, 65535
    %v1830 = vshra.s32 %v1661, 16
    %v1831 = vcvt.s32.f32 %v1829
    %v1832 = vcvt.s32.f32 %v1830
    %1833 = vmin.xlane.f32.xlu0 %v1832
    %v1834 = vpop.xlane.xlu0 %1833
    %vm1835 = vcmp.eq.f32.partialorder %v1832, %v1834
    %v1836 = vsel %vm1835, %v1831, inf
    %1837 = vmin.xlane.f32.xlu0 %v1836
    %v1838 = vpop.xlane.xlu0 %1837
    %v1839 = vcvt.f32.s32 %v1838
    %v1840 = vcvt.f32.s32 %v1834
    %v1841 = vshll.u32 %v1840, 16
    %v1842 = vadd.s32 %v1841, %v1839
    %v1843 = vand.u32 %v1662, 65535
    %v1844 = vshra.s32 %v1662, 16
    %v1845 = vcvt.s32.f32 %v1843
    %v1846 = vcvt.s32.f32 %v1844
    %1847 = vmin.xlane.f32.xlu0 %v1846
    %v1848 = vpop.xlane.xlu0 %1847
    %vm1849 = vcmp.eq.f32.partialorder %v1846, %v1848
    %v1850 = vsel %vm1849, %v1845, inf
    %1851 = vmin.xlane.f32.xlu0 %v1850
    %v1852 = vpop.xlane.xlu0 %1851
    %v1853 = vcvt.f32.s32 %v1852
    %v1854 = vcvt.f32.s32 %v1848
    %v1855 = vshll.u32 %v1854, 16
    %v1856 = vadd.s32 %v1855, %v1853
    %v1857 = vand.u32 %v1663, 65535
    %v1858 = vshra.s32 %v1663, 16
    %v1859 = vcvt.s32.f32 %v1857
    %v1860 = vcvt.s32.f32 %v1858
    %1861 = vmin.xlane.f32.xlu0 %v1860
    %v1862 = vpop.xlane.xlu0 %1861
    %vm1863 = vcmp.eq.f32.partialorder %v1860, %v1862
    %v1864 = vsel %vm1863, %v1859, inf
    %1865 = vmin.xlane.f32.xlu0 %v1864
    %v1866 = vpop.xlane.xlu0 %1865
    %v1867 = vcvt.f32.s32 %v1866
    %v1868 = vcvt.f32.s32 %v1862
    %v1869 = vshll.u32 %v1868, 16
    %v1870 = vadd.s32 %v1869, %v1867
    %v1871 = vand.u32 %v1664, 65535
    %v1872 = vshra.s32 %v1664, 16
    %v1873 = vcvt.s32.f32 %v1871
    %v1874 = vcvt.s32.f32 %v1872
    %1875 = vmin.xlane.f32.xlu0 %v1874
    %v1876 = vpop.xlane.xlu0 %1875
    %vm1877 = vcmp.eq.f32.partialorder %v1874, %v1876
    %v1878 = vsel %vm1877, %v1873, inf
    %1879 = vmin.xlane.f32.xlu0 %v1878
    %v1880 = vpop.xlane.xlu0 %1879
    %v1881 = vcvt.f32.s32 %v1880
    %v1882 = vcvt.f32.s32 %v1876
    %v1883 = vshll.u32 %v1882, 16
    %v1884 = vadd.s32 %v1883, %v1881
    %v1885 = vand.u32 %v1665, 65535
    %v1886 = vshra.s32 %v1665, 16
    %v1887 = vcvt.s32.f32 %v1885
    %v1888 = vcvt.s32.f32 %v1886
    %1889 = vmin.xlane.f32.xlu0 %v1888
    %v1890 = vpop.xlane.xlu0 %1889
    %vm1891 = vcmp.eq.f32.partialorder %v1888, %v1890
    %v1892 = vsel %vm1891, %v1887, inf
    %1893 = vmin.xlane.f32.xlu0 %v1892
    %v1894 = vpop.xlane.xlu0 %1893
    %v1895 = vcvt.f32.s32 %v1894
    %v1896 = vcvt.f32.s32 %v1890
    %v1897 = vshll.u32 %v1896, 16
    %v1898 = vadd.s32 %v1897, %v1895
    %v1899 = vand.u32 %v1666, 65535
    %v1900 = vshra.s32 %v1666, 16
    %v1901 = vcvt.s32.f32 %v1899
    %v1902 = vcvt.s32.f32 %v1900
    %1903 = vmin.xlane.f32.xlu0 %v1902
    %v1904 = vpop.xlane.xlu0 %1903
    %vm1905 = vcmp.eq.f32.partialorder %v1902, %v1904
    %v1906 = vsel %vm1905, %v1901, inf
    %1907 = vmin.xlane.f32.xlu0 %v1906
    %v1908 = vpop.xlane.xlu0 %1907
    %v1909 = vcvt.f32.s32 %v1908
    %v1910 = vcvt.f32.s32 %v1904
    %v1911 = vshll.u32 %v1910, 16
    %v1912 = vadd.s32 %v1911, %v1909
    %v1913 = vand.u32 %v1667, 65535
    %v1914 = vshra.s32 %v1667, 16
    %v1915 = vcvt.s32.f32 %v1913
    %v1916 = vcvt.s32.f32 %v1914
    %1917 = vmin.xlane.f32.xlu0 %v1916
    %v1918 = vpop.xlane.xlu0 %1917
    %vm1919 = vcmp.eq.f32.partialorder %v1916, %v1918
    %v1920 = vsel %vm1919, %v1915, inf
    %1921 = vmin.xlane.f32.xlu0 %v1920
    %v1922 = vpop.xlane.xlu0 %1921
    %v1923 = vcvt.f32.s32 %v1922
    %v1924 = vcvt.f32.s32 %v1918
    %v1925 = vshll.u32 %v1924, 16
    %v1926 = vadd.s32 %v1925, %v1923
    %v1927 = vand.u32 %v1668, 65535
    %v1928 = vshra.s32 %v1668, 16
    %v1929 = vcvt.s32.f32 %v1927
    %v1930 = vcvt.s32.f32 %v1928
    %1931 = vmin.xlane.f32.xlu0 %v1930
    %v1932 = vpop.xlane.xlu0 %1931
    %vm1933 = vcmp.eq.f32.partialorder %v1930, %v1932
    %v1934 = vsel %vm1933, %v1929, inf
    %1935 = vmin.xlane.f32.xlu0 %v1934
    %v1936 = vpop.xlane.xlu0 %1935
    %v1937 = vcvt.f32.s32 %v1936
    %v1938 = vcvt.f32.s32 %v1932
    %v1939 = vshll.u32 %v1938, 16
    %v1940 = vadd.s32 %v1939, %v1937
    %v1941 = vand.u32 %v1669, 65535
    %v1942 = vshra.s32 %v1669, 16
    %v1943 = vcvt.s32.f32 %v1941
    %v1944 = vcvt.s32.f32 %v1942
    %1945 = vmin.xlane.f32.xlu0 %v1944
    %v1946 = vpop.xlane.xlu0 %1945
    %vm1947 = vcmp.eq.f32.partialorder %v1944, %v1946
    %v1948 = vsel %vm1947, %v1943, inf
    %1949 = vmin.xlane.f32.xlu0 %v1948
    %v1950 = vpop.xlane.xlu0 %1949
    %v1951 = vcvt.f32.s32 %v1950
    %v1952 = vcvt.f32.s32 %v1946
    %v1953 = vshll.u32 %v1952, 16
    %v1954 = vadd.s32 %v1953, %v1951
    %v1955 = vand.u32 %v1670, 65535
    %v1956 = vshra.s32 %v1670, 16
    %v1957 = vcvt.s32.f32 %v1955
    %v1958 = vcvt.s32.f32 %v1956
    %1959 = vmin.xlane.f32.xlu0 %v1958
    %v1960 = vpop.xlane.xlu0 %1959
    %vm1961 = vcmp.eq.f32.partialorder %v1958, %v1960
    %v1962 = vsel %vm1961, %v1957, inf
    %1963 = vmin.xlane.f32.xlu0 %v1962
    %v1964 = vpop.xlane.xlu0 %1963
    %v1965 = vcvt.f32.s32 %v1964
    %v1966 = vcvt.f32.s32 %v1960
    %v1967 = vshll.u32 %v1966, 16
    %v1968 = vadd.s32 %v1967, %v1965
    %v1969 = vand.u32 %v1671, 65535
    %v1970 = vshra.s32 %v1671, 16
    %v1971 = vcvt.s32.f32 %v1969
    %v1972 = vcvt.s32.f32 %v1970
    %1973 = vmin.xlane.f32.xlu0 %v1972
    %v1974 = vpop.xlane.xlu0 %1973
    %vm1975 = vcmp.eq.f32.partialorder %v1972, %v1974
    %v1976 = vsel %vm1975, %v1971, inf
    %1977 = vmin.xlane.f32.xlu0 %v1976
    %v1978 = vpop.xlane.xlu0 %1977
    %v1979 = vcvt.f32.s32 %v1978
    %v1980 = vcvt.f32.s32 %v1974
    %v1981 = vshll.u32 %v1980, 16
    %v1982 = vadd.s32 %v1981, %v1979
    %v1983 = vand.u32 %v1672, 65535
    %v1984 = vshra.s32 %v1672, 16
    %v1985 = vcvt.s32.f32 %v1983
    %v1986 = vcvt.s32.f32 %v1984
    %1987 = vmin.xlane.f32.xlu0 %v1986
    %v1988 = vpop.xlane.xlu0 %1987
    %vm1989 = vcmp.eq.f32.partialorder %v1986, %v1988
    %v1990 = vsel %vm1989, %v1985, inf
    %1991 = vmin.xlane.f32.xlu0 %v1990
    %v1992 = vpop.xlane.xlu0 %1991
    %v1993 = vcvt.f32.s32 %v1992
    %v1994 = vcvt.f32.s32 %v1988
    %v1995 = vshll.u32 %v1994, 16
    %v1996 = vadd.s32 %v1995, %v1993
    %v1997 = vand.u32 %v1673, 65535
    %v1998 = vshra.s32 %v1673, 16
    %v1999 = vcvt.s32.f32 %v1997
    %v2000 = vcvt.s32.f32 %v1998
    %2001 = vmin.xlane.f32.xlu0 %v2000
    %v2002 = vpop.xlane.xlu0 %2001
    %vm2003 = vcmp.eq.f32.partialorder %v2000, %v2002
    %v2004 = vsel %vm2003, %v1999, inf
    %2005 = vmin.xlane.f32.xlu0 %v2004
    %v2006 = vpop.xlane.xlu0 %2005
    %v2007 = vcvt.f32.s32 %v2006
    %v2008 = vcvt.f32.s32 %v2002
    %v2009 = vshll.u32 %v2008, 16
    %v2010 = vadd.s32 %v2009, %v2007
    %v2011 = vand.u32 %v1674, 65535
    %v2012 = vshra.s32 %v1674, 16
    %v2013 = vcvt.s32.f32 %v2011
    %v2014 = vcvt.s32.f32 %v2012
    %2015 = vmin.xlane.f32.xlu0 %v2014
    %v2016 = vpop.xlane.xlu0 %2015
    %vm2017 = vcmp.eq.f32.partialorder %v2014, %v2016
    %v2018 = vsel %vm2017, %v2013, inf
    %2019 = vmin.xlane.f32.xlu0 %v2018
    %v2020 = vpop.xlane.xlu0 %2019
    %v2021 = vcvt.f32.s32 %v2020
    %v2022 = vcvt.f32.s32 %v2016
    %v2023 = vshll.u32 %v2022, 16
    %v2024 = vadd.s32 %v2023, %v2021
    %v2025 = vand.u32 %v1675, 65535
    %v2026 = vshra.s32 %v1675, 16
    %v2027 = vcvt.s32.f32 %v2025
    %v2028 = vcvt.s32.f32 %v2026
    %2029 = vmin.xlane.f32.xlu0 %v2028
    %v2030 = vpop.xlane.xlu0 %2029
    %vm2031 = vcmp.eq.f32.partialorder %v2028, %v2030
    %v2032 = vsel %vm2031, %v2027, inf
    %2033 = vmin.xlane.f32.xlu0 %v2032
    %v2034 = vpop.xlane.xlu0 %2033
    %v2035 = vcvt.f32.s32 %v2034
    %v2036 = vcvt.f32.s32 %v2030
    %v2037 = vshll.u32 %v2036, 16
    %v2038 = vadd.s32 %v2037, %v2035
    %v2039 = vand.u32 %v1676, 65535
    %v2040 = vshra.s32 %v1676, 16
    %v2041 = vcvt.s32.f32 %v2039
    %v2042 = vcvt.s32.f32 %v2040
    %2043 = vmin.xlane.f32.xlu0 %v2042
    %v2044 = vpop.xlane.xlu0 %2043
    %vm2045 = vcmp.eq.f32.partialorder %v2042, %v2044
    %v2046 = vsel %vm2045, %v2041, inf
    %2047 = vmin.xlane.f32.xlu0 %v2046
    %v2048 = vpop.xlane.xlu0 %2047
    %v2049 = vcvt.f32.s32 %v2048
    %v2050 = vcvt.f32.s32 %v2044
    %v2051 = vshll.u32 %v2050, 16
    %v2052 = vadd.s32 %v2051, %v2049
    %v2053 = vand.u32 %v1677, 65535
    %v2054 = vshra.s32 %v1677, 16
    %v2055 = vcvt.s32.f32 %v2053
    %v2056 = vcvt.s32.f32 %v2054
    %2057 = vmin.xlane.f32.xlu0 %v2056
    %v2058 = vpop.xlane.xlu0 %2057
    %vm2059 = vcmp.eq.f32.partialorder %v2056, %v2058
    %v2060 = vsel %vm2059, %v2055, inf
    %2061 = vmin.xlane.f32.xlu0 %v2060
    %v2062 = vpop.xlane.xlu0 %2061
    %v2063 = vcvt.f32.s32 %v2062
    %v2064 = vcvt.f32.s32 %v2058
    %v2065 = vshll.u32 %v2064, 16
    %v2066 = vadd.s32 %v2065, %v2063
    %v2067 = vand.u32 %v1678, 65535
    %v2068 = vshra.s32 %v1678, 16
    %v2069 = vcvt.s32.f32 %v2067
    %v2070 = vcvt.s32.f32 %v2068
    %2071 = vmin.xlane.f32.xlu0 %v2070
    %v2072 = vpop.xlane.xlu0 %2071
    %vm2073 = vcmp.eq.f32.partialorder %v2070, %v2072
    %v2074 = vsel %vm2073, %v2069, inf
    %2075 = vmin.xlane.f32.xlu0 %v2074
    %v2076 = vpop.xlane.xlu0 %2075
    %v2077 = vcvt.f32.s32 %v2076
    %v2078 = vcvt.f32.s32 %v2072
    %v2079 = vshll.u32 %v2078, 16
    %v2080 = vadd.s32 %v2079, %v2077
    %v2081 = vand.u32 %v1679, 65535
    %v2082 = vshra.s32 %v1679, 16
    %v2083 = vcvt.s32.f32 %v2081
    %v2084 = vcvt.s32.f32 %v2082
    %2085 = vmin.xlane.f32.xlu0 %v2084
    %v2086 = vpop.xlane.xlu0 %2085
    %vm2087 = vcmp.eq.f32.partialorder %v2084, %v2086
    %v2088 = vsel %vm2087, %v2083, inf
    %2089 = vmin.xlane.f32.xlu0 %v2088
    %v2090 = vpop.xlane.xlu0 %2089
    %v2091 = vcvt.f32.s32 %v2090
    %v2092 = vcvt.f32.s32 %v2086
    %v2093 = vshll.u32 %v2092, 16
    %v2094 = vadd.s32 %v2093, %v2091
    %v2095 = vand.u32 %v1680, 65535
    %v2096 = vshra.s32 %v1680, 16
    %v2097 = vcvt.s32.f32 %v2095
    %v2098 = vcvt.s32.f32 %v2096
    %2099 = vmin.xlane.f32.xlu0 %v2098
    %v2100 = vpop.xlane.xlu0 %2099
    %vm2101 = vcmp.eq.f32.partialorder %v2098, %v2100
    %v2102 = vsel %vm2101, %v2097, inf
    %2103 = vmin.xlane.f32.xlu0 %v2102
    %v2104 = vpop.xlane.xlu0 %2103
    %v2105 = vcvt.f32.s32 %v2104
    %v2106 = vcvt.f32.s32 %v2100
    %v2107 = vshll.u32 %v2106, 16
    %v2108 = vadd.s32 %v2107, %v2105
    %v2109 = vand.u32 %v1681, 65535
    %v2110 = vshra.s32 %v1681, 16
    %v2111 = vcvt.s32.f32 %v2109
    %v2112 = vcvt.s32.f32 %v2110
    %2113 = vmin.xlane.f32.xlu0 %v2112
    %v2114 = vpop.xlane.xlu0 %2113
    %vm2115 = vcmp.eq.f32.partialorder %v2112, %v2114
    %v2116 = vsel %vm2115, %v2111, inf
    %2117 = vmin.xlane.f32.xlu0 %v2116
    %v2118 = vpop.xlane.xlu0 %2117
    %v2119 = vcvt.f32.s32 %v2118
    %v2120 = vcvt.f32.s32 %v2114
    %v2121 = vshll.u32 %v2120, 16
    %v2122 = vadd.s32 %v2121, %v2119
    %v2123 = vand.u32 %v1682, 65535
    %v2124 = vshra.s32 %v1682, 16
    %v2125 = vcvt.s32.f32 %v2123
    %v2126 = vcvt.s32.f32 %v2124
    %2127 = vmin.xlane.f32.xlu0 %v2126
    %v2128 = vpop.xlane.xlu0 %2127
    %vm2129 = vcmp.eq.f32.partialorder %v2126, %v2128
    %v2130 = vsel %vm2129, %v2125, inf
    %2131 = vmin.xlane.f32.xlu0 %v2130
    %v2132 = vpop.xlane.xlu0 %2131
    %v2133 = vcvt.f32.s32 %v2132
    %v2134 = vcvt.f32.s32 %v2128
    %v2135 = vshll.u32 %v2134, 16
    %v2136 = vadd.s32 %v2135, %v2133
    %v2137 = vand.u32 %v1683, 65535
    %v2138 = vshra.s32 %v1683, 16
    %v2139 = vcvt.s32.f32 %v2137
    %v2140 = vcvt.s32.f32 %v2138
    %2141 = vmin.xlane.f32.xlu0 %v2140
    %v2142 = vpop.xlane.xlu0 %2141
    %vm2143 = vcmp.eq.f32.partialorder %v2140, %v2142
    %v2144 = vsel %vm2143, %v2139, inf
    %2145 = vmin.xlane.f32.xlu0 %v2144
    %v2146 = vpop.xlane.xlu0 %2145
    %v2147 = vcvt.f32.s32 %v2146
    %v2148 = vcvt.f32.s32 %v2142
    %v2149 = vshll.u32 %v2148, 16
    %v2150 = vadd.s32 %v2149, %v2147
    %v2151 = vand.u32 %v1684, 65535
    %v2152 = vshra.s32 %v1684, 16
    %v2153 = vcvt.s32.f32 %v2151
    %v2154 = vcvt.s32.f32 %v2152
    %2155 = vmin.xlane.f32.xlu0 %v2154
    %v2156 = vpop.xlane.xlu0 %2155
    %vm2157 = vcmp.eq.f32.partialorder %v2154, %v2156
    %v2158 = vsel %vm2157, %v2153, inf
    %2159 = vmin.xlane.f32.xlu0 %v2158
    %v2160 = vpop.xlane.xlu0 %2159
    %v2161 = vcvt.f32.s32 %v2160
    %v2162 = vcvt.f32.s32 %v2156
    %v2163 = vshll.u32 %v2162, 16
    %v2164 = vadd.s32 %v2163, %v2161
    %v2165 = vand.u32 %v1685, 65535
    %v2166 = vshra.s32 %v1685, 16
    %v2167 = vcvt.s32.f32 %v2165
    %v2168 = vcvt.s32.f32 %v2166
    %2169 = vmin.xlane.f32.xlu0 %v2168
    %v2170 = vpop.xlane.xlu0 %2169
    %vm2171 = vcmp.eq.f32.partialorder %v2168, %v2170
    %v2172 = vsel %vm2171, %v2167, inf
    %2173 = vmin.xlane.f32.xlu0 %v2172
    %v2174 = vpop.xlane.xlu0 %2173
    %v2175 = vcvt.f32.s32 %v2174
    %v2176 = vcvt.f32.s32 %v2170
    %v2177 = vshll.u32 %v2176, 16
    %v2178 = vadd.s32 %v2177, %v2175
    %v2179 = vand.u32 %v1686, 65535
    %v2180 = vshra.s32 %v1686, 16
    %v2181 = vcvt.s32.f32 %v2179
    %v2182 = vcvt.s32.f32 %v2180
    %2183 = vmin.xlane.f32.xlu0 %v2182
    %v2184 = vpop.xlane.xlu0 %2183
    %vm2185 = vcmp.eq.f32.partialorder %v2182, %v2184
    %v2186 = vsel %vm2185, %v2181, inf
    %2187 = vmin.xlane.f32.xlu0 %v2186
    %v2188 = vpop.xlane.xlu0 %2187
    %v2189 = vcvt.f32.s32 %v2188
    %v2190 = vcvt.f32.s32 %v2184
    %v2191 = vshll.u32 %v2190, 16
    %v2192 = vadd.s32 %v2191, %v2189
    %v2193 = vand.u32 %v1687, 65535
    %v2194 = vshra.s32 %v1687, 16
    %v2195 = vcvt.s32.f32 %v2193
    %v2196 = vcvt.s32.f32 %v2194
    %2197 = vmin.xlane.f32.xlu0 %v2196
    %v2198 = vpop.xlane.xlu0 %2197
    %vm2199 = vcmp.eq.f32.partialorder %v2196, %v2198
    %v2200 = vsel %vm2199, %v2195, inf
    %2201 = vmin.xlane.f32.xlu0 %v2200
    %v2202 = vpop.xlane.xlu0 %2201
    %v2203 = vcvt.f32.s32 %v2202
    %v2204 = vcvt.f32.s32 %v2198
    %v2205 = vshll.u32 %v2204, 16
    %v2206 = vadd.s32 %v2205, %v2203
    %v2207 = vand.u32 %v1688, 65535
    %v2208 = vshra.s32 %v1688, 16
    %v2209 = vcvt.s32.f32 %v2207
    %v2210 = vcvt.s32.f32 %v2208
    %2211 = vmin.xlane.f32.xlu0 %v2210
    %v2212 = vpop.xlane.xlu0 %2211
    %vm2213 = vcmp.eq.f32.partialorder %v2210, %v2212
    %v2214 = vsel %vm2213, %v2209, inf
    %2215 = vmin.xlane.f32.xlu0 %v2214
    %v2216 = vpop.xlane.xlu0 %2215
    %v2217 = vcvt.f32.s32 %v2216
    %v2218 = vcvt.f32.s32 %v2212
    %v2219 = vshll.u32 %v2218, 16
    %v2220 = vadd.s32 %v2219, %v2217
    %v2221 = vand.u32 %v1689, 65535
    %v2222 = vshra.s32 %v1689, 16
    %v2223 = vcvt.s32.f32 %v2221
    %v2224 = vcvt.s32.f32 %v2222
    %2225 = vmin.xlane.f32.xlu0 %v2224
    %v2226 = vpop.xlane.xlu0 %2225
    %vm2227 = vcmp.eq.f32.partialorder %v2224, %v2226
    %v2228 = vsel %vm2227, %v2223, inf
    %2229 = vmin.xlane.f32.xlu0 %v2228
    %v2230 = vpop.xlane.xlu0 %2229
    %v2231 = vcvt.f32.s32 %v2230
    %v2232 = vcvt.f32.s32 %v2226
    %v2233 = vshll.u32 %v2232, 16
    %v2234 = vadd.s32 %v2233, %v2231
    %v2235 = vand.u32 %v1690, 65535
    %v2236 = vshra.s32 %v1690, 16
    %v2237 = vcvt.s32.f32 %v2235
    %v2238 = vcvt.s32.f32 %v2236
    %2239 = vmin.xlane.f32.xlu0 %v2238
    %v2240 = vpop.xlane.xlu0 %2239
    %vm2241 = vcmp.eq.f32.partialorder %v2238, %v2240
    %v2242 = vsel %vm2241, %v2237, inf
    %2243 = vmin.xlane.f32.xlu0 %v2242
    %v2244 = vpop.xlane.xlu0 %2243
    %v2245 = vcvt.f32.s32 %v2244
    %v2246 = vcvt.f32.s32 %v2240
    %v2247 = vshll.u32 %v2246, 16
    %v2248 = vadd.s32 %v2247, %v2245
    %v2249 = vand.u32 %v1691, 65535
    %v2250 = vshra.s32 %v1691, 16
    %v2251 = vcvt.s32.f32 %v2249
    %v2252 = vcvt.s32.f32 %v2250
    %2253 = vmin.xlane.f32.xlu0 %v2252
    %v2254 = vpop.xlane.xlu0 %2253
    %vm2255 = vcmp.eq.f32.partialorder %v2252, %v2254
    %v2256 = vsel %vm2255, %v2251, inf
    %2257 = vmin.xlane.f32.xlu0 %v2256
    %v2258 = vpop.xlane.xlu0 %2257
    %v2259 = vcvt.f32.s32 %v2258
    %v2260 = vcvt.f32.s32 %v2254
    %v2261 = vshll.u32 %v2260, 16
    %v2262 = vadd.s32 %v2261, %v2259
    %v2263 = vand.u32 %v1692, 65535
    %v2264 = vshra.s32 %v1692, 16
    %v2265 = vcvt.s32.f32 %v2263
    %v2266 = vcvt.s32.f32 %v2264
    %2267 = vmin.xlane.f32.xlu0 %v2266
    %v2268 = vpop.xlane.xlu0 %2267
    %vm2269 = vcmp.eq.f32.partialorder %v2266, %v2268
    %v2270 = vsel %vm2269, %v2265, inf
    %2271 = vmin.xlane.f32.xlu0 %v2270
    %v2272 = vpop.xlane.xlu0 %2271
    %v2273 = vcvt.f32.s32 %v2272
    %v2274 = vcvt.f32.s32 %v2268
    %v2275 = vshll.u32 %v2274, 16
    %v2276 = vadd.s32 %v2275, %v2273
    %v2277 = vand.u32 %v1693, 65535
    %v2278 = vshra.s32 %v1693, 16
    %v2279 = vcvt.s32.f32 %v2277
    %v2280 = vcvt.s32.f32 %v2278
    %2281 = vmin.xlane.f32.xlu0 %v2280
    %v2282 = vpop.xlane.xlu0 %2281
    %vm2283 = vcmp.eq.f32.partialorder %v2280, %v2282
    %v2284 = vsel %vm2283, %v2279, inf
    %2285 = vmin.xlane.f32.xlu0 %v2284
    %v2286 = vpop.xlane.xlu0 %2285
    %v2287 = vcvt.f32.s32 %v2286
    %v2288 = vcvt.f32.s32 %v2282
    %v2289 = vshll.u32 %v2288, 16
    %v2290 = vadd.s32 %v2289, %v2287
    %v2291 = vand.u32 %v1694, 65535
    %v2292 = vshra.s32 %v1694, 16
    %v2293 = vcvt.s32.f32 %v2291
    %v2294 = vcvt.s32.f32 %v2292
    %2295 = vmin.xlane.f32.xlu0 %v2294
    %v2296 = vpop.xlane.xlu0 %2295
    %vm2297 = vcmp.eq.f32.partialorder %v2294, %v2296
    %v2298 = vsel %vm2297, %v2293, inf
    %2299 = vmin.xlane.f32.xlu0 %v2298
    %v2300 = vpop.xlane.xlu0 %2299
    %v2301 = vcvt.f32.s32 %v2300
    %v2302 = vcvt.f32.s32 %v2296
    %v2303 = vshll.u32 %v2302, 16
    %v2304 = vadd.s32 %v2303, %v2301
    %v2305 = vand.u32 %v1695, 65535
    %v2306 = vshra.s32 %v1695, 16
    %v2307 = vcvt.s32.f32 %v2305
    %v2308 = vcvt.s32.f32 %v2306
    %2309 = vmin.xlane.f32.xlu0 %v2308
    %v2310 = vpop.xlane.xlu0 %2309
    %vm2311 = vcmp.eq.f32.partialorder %v2308, %v2310
    %v2312 = vsel %vm2311, %v2307, inf
    %2313 = vmin.xlane.f32.xlu0 %v2312
    %v2314 = vpop.xlane.xlu0 %2313
    %v2315 = vcvt.f32.s32 %v2314
    %v2316 = vcvt.f32.s32 %v2310
    %v2317 = vshll.u32 %v2316, 16
    %v2318 = vadd.s32 %v2317, %v2315
    %v2319 = vand.u32 %v1696, 65535
    %v2320 = vshra.s32 %v1696, 16
    %v2321 = vcvt.s32.f32 %v2319
    %v2322 = vcvt.s32.f32 %v2320
    %2323 = vmin.xlane.f32.xlu0 %v2322
    %v2324 = vpop.xlane.xlu0 %2323
    %vm2325 = vcmp.eq.f32.partialorder %v2322, %v2324
    %v2326 = vsel %vm2325, %v2321, inf
    %2327 = vmin.xlane.f32.xlu0 %v2326
    %v2328 = vpop.xlane.xlu0 %2327
    %v2329 = vcvt.f32.s32 %v2328
    %v2330 = vcvt.f32.s32 %v2324
    %v2331 = vshll.u32 %v2330, 16
    %v2332 = vadd.s32 %v2331, %v2329
    %v2333 = vand.u32 %v1697, 65535
    %v2334 = vshra.s32 %v1697, 16
    %v2335 = vcvt.s32.f32 %v2333
    %v2336 = vcvt.s32.f32 %v2334
    %2337 = vmin.xlane.f32.xlu0 %v2336
    %v2338 = vpop.xlane.xlu0 %2337
    %vm2339 = vcmp.eq.f32.partialorder %v2336, %v2338
    %v2340 = vsel %vm2339, %v2335, inf
    %2341 = vmin.xlane.f32.xlu0 %v2340
    %v2342 = vpop.xlane.xlu0 %2341
    %v2343 = vcvt.f32.s32 %v2342
    %v2344 = vcvt.f32.s32 %v2338
    %v2345 = vshll.u32 %v2344, 16
    %v2346 = vadd.s32 %v2345, %v2343
    %v2347 = vand.u32 %v1698, 65535
    %v2348 = vshra.s32 %v1698, 16
    %v2349 = vcvt.s32.f32 %v2347
    %v2350 = vcvt.s32.f32 %v2348
    %2351 = vmin.xlane.f32.xlu0 %v2350
    %v2352 = vpop.xlane.xlu0 %2351
    %vm2353 = vcmp.eq.f32.partialorder %v2350, %v2352
    %v2354 = vsel %vm2353, %v2349, inf
    %2355 = vmin.xlane.f32.xlu0 %v2354
    %v2356 = vpop.xlane.xlu0 %2355
    %v2357 = vcvt.f32.s32 %v2356
    %v2358 = vcvt.f32.s32 %v2352
    %v2359 = vshll.u32 %v2358, 16
    %v2360 = vadd.s32 %v2359, %v2357
    %v2361 = vand.u32 %v1699, 65535
    %v2362 = vshra.s32 %v1699, 16
    %v2363 = vcvt.s32.f32 %v2361
    %v2364 = vcvt.s32.f32 %v2362
    %2365 = vmin.xlane.f32.xlu0 %v2364
    %v2366 = vpop.xlane.xlu0 %2365
    %vm2367 = vcmp.eq.f32.partialorder %v2364, %v2366
    %v2368 = vsel %vm2367, %v2363, inf
    %2369 = vmin.xlane.f32.xlu0 %v2368
    %v2370 = vpop.xlane.xlu0 %2369
    %v2371 = vcvt.f32.s32 %v2370
    %v2372 = vcvt.f32.s32 %v2366
    %v2373 = vshll.u32 %v2372, 16
    %v2374 = vadd.s32 %v2373, %v2371
    %v2375 = vand.u32 %v1700, 65535
    %v2376 = vshra.s32 %v1700, 16
    %v2377 = vcvt.s32.f32 %v2375
    %v2378 = vcvt.s32.f32 %v2376
    %2379 = vmin.xlane.f32.xlu0 %v2378
    %v2380 = vpop.xlane.xlu0 %2379
    %vm2381 = vcmp.eq.f32.partialorder %v2378, %v2380
    %v2382 = vsel %vm2381, %v2377, inf
    %2383 = vmin.xlane.f32.xlu0 %v2382
    %v2384 = vpop.xlane.xlu0 %2383
    %v2385 = vcvt.f32.s32 %v2384
    %v2386 = vcvt.f32.s32 %v2380
    %v2387 = vshll.u32 %v2386, 16
    %v2388 = vadd.s32 %v2387, %v2385
    %v2389 = vand.u32 %v1701, 65535
    %v2390 = vshra.s32 %v1701, 16
    %v2391 = vcvt.s32.f32 %v2389
    %v2392 = vcvt.s32.f32 %v2390
    %2393 = vmin.xlane.f32.xlu0 %v2392
    %v2394 = vpop.xlane.xlu0 %2393
    %vm2395 = vcmp.eq.f32.partialorder %v2392, %v2394
    %v2396 = vsel %vm2395, %v2391, inf
    %2397 = vmin.xlane.f32.xlu0 %v2396
    %v2398 = vpop.xlane.xlu0 %2397
    %v2399 = vcvt.f32.s32 %v2398
    %v2400 = vcvt.f32.s32 %v2394
    %v2401 = vshll.u32 %v2400, 16
    %v2402 = vadd.s32 %v2401, %v2399
    %v2403 = vand.u32 %v1702, 65535
    %v2404 = vshra.s32 %v1702, 16
    %v2405 = vcvt.s32.f32 %v2403
    %v2406 = vcvt.s32.f32 %v2404
    %2407 = vmin.xlane.f32.xlu0 %v2406
    %v2408 = vpop.xlane.xlu0 %2407
    %vm2409 = vcmp.eq.f32.partialorder %v2406, %v2408
    %v2410 = vsel %vm2409, %v2405, inf
    %2411 = vmin.xlane.f32.xlu0 %v2410
    %v2412 = vpop.xlane.xlu0 %2411
    %v2413 = vcvt.f32.s32 %v2412
    %v2414 = vcvt.f32.s32 %v2408
    %v2415 = vshll.u32 %v2414, 16
    %v2416 = vadd.s32 %v2415, %v2413
    %v2417 = vand.u32 %v1703, 65535
    %v2418 = vshra.s32 %v1703, 16
    %v2419 = vcvt.s32.f32 %v2417
    %v2420 = vcvt.s32.f32 %v2418
    %2421 = vmin.xlane.f32.xlu0 %v2420
    %v2422 = vpop.xlane.xlu0 %2421
    %vm2423 = vcmp.eq.f32.partialorder %v2420, %v2422
    %v2424 = vsel %vm2423, %v2419, inf
    %2425 = vmin.xlane.f32.xlu0 %v2424
    %v2426 = vpop.xlane.xlu0 %2425
    %v2427 = vcvt.f32.s32 %v2426
    %v2428 = vcvt.f32.s32 %v2422
    %v2429 = vshll.u32 %v2428, 16
    %v2430 = vadd.s32 %v2429, %v2427
    %v2431 = vand.u32 %v1704, 65535
    %v2432 = vshra.s32 %v1704, 16
    %v2433 = vcvt.s32.f32 %v2431
    %v2434 = vcvt.s32.f32 %v2432
    %2435 = vmin.xlane.f32.xlu0 %v2434
    %v2436 = vpop.xlane.xlu0 %2435
    %vm2437 = vcmp.eq.f32.partialorder %v2434, %v2436
    %v2438 = vsel %vm2437, %v2433, inf
    %2439 = vmin.xlane.f32.xlu0 %v2438
    %v2440 = vpop.xlane.xlu0 %2439
    %v2441 = vcvt.f32.s32 %v2440
    %v2442 = vcvt.f32.s32 %v2436
    %v2443 = vshll.u32 %v2442, 16
    %v2444 = vadd.s32 %v2443, %v2441
    %v2445 = vand.u32 %v1705, 65535
    %v2446 = vshra.s32 %v1705, 16
    %v2447 = vcvt.s32.f32 %v2445
    %v2448 = vcvt.s32.f32 %v2446
    %2449 = vmin.xlane.f32.xlu0 %v2448
    %v2450 = vpop.xlane.xlu0 %2449
    %vm2451 = vcmp.eq.f32.partialorder %v2448, %v2450
    %v2452 = vsel %vm2451, %v2447, inf
    %2453 = vmin.xlane.f32.xlu0 %v2452
    %v2454 = vpop.xlane.xlu0 %2453
    %v2455 = vcvt.f32.s32 %v2454
    %v2456 = vcvt.f32.s32 %v2450
    %v2457 = vshll.u32 %v2456, 16
    %v2458 = vadd.s32 %v2457, %v2455
    %v2459 = vand.u32 %v1706, 65535
    %v2460 = vshra.s32 %v1706, 16
    %v2461 = vcvt.s32.f32 %v2459
    %v2462 = vcvt.s32.f32 %v2460
    %2463 = vmin.xlane.f32.xlu0 %v2462
    %v2464 = vpop.xlane.xlu0 %2463
    %vm2465 = vcmp.eq.f32.partialorder %v2462, %v2464
    %v2466 = vsel %vm2465, %v2461, inf
    %2467 = vmin.xlane.f32.xlu0 %v2466
    %v2468 = vpop.xlane.xlu0 %2467
    %v2469 = vcvt.f32.s32 %v2468
    %v2470 = vcvt.f32.s32 %v2464
    %v2471 = vshll.u32 %v2470, 16
    %v2472 = vadd.s32 %v2471, %v2469
    %v2473 = vand.u32 %v1707, 65535
    %v2474 = vshra.s32 %v1707, 16
    %v2475 = vcvt.s32.f32 %v2473
    %v2476 = vcvt.s32.f32 %v2474
    %2477 = vmin.xlane.f32.xlu0 %v2476
    %v2478 = vpop.xlane.xlu0 %2477
    %vm2479 = vcmp.eq.f32.partialorder %v2476, %v2478
    %v2480 = vsel %vm2479, %v2475, inf
    %2481 = vmin.xlane.f32.xlu0 %v2480
    %v2482 = vpop.xlane.xlu0 %2481
    %v2483 = vcvt.f32.s32 %v2482
    %v2484 = vcvt.f32.s32 %v2478
    %v2485 = vshll.u32 %v2484, 16
    %v2486 = vadd.s32 %v2485, %v2483
    %v2487 = vand.u32 %v1708, 65535
    %v2488 = vshra.s32 %v1708, 16
    %v2489 = vcvt.s32.f32 %v2487
    %v2490 = vcvt.s32.f32 %v2488
    %2491 = vmin.xlane.f32.xlu0 %v2490
    %v2492 = vpop.xlane.xlu0 %2491
    %vm2493 = vcmp.eq.f32.partialorder %v2490, %v2492
    %v2494 = vsel %vm2493, %v2489, inf
    %2495 = vmin.xlane.f32.xlu0 %v2494
    %v2496 = vpop.xlane.xlu0 %2495
    %v2497 = vcvt.f32.s32 %v2496
    %v2498 = vcvt.f32.s32 %v2492
    %v2499 = vshll.u32 %v2498, 16
    %v2500 = vadd.s32 %v2499, %v2497
    %v2501 = vand.u32 %v1709, 65535
    %v2502 = vshra.s32 %v1709, 16
    %v2503 = vcvt.s32.f32 %v2501
    %v2504 = vcvt.s32.f32 %v2502
    %2505 = vmin.xlane.f32.xlu0 %v2504
    %v2506 = vpop.xlane.xlu0 %2505
    %vm2507 = vcmp.eq.f32.partialorder %v2504, %v2506
    %v2508 = vsel %vm2507, %v2503, inf
    %2509 = vmin.xlane.f32.xlu0 %v2508
    %v2510 = vpop.xlane.xlu0 %2509
    %v2511 = vcvt.f32.s32 %v2510
    %v2512 = vcvt.f32.s32 %v2506
    %v2513 = vshll.u32 %v2512, 16
    %v2514 = vadd.s32 %v2513, %v2511
    %v2515 = vand.u32 %v1710, 65535
    %v2516 = vshra.s32 %v1710, 16
    %v2517 = vcvt.s32.f32 %v2515
    %v2518 = vcvt.s32.f32 %v2516
    %2519 = vmin.xlane.f32.xlu0 %v2518
    %v2520 = vpop.xlane.xlu0 %2519
    %vm2521 = vcmp.eq.f32.partialorder %v2518, %v2520
    %v2522 = vsel %vm2521, %v2517, inf
    %2523 = vmin.xlane.f32.xlu0 %v2522
    %v2524 = vpop.xlane.xlu0 %2523
    %v2525 = vcvt.f32.s32 %v2524
    %v2526 = vcvt.f32.s32 %v2520
    %v2527 = vshll.u32 %v2526, 16
    %v2528 = vadd.s32 %v2527, %v2525
    %v2529 = vand.u32 %v1711, 65535
    %v2530 = vshra.s32 %v1711, 16
    %v2531 = vcvt.s32.f32 %v2529
    %v2532 = vcvt.s32.f32 %v2530
    %2533 = vmin.xlane.f32.xlu0 %v2532
    %v2534 = vpop.xlane.xlu0 %2533
    %vm2535 = vcmp.eq.f32.partialorder %v2532, %v2534
    %v2536 = vsel %vm2535, %v2531, inf
    %2537 = vmin.xlane.f32.xlu0 %v2536
    %v2538 = vpop.xlane.xlu0 %2537
    %v2539 = vcvt.f32.s32 %v2538
    %v2540 = vcvt.f32.s32 %v2534
    %v2541 = vshll.u32 %v2540, 16
    %v2542 = vadd.s32 %v2541, %v2539
    %v2543 = vand.u32 %v1712, 65535
    %v2544 = vshra.s32 %v1712, 16
    %v2545 = vcvt.s32.f32 %v2543
    %v2546 = vcvt.s32.f32 %v2544
    %2547 = vmin.xlane.f32.xlu0 %v2546
    %v2548 = vpop.xlane.xlu0 %2547
    %vm2549 = vcmp.eq.f32.partialorder %v2546, %v2548
    %v2550 = vsel %vm2549, %v2545, inf
    %2551 = vmin.xlane.f32.xlu0 %v2550
    %v2552 = vpop.xlane.xlu0 %2551
    %v2553 = vcvt.f32.s32 %v2552
    %v2554 = vcvt.f32.s32 %v2548
    %v2555 = vshll.u32 %v2554, 16
    %v2556 = vadd.s32 %v2555, %v2553
    %v2557 = vand.u32 %v1713, 65535
    %v2558 = vshra.s32 %v1713, 16
    %v2559 = vcvt.s32.f32 %v2557
    %v2560 = vcvt.s32.f32 %v2558
    %2561 = vmin.xlane.f32.xlu0 %v2560
    %v2562 = vpop.xlane.xlu0 %2561
    %vm2563 = vcmp.eq.f32.partialorder %v2560, %v2562
    %v2564 = vsel %vm2563, %v2559, inf
    %2565 = vmin.xlane.f32.xlu0 %v2564
    %v2566 = vpop.xlane.xlu0 %2565
    %v2567 = vcvt.f32.s32 %v2566
    %v2568 = vcvt.f32.s32 %v2562
    %v2569 = vshll.u32 %v2568, 16
    %v2570 = vadd.s32 %v2569, %v2567
    %v2571 = vand.u32 %v1714, 65535
    %v2572 = vshra.s32 %v1714, 16
    %v2573 = vcvt.s32.f32 %v2571
    %v2574 = vcvt.s32.f32 %v2572
    %2575 = vmin.xlane.f32.xlu0 %v2574
    %v2576 = vpop.xlane.xlu0 %2575
    %vm2577 = vcmp.eq.f32.partialorder %v2574, %v2576
    %v2578 = vsel %vm2577, %v2573, inf
    %2579 = vmin.xlane.f32.xlu0 %v2578
    %v2580 = vpop.xlane.xlu0 %2579
    %v2581 = vcvt.f32.s32 %v2580
    %v2582 = vcvt.f32.s32 %v2576
    %v2583 = vshll.u32 %v2582, 16
    %v2584 = vadd.s32 %v2583, %v2581
    %v2585 = vand.u32 %v1715, 65535
    %v2586 = vshra.s32 %v1715, 16
    %v2587 = vcvt.s32.f32 %v2585
    %v2588 = vcvt.s32.f32 %v2586
    %2589 = vmin.xlane.f32.xlu0 %v2588
    %v2590 = vpop.xlane.xlu0 %2589
    %vm2591 = vcmp.eq.f32.partialorder %v2588, %v2590
    %v2592 = vsel %vm2591, %v2587, inf
    %2593 = vmin.xlane.f32.xlu0 %v2592
    %v2594 = vpop.xlane.xlu0 %2593
    %v2595 = vcvt.f32.s32 %v2594
    %v2596 = vcvt.f32.s32 %v2590
    %v2597 = vshll.u32 %v2596, 16
    %v2598 = vadd.s32 %v2597, %v2595
    %v2599 = vand.u32 %v1716, 65535
    %v2600 = vshra.s32 %v1716, 16
    %v2601 = vcvt.s32.f32 %v2599
    %v2602 = vcvt.s32.f32 %v2600
    %2603 = vmin.xlane.f32.xlu0 %v2602
    %v2604 = vpop.xlane.xlu0 %2603
    %vm2605 = vcmp.eq.f32.partialorder %v2602, %v2604
    %v2606 = vsel %vm2605, %v2601, inf
    %2607 = vmin.xlane.f32.xlu0 %v2606
    %v2608 = vpop.xlane.xlu0 %2607
    %v2609 = vcvt.f32.s32 %v2608
    %v2610 = vcvt.f32.s32 %v2604
    %v2611 = vshll.u32 %v2610, 16
    %v2612 = vadd.s32 %v2611, %v2609
    %vm2613 = vcmp.eq.s32.totalorder %v1588, %v1730
    %vm2614 = vcmp.eq.s32.totalorder %v1588, %v1744
    %vm2615 = vcmp.eq.s32.totalorder %v1588, %v1758
    %vm2616 = vcmp.eq.s32.totalorder %v1588, %v1772
    %vm2617 = vcmp.eq.s32.totalorder %v1588, %v1786
    %vm2618 = vcmp.eq.s32.totalorder %v1588, %v1800
    %vm2619 = vcmp.eq.s32.totalorder %v1588, %v1814
    %vm2620 = vcmp.eq.s32.totalorder %v1588, %v1828
    %vm2621 = vcmp.eq.s32.totalorder %v1588, %v1842
    %vm2622 = vcmp.eq.s32.totalorder %v1588, %v1856
    %vm2623 = vcmp.eq.s32.totalorder %v1588, %v1870
    %vm2624 = vcmp.eq.s32.totalorder %v1588, %v1884
    %vm2625 = vcmp.eq.s32.totalorder %v1588, %v1898
    %vm2626 = vcmp.eq.s32.totalorder %v1588, %v1912
    %vm2627 = vcmp.eq.s32.totalorder %v1588, %v1926
    %vm2628 = vcmp.eq.s32.totalorder %v1588, %v1940
    %vm2629 = vcmp.eq.s32.totalorder %v1588, %v1954
    %vm2630 = vcmp.eq.s32.totalorder %v1588, %v1968
    %vm2631 = vcmp.eq.s32.totalorder %v1588, %v1982
    %vm2632 = vcmp.eq.s32.totalorder %v1588, %v1996
    %vm2633 = vcmp.eq.s32.totalorder %v1588, %v2010
    %vm2634 = vcmp.eq.s32.totalorder %v1588, %v2024
    %vm2635 = vcmp.eq.s32.totalorder %v1588, %v2038
    %vm2636 = vcmp.eq.s32.totalorder %v1588, %v2052
    %vm2637 = vcmp.eq.s32.totalorder %v1588, %v2066
    %vm2638 = vcmp.eq.s32.totalorder %v1588, %v2080
    %vm2639 = vcmp.eq.s32.totalorder %v1588, %v2094
    %vm2640 = vcmp.eq.s32.totalorder %v1588, %v2108
    %vm2641 = vcmp.eq.s32.totalorder %v1588, %v2122
    %vm2642 = vcmp.eq.s32.totalorder %v1588, %v2136
    %vm2643 = vcmp.eq.s32.totalorder %v1588, %v2150
    %vm2644 = vcmp.eq.s32.totalorder %v1588, %v2164
    %vm2645 = vcmp.eq.s32.totalorder %v1588, %v2178
    %vm2646 = vcmp.eq.s32.totalorder %v1588, %v2192
    %vm2647 = vcmp.eq.s32.totalorder %v1588, %v2206
    %vm2648 = vcmp.eq.s32.totalorder %v1588, %v2220
    %vm2649 = vcmp.eq.s32.totalorder %v1588, %v2234
    %vm2650 = vcmp.eq.s32.totalorder %v1588, %v2248
    %vm2651 = vcmp.eq.s32.totalorder %v1588, %v2262
    %vm2652 = vcmp.eq.s32.totalorder %v1588, %v2276
    %vm2653 = vcmp.eq.s32.totalorder %v1588, %v2290
    %vm2654 = vcmp.eq.s32.totalorder %v1588, %v2304
    %vm2655 = vcmp.eq.s32.totalorder %v1588, %v2318
    %vm2656 = vcmp.eq.s32.totalorder %v1588, %v2332
    %vm2657 = vcmp.eq.s32.totalorder %v1588, %v2346
    %vm2658 = vcmp.eq.s32.totalorder %v1588, %v2360
    %vm2659 = vcmp.eq.s32.totalorder %v1588, %v2374
    %vm2660 = vcmp.eq.s32.totalorder %v1588, %v2388
    %vm2661 = vcmp.eq.s32.totalorder %v1588, %v2402
    %vm2662 = vcmp.eq.s32.totalorder %v1588, %v2416
    %vm2663 = vcmp.eq.s32.totalorder %v1588, %v2430
    %vm2664 = vcmp.eq.s32.totalorder %v1588, %v2444
    %vm2665 = vcmp.eq.s32.totalorder %v1588, %v2458
    %vm2666 = vcmp.eq.s32.totalorder %v1588, %v2472
    %vm2667 = vcmp.eq.s32.totalorder %v1588, %v2486
    %vm2668 = vcmp.eq.s32.totalorder %v1588, %v2500
    %vm2669 = vcmp.eq.s32.totalorder %v1588, %v2514
    %vm2670 = vcmp.eq.s32.totalorder %v1588, %v2528
    %vm2671 = vcmp.eq.s32.totalorder %v1588, %v2542
    %vm2672 = vcmp.eq.s32.totalorder %v1588, %v2556
    %vm2673 = vcmp.eq.s32.totalorder %v1588, %v2570
    %vm2674 = vcmp.eq.s32.totalorder %v1588, %v2584
    %vm2675 = vcmp.eq.s32.totalorder %v1588, %v2598
    %vm2676 = vcmp.eq.s32.totalorder %v1588, %v2612
    %v2677 = vsel %vm2613, 1, 0
    %v2678 = vsel %vm2614, 1, 0
    %v2679 = vsel %vm2615, 1, 0
    %v2680 = vsel %vm2616, 1, 0
    %v2681 = vsel %vm2617, 1, 0
    %v2682 = vsel %vm2618, 1, 0
    %v2683 = vsel %vm2619, 1, 0
    %v2684 = vsel %vm2620, 1, 0
    %v2685 = vsel %vm2621, 1, 0
    %v2686 = vsel %vm2622, 1, 0
    %v2687 = vsel %vm2623, 1, 0
    %v2688 = vsel %vm2624, 1, 0
    %v2689 = vsel %vm2625, 1, 0
    %v2690 = vsel %vm2626, 1, 0
    %v2691 = vsel %vm2627, 1, 0
    %v2692 = vsel %vm2628, 1, 0
    %v2693 = vsel %vm2629, 1, 0
    %v2694 = vsel %vm2630, 1, 0
    %v2695 = vsel %vm2631, 1, 0
    %v2696 = vsel %vm2632, 1, 0
    %v2697 = vsel %vm2633, 1, 0
    %v2698 = vsel %vm2634, 1, 0
    %v2699 = vsel %vm2635, 1, 0
    %v2700 = vsel %vm2636, 1, 0
    %v2701 = vsel %vm2637, 1, 0
    %v2702 = vsel %vm2638, 1, 0
    %v2703 = vsel %vm2639, 1, 0
    %v2704 = vsel %vm2640, 1, 0
    %v2705 = vsel %vm2641, 1, 0
    %v2706 = vsel %vm2642, 1, 0
    %v2707 = vsel %vm2643, 1, 0
    %v2708 = vsel %vm2644, 1, 0
    %v2709 = vsel %vm2645, 1, 0
    %v2710 = vsel %vm2646, 1, 0
    %v2711 = vsel %vm2647, 1, 0
    %v2712 = vsel %vm2648, 1, 0
    %v2713 = vsel %vm2649, 1, 0
    %v2714 = vsel %vm2650, 1, 0
    %v2715 = vsel %vm2651, 1, 0
    %v2716 = vsel %vm2652, 1, 0
    %v2717 = vsel %vm2653, 1, 0
    %v2718 = vsel %vm2654, 1, 0
    %v2719 = vsel %vm2655, 1, 0
    %v2720 = vsel %vm2656, 1, 0
    %v2721 = vsel %vm2657, 1, 0
    %v2722 = vsel %vm2658, 1, 0
    %v2723 = vsel %vm2659, 1, 0
    %v2724 = vsel %vm2660, 1, 0
    %v2725 = vsel %vm2661, 1, 0
    %v2726 = vsel %vm2662, 1, 0
    %v2727 = vsel %vm2663, 1, 0
    %v2728 = vsel %vm2664, 1, 0
    %v2729 = vsel %vm2665, 1, 0
    %v2730 = vsel %vm2666, 1, 0
    %v2731 = vsel %vm2667, 1, 0
    %v2732 = vsel %vm2668, 1, 0
    %v2733 = vsel %vm2669, 1, 0
    %v2734 = vsel %vm2670, 1, 0
    %v2735 = vsel %vm2671, 1, 0
    %v2736 = vsel %vm2672, 1, 0
    %v2737 = vsel %vm2673, 1, 0
    %v2738 = vsel %vm2674, 1, 0
    %v2739 = vsel %vm2675, 1, 0
    %v2740 = vsel %vm2676, 1, 0
    %v2741 = vcvt.s32.f32 %v2677
    %v2742 = vcvt.s32.f32 %v2678
    %v2743 = vcvt.s32.f32 %v2679
    %v2744 = vcvt.s32.f32 %v2680
    %v2745 = vcvt.s32.f32 %v2681
    %v2746 = vcvt.s32.f32 %v2682
    %v2747 = vcvt.s32.f32 %v2683
    %v2748 = vcvt.s32.f32 %v2684
    %v2749 = vcvt.s32.f32 %v2685
    %v2750 = vcvt.s32.f32 %v2686
    %v2751 = vcvt.s32.f32 %v2687
    %v2752 = vcvt.s32.f32 %v2688
    %v2753 = vcvt.s32.f32 %v2689
    %v2754 = vcvt.s32.f32 %v2690
    %v2755 = vcvt.s32.f32 %v2691
    %v2756 = vcvt.s32.f32 %v2692
    %v2757 = vcvt.s32.f32 %v2693
    %v2758 = vcvt.s32.f32 %v2694
    %v2759 = vcvt.s32.f32 %v2695
    %v2760 = vcvt.s32.f32 %v2696
    %v2761 = vcvt.s32.f32 %v2697
    %v2762 = vcvt.s32.f32 %v2698
    %v2763 = vcvt.s32.f32 %v2699
    %v2764 = vcvt.s32.f32 %v2700
    %v2765 = vcvt.s32.f32 %v2701
    %v2766 = vcvt.s32.f32 %v2702
    %v2767 = vcvt.s32.f32 %v2703
    %v2768 = vcvt.s32.f32 %v2704
    %v2769 = vcvt.s32.f32 %v2705
    %v2770 = vcvt.s32.f32 %v2706
    %v2771 = vcvt.s32.f32 %v2707
    %v2772 = vcvt.s32.f32 %v2708
    %v2773 = vcvt.s32.f32 %v2709
    %v2774 = vcvt.s32.f32 %v2710
    %v2775 = vcvt.s32.f32 %v2711
    %v2776 = vcvt.s32.f32 %v2712
    %v2777 = vcvt.s32.f32 %v2713
    %v2778 = vcvt.s32.f32 %v2714
    %v2779 = vcvt.s32.f32 %v2715
    %v2780 = vcvt.s32.f32 %v2716
    %v2781 = vcvt.s32.f32 %v2717
    %v2782 = vcvt.s32.f32 %v2718
    %v2783 = vcvt.s32.f32 %v2719
    %v2784 = vcvt.s32.f32 %v2720
    %v2785 = vcvt.s32.f32 %v2721
    %v2786 = vcvt.s32.f32 %v2722
    %v2787 = vcvt.s32.f32 %v2723
    %v2788 = vcvt.s32.f32 %v2724
    %v2789 = vcvt.s32.f32 %v2725
    %v2790 = vcvt.s32.f32 %v2726
    %v2791 = vcvt.s32.f32 %v2727
    %v2792 = vcvt.s32.f32 %v2728
    %v2793 = vcvt.s32.f32 %v2729
    %v2794 = vcvt.s32.f32 %v2730
    %v2795 = vcvt.s32.f32 %v2731
    %v2796 = vcvt.s32.f32 %v2732
    %v2797 = vcvt.s32.f32 %v2733
    %v2798 = vcvt.s32.f32 %v2734
    %v2799 = vcvt.s32.f32 %v2735
    %v2800 = vcvt.s32.f32 %v2736
    %v2801 = vcvt.s32.f32 %v2737
    %v2802 = vcvt.s32.f32 %v2738
    %v2803 = vcvt.s32.f32 %v2739
    %v2804 = vcvt.s32.f32 %v2740
    %v2805 = vld [vmem:[%s5] sm:$0xff]
    %v2806 = vld [vmem:[%s5 + $0x8] sm:$0xff]
    %v2807 = vld [vmem:[%s5 + $0x10] sm:$0xff]
    %v2808 = vld [vmem:[%s5 + $0x18] sm:$0xff]
    %v2809 = vld [vmem:[%s5 + $0x20] sm:$0xff]
    %v2810 = vld [vmem:[%s5 + $0x28] sm:$0xff]
    %v2811 = vld [vmem:[%s5 + $0x30] sm:$0xff]
    %v2812 = vld [vmem:[%s5 + $0x38] sm:$0xff]
    %v2813 = vld [vmem:[%s5 + $0x40] sm:$0xff]
    %v2814 = vld [vmem:[%s5 + $0x48] sm:$0xff]
    %v2815 = vld [vmem:[%s5 + $0x50] sm:$0xff]
    %v2816 = vld [vmem:[%s5 + $0x58] sm:$0xff]
    %v2817 = vld [vmem:[%s5 + $0x60] sm:$0xff]
    %v2818 = vld [vmem:[%s5 + $0x68] sm:$0xff]
    %v2819 = vld [vmem:[%s5 + $0x70] sm:$0xff]
    %v2820 = vld [vmem:[%s5 + $0x78] sm:$0xff]
    %v2821 = vld [vmem:[%s6] sm:$0x1]
    %v2823 = vlaneseq
    %v2824 = vshrl.u32 %v2823, 7
    %v2825 = vsub.s32 0, %v2824
    %v2826 = vrot.slane %v2821, %v2825
    %2828 = vmatprep.subr.mxu0 0.0
    %2829 = vmatpush1.msra.mxu0 %v2820
    %2830 = vmatprep.subr.mxu0 0.0
    %2831 = vmatpush1.msra.mxu0 %v2819
    %2832 = vmatprep.subr.mxu0 0.0
    %2833 = vmatpush1.msra.mxu0 %v2818
    %2834 = vmatprep.subr.mxu0 0.0
    %2835 = vmatpush1.msra.mxu0 %v2817
    %2836 = vmatprep.subr.mxu0 0.0
    %2837 = vmatpush1.msra.mxu0 %v2816
    %2838 = vmatprep.subr.mxu0 0.0
    %2839 = vmatpush1.msra.mxu0 %v2815
    %2840 = vmatprep.subr.mxu0 0.0
    %2841 = vmatpush1.msra.mxu0 %v2814
    %2842 = vmatprep.subr.mxu0 0.0
    %2843 = vmatpush1.msra.mxu0 %v2813
    %2844 = vmatprep.subr.mxu0 0.0
    %2845 = vmatpush1.msra.mxu0 %v2812
    %2846 = vmatprep.subr.mxu0 0.0
    %2847 = vmatpush1.msra.mxu0 %v2811
    %2848 = vmatprep.subr.mxu0 0.0
    %2849 = vmatpush1.msra.mxu0 %v2810
    %2850 = vmatprep.subr.mxu0 0.0
    %2851 = vmatpush1.msra.mxu0 %v2809
    %2852 = vmatprep.subr.mxu0 0.0
    %2853 = vmatpush1.msra.mxu0 %v2808
    %2854 = vmatprep.subr.mxu0 0.0
    %2855 = vmatpush1.msra.mxu0 %v2807
    %2856 = vmatprep.subr.mxu0 0.0
    %2857 = vmatpush1.msra.mxu0 %v2806
    %2858 = vmatprep.subr.mxu0 0.0
    %2859 = vmatpush1.msra.mxu0 %v2805
    %2860 = vmatprep.subr.mxu0 0.0
    %2861 = vmatpush2.msra.mxu0 0.0
    %2862 = vmatprep.subr.mxu0 0.0
    %2863 = vmatpush2.msra.mxu0 0.0
    %2864 = vmatprep.subr.mxu0 0.0
    %2865 = vmatpush2.msra.mxu0 0.0
    %2866 = vmatprep.subr.mxu0 0.0
    %2867 = vmatpush2.msra.mxu0 0.0
    %2868 = vmatprep.subr.mxu0 0.0
    %2869 = vmatpush2.msra.mxu0 0.0
    %2870 = vmatprep.subr.mxu0 0.0
    %2871 = vmatpush2.msra.mxu0 0.0
    %2872 = vmatprep.subr.mxu0 0.0
    %2873 = vmatpush2.msra.mxu0 0.0
    %2874 = vmatprep.subr.mxu0 0.0
    %2875 = vmatpush2.msra.mxu0 0.0
    %2876 = vmatprep.subr.mxu0 0.0
    %2877 = vmatpush2.msra.mxu0 0.0
    %2878 = vmatprep.subr.mxu0 0.0
    %2879 = vmatpush2.msra.mxu0 0.0
    %2880 = vmatprep.subr.mxu0 0.0
    %2881 = vmatpush2.msra.mxu0 0.0
    %2882 = vmatprep.subr.mxu0 0.0
    %2883 = vmatpush2.msra.mxu0 0.0
    %2884 = vmatprep.subr.mxu0 0.0
    %2885 = vmatpush2.msra.mxu0 0.0
    %2886 = vmatprep.subr.mxu0 0.0
    %2887 = vmatpush2.msra.mxu0 0.0
    %2888 = vmatprep.subr.mxu0 0.0
    %2889 = vmatpush2.msra.mxu0 0.0
    %2890 = vmatprep.subr.mxu0 0.0
    %2891 = vmatpush2.msra.mxu0 0.0
    %2892 = vmatprep.mubr.f32.mxu0 0.0
    %2893 = vmatmul.mubr.f32.gmra.mxu0 %v2741
    %v2894 = vpop.f32.mrf.mxu0
    %v2895 = vadd.f32 %v2826, %v2894
    %v2896 = vpop.f32.mrf.mxu0
    %2897 = vmatprep.mubr.f32.mxu0 0.0
    %2898 = vmatmul.mubr.f32.gmra.mxu0 %v2742
    %v2899 = vpop.f32.mrf.mxu0
    %v2900 = vadd.f32 %v2826, %v2899
    %v2901 = vpop.f32.mrf.mxu0
    %2902 = vmatprep.mubr.f32.mxu0 0.0
    %2903 = vmatmul.mubr.f32.gmra.mxu0 %v2743
    %v2904 = vpop.f32.mrf.mxu0
    %v2905 = vadd.f32 %v2826, %v2904
    %v2906 = vpop.f32.mrf.mxu0
    %2907 = vmatprep.mubr.f32.mxu0 0.0
    %2908 = vmatmul.mubr.f32.gmra.mxu0 %v2744
    %v2909 = vpop.f32.mrf.mxu0
    %v2910 = vadd.f32 %v2826, %v2909
    %v2911 = vpop.f32.mrf.mxu0
    %2912 = vmatprep.mubr.f32.mxu0 0.0
    %2913 = vmatmul.mubr.f32.gmra.mxu0 %v2745
    %v2914 = vpop.f32.mrf.mxu0
    %v2915 = vadd.f32 %v2826, %v2914
    %v2916 = vpop.f32.mrf.mxu0
    %2917 = vmatprep.mubr.f32.mxu0 0.0
    %2918 = vmatmul.mubr.f32.gmra.mxu0 %v2746
    %v2919 = vpop.f32.mrf.mxu0
    %v2920 = vadd.f32 %v2826, %v2919
    %v2921 = vpop.f32.mrf.mxu0
    %2922 = vmatprep.mubr.f32.mxu0 0.0
    %2923 = vmatmul.mubr.f32.gmra.mxu0 %v2747
    %v2924 = vpop.f32.mrf.mxu0
    %v2925 = vadd.f32 %v2826, %v2924
    %v2926 = vpop.f32.mrf.mxu0
    %2927 = vmatprep.mubr.f32.mxu0 0.0
    %2928 = vmatmul.mubr.f32.gmra.mxu0 %v2748
    %v2929 = vpop.f32.mrf.mxu0
    %v2930 = vadd.f32 %v2826, %v2929
    %v2931 = vpop.f32.mrf.mxu0
    %2932 = vmatprep.mubr.f32.mxu0 0.0
    %2933 = vmatmul.mubr.f32.gmra.mxu0 %v2749
    %v2934 = vpop.f32.mrf.mxu0
    %v2935 = vadd.f32 %v2826, %v2934
    %v2936 = vpop.f32.mrf.mxu0
    %2937 = vmatprep.mubr.f32.mxu0 0.0
    %2938 = vmatmul.mubr.f32.gmra.mxu0 %v2750
    %v2939 = vpop.f32.mrf.mxu0
    %v2940 = vadd.f32 %v2826, %v2939
    %v2941 = vpop.f32.mrf.mxu0
    %2942 = vmatprep.mubr.f32.mxu0 0.0
    %2943 = vmatmul.mubr.f32.gmra.mxu0 %v2751
    %v2944 = vpop.f32.mrf.mxu0
    %v2945 = vadd.f32 %v2826, %v2944
    %v2946 = vpop.f32.mrf.mxu0
    %2947 = vmatprep.mubr.f32.mxu0 0.0
    %2948 = vmatmul.mubr.f32.gmra.mxu0 %v2752
    %v2949 = vpop.f32.mrf.mxu0
    %v2950 = vadd.f32 %v2826, %v2949
    %v2951 = vpop.f32.mrf.mxu0
    %2952 = vmatprep.mubr.f32.mxu0 0.0
    %2953 = vmatmul.mubr.f32.gmra.mxu0 %v2753
    %v2954 = vpop.f32.mrf.mxu0
    %v2955 = vadd.f32 %v2826, %v2954
    %v2956 = vpop.f32.mrf.mxu0
    %2957 = vmatprep.mubr.f32.mxu0 0.0
    %2958 = vmatmul.mubr.f32.gmra.mxu0 %v2754
    %v2959 = vpop.f32.mrf.mxu0
    %v2960 = vadd.f32 %v2826, %v2959
    %v2961 = vpop.f32.mrf.mxu0
    %2962 = vmatprep.mubr.f32.mxu0 0.0
    %2963 = vmatmul.mubr.f32.gmra.mxu0 %v2755
    %v2964 = vpop.f32.mrf.mxu0
    %v2965 = vadd.f32 %v2826, %v2964
    %v2966 = vpop.f32.mrf.mxu0
    %2967 = vmatprep.mubr.f32.mxu0 0.0
    %2968 = vmatmul.mubr.f32.gmra.mxu0 %v2756
    %v2969 = vpop.f32.mrf.mxu0
    %v2970 = vadd.f32 %v2826, %v2969
    %v2971 = vpop.f32.mrf.mxu0
    %2972 = vmatprep.mubr.f32.mxu0 0.0
    %2973 = vmatmul.mubr.f32.gmra.mxu0 %v2757
    %v2974 = vpop.f32.mrf.mxu0
    %v2975 = vadd.f32 %v2826, %v2974
    %v2976 = vpop.f32.mrf.mxu0
    %2977 = vmatprep.mubr.f32.mxu0 0.0
    %2978 = vmatmul.mubr.f32.gmra.mxu0 %v2758
    %v2979 = vpop.f32.mrf.mxu0
    %v2980 = vadd.f32 %v2826, %v2979
    %v2981 = vpop.f32.mrf.mxu0
    %2982 = vmatprep.mubr.f32.mxu0 0.0
    %2983 = vmatmul.mubr.f32.gmra.mxu0 %v2759
    %v2984 = vpop.f32.mrf.mxu0
    %v2985 = vadd.f32 %v2826, %v2984
    %v2986 = vpop.f32.mrf.mxu0
    %2987 = vmatprep.mubr.f32.mxu0 0.0
    %2988 = vmatmul.mubr.f32.gmra.mxu0 %v2760
    %v2989 = vpop.f32.mrf.mxu0
    %v2990 = vadd.f32 %v2826, %v2989
    %v2991 = vpop.f32.mrf.mxu0
    %2992 = vmatprep.mubr.f32.mxu0 0.0
    %2993 = vmatmul.mubr.f32.gmra.mxu0 %v2761
    %v2994 = vpop.f32.mrf.mxu0
    %v2995 = vadd.f32 %v2826, %v2994
    %v2996 = vpop.f32.mrf.mxu0
    %2997 = vmatprep.mubr.f32.mxu0 0.0
    %2998 = vmatmul.mubr.f32.gmra.mxu0 %v2762
    %v2999 = vpop.f32.mrf.mxu0
    %v3000 = vadd.f32 %v2826, %v2999
    %v3001 = vpop.f32.mrf.mxu0
    %3002 = vmatprep.mubr.f32.mxu0 0.0
    %3003 = vmatmul.mubr.f32.gmra.mxu0 %v2763
    %v3004 = vpop.f32.mrf.mxu0
    %v3005 = vadd.f32 %v2826, %v3004
    %v3006 = vpop.f32.mrf.mxu0
    %3007 = vmatprep.mubr.f32.mxu0 0.0
    %3008 = vmatmul.mubr.f32.gmra.mxu0 %v2764
    %v3009 = vpop.f32.mrf.mxu0
    %v3010 = vadd.f32 %v2826, %v3009
    %v3011 = vpop.f32.mrf.mxu0
    %3012 = vmatprep.mubr.f32.mxu0 0.0
    %3013 = vmatmul.mubr.f32.gmra.mxu0 %v2765
    %v3014 = vpop.f32.mrf.mxu0
    %v3015 = vadd.f32 %v2826, %v3014
    %v3016 = vpop.f32.mrf.mxu0
    %3017 = vmatprep.mubr.f32.mxu0 0.0
    %3018 = vmatmul.mubr.f32.gmra.mxu0 %v2766
    %v3019 = vpop.f32.mrf.mxu0
    %v3020 = vadd.f32 %v2826, %v3019
    %v3021 = vpop.f32.mrf.mxu0
    %3022 = vmatprep.mubr.f32.mxu0 0.0
    %3023 = vmatmul.mubr.f32.gmra.mxu0 %v2767
    %v3024 = vpop.f32.mrf.mxu0
    %v3025 = vadd.f32 %v2826, %v3024
    %v3026 = vpop.f32.mrf.mxu0
    %3027 = vmatprep.mubr.f32.mxu0 0.0
    %3028 = vmatmul.mubr.f32.gmra.mxu0 %v2768
    %v3029 = vpop.f32.mrf.mxu0
    %v3030 = vadd.f32 %v2826, %v3029
    %v3031 = vpop.f32.mrf.mxu0
    %3032 = vmatprep.mubr.f32.mxu0 0.0
    %3033 = vmatmul.mubr.f32.gmra.mxu0 %v2769
    %v3034 = vpop.f32.mrf.mxu0
    %v3035 = vadd.f32 %v2826, %v3034
    %v3036 = vpop.f32.mrf.mxu0
    %3037 = vmatprep.mubr.f32.mxu0 0.0
    %3038 = vmatmul.mubr.f32.gmra.mxu0 %v2770
    %v3039 = vpop.f32.mrf.mxu0
    %v3040 = vadd.f32 %v2826, %v3039
    %v3041 = vpop.f32.mrf.mxu0
    %3042 = vmatprep.mubr.f32.mxu0 0.0
    %3043 = vmatmul.mubr.f32.gmra.mxu0 %v2771
    %v3044 = vpop.f32.mrf.mxu0
    %v3045 = vadd.f32 %v2826, %v3044
    %v3046 = vpop.f32.mrf.mxu0
    %3047 = vmatprep.mubr.f32.mxu0 0.0
    %3048 = vmatmul.mubr.f32.gmra.mxu0 %v2772
    %v3049 = vpop.f32.mrf.mxu0
    %v3050 = vadd.f32 %v2826, %v3049
    %v3051 = vpop.f32.mrf.mxu0
    %3052 = vmatprep.mubr.f32.mxu0 0.0
    %3053 = vmatmul.mubr.f32.gmra.mxu0 %v2773
    %v3054 = vpop.f32.mrf.mxu0
    %v3055 = vadd.f32 %v2826, %v3054
    %v3056 = vpop.f32.mrf.mxu0
    %3057 = vmatprep.mubr.f32.mxu0 0.0
    %3058 = vmatmul.mubr.f32.gmra.mxu0 %v2774
    %v3059 = vpop.f32.mrf.mxu0
    %v3060 = vadd.f32 %v2826, %v3059
    %v3061 = vpop.f32.mrf.mxu0
    %3062 = vmatprep.mubr.f32.mxu0 0.0
    %3063 = vmatmul.mubr.f32.gmra.mxu0 %v2775
    %v3064 = vpop.f32.mrf.mxu0
    %v3065 = vadd.f32 %v2826, %v3064
    %v3066 = vpop.f32.mrf.mxu0
    %3067 = vmatprep.mubr.f32.mxu0 0.0
    %3068 = vmatmul.mubr.f32.gmra.mxu0 %v2776
    %v3069 = vpop.f32.mrf.mxu0
    %v3070 = vadd.f32 %v2826, %v3069
    %v3071 = vpop.f32.mrf.mxu0
    %3072 = vmatprep.mubr.f32.mxu0 0.0
    %3073 = vmatmul.mubr.f32.gmra.mxu0 %v2777
    %v3074 = vpop.f32.mrf.mxu0
    %v3075 = vadd.f32 %v2826, %v3074
    %v3076 = vpop.f32.mrf.mxu0
    %3077 = vmatprep.mubr.f32.mxu0 0.0
    %3078 = vmatmul.mubr.f32.gmra.mxu0 %v2778
    %v3079 = vpop.f32.mrf.mxu0
    %v3080 = vadd.f32 %v2826, %v3079
    %v3081 = vpop.f32.mrf.mxu0
    %3082 = vmatprep.mubr.f32.mxu0 0.0
    %3083 = vmatmul.mubr.f32.gmra.mxu0 %v2779
    %v3084 = vpop.f32.mrf.mxu0
    %v3085 = vadd.f32 %v2826, %v3084
    %v3086 = vpop.f32.mrf.mxu0
    %3087 = vmatprep.mubr.f32.mxu0 0.0
    %3088 = vmatmul.mubr.f32.gmra.mxu0 %v2780
    %v3089 = vpop.f32.mrf.mxu0
    %v3090 = vadd.f32 %v2826, %v3089
    %v3091 = vpop.f32.mrf.mxu0
    %3092 = vmatprep.mubr.f32.mxu0 0.0
    %3093 = vmatmul.mubr.f32.gmra.mxu0 %v2781
    %v3094 = vpop.f32.mrf.mxu0
    %v3095 = vadd.f32 %v2826, %v3094
    %v3096 = vpop.f32.mrf.mxu0
    %3097 = vmatprep.mubr.f32.mxu0 0.0
    %3098 = vmatmul.mubr.f32.gmra.mxu0 %v2782
    %v3099 = vpop.f32.mrf.mxu0
    %v3100 = vadd.f32 %v2826, %v3099
    %v3101 = vpop.f32.mrf.mxu0
    %3102 = vmatprep.mubr.f32.mxu0 0.0
    %3103 = vmatmul.mubr.f32.gmra.mxu0 %v2783
    %v3104 = vpop.f32.mrf.mxu0
    %v3105 = vadd.f32 %v2826, %v3104
    %v3106 = vpop.f32.mrf.mxu0
    %3107 = vmatprep.mubr.f32.mxu0 0.0
    %3108 = vmatmul.mubr.f32.gmra.mxu0 %v2784
    %v3109 = vpop.f32.mrf.mxu0
    %v3110 = vadd.f32 %v2826, %v3109
    %v3111 = vpop.f32.mrf.mxu0
    %3112 = vmatprep.mubr.f32.mxu0 0.0
    %3113 = vmatmul.mubr.f32.gmra.mxu0 %v2785
    %v3114 = vpop.f32.mrf.mxu0
    %v3115 = vadd.f32 %v2826, %v3114
    %v3116 = vpop.f32.mrf.mxu0
    %3117 = vmatprep.mubr.f32.mxu0 0.0
    %3118 = vmatmul.mubr.f32.gmra.mxu0 %v2786
    %v3119 = vpop.f32.mrf.mxu0
    %v3120 = vadd.f32 %v2826, %v3119
    %v3121 = vpop.f32.mrf.mxu0
    %3122 = vmatprep.mubr.f32.mxu0 0.0
    %3123 = vmatmul.mubr.f32.gmra.mxu0 %v2787
    %v3124 = vpop.f32.mrf.mxu0
    %v3125 = vadd.f32 %v2826, %v3124
    %v3126 = vpop.f32.mrf.mxu0
    %3127 = vmatprep.mubr.f32.mxu0 0.0
    %3128 = vmatmul.mubr.f32.gmra.mxu0 %v2788
    %v3129 = vpop.f32.mrf.mxu0
    %v3130 = vadd.f32 %v2826, %v3129
    %v3131 = vpop.f32.mrf.mxu0
    %3132 = vmatprep.mubr.f32.mxu0 0.0
    %3133 = vmatmul.mubr.f32.gmra.mxu0 %v2789
    %v3134 = vpop.f32.mrf.mxu0
    %v3135 = vadd.f32 %v2826, %v3134
    %v3136 = vpop.f32.mrf.mxu0
    %3137 = vmatprep.mubr.f32.mxu0 0.0
    %3138 = vmatmul.mubr.f32.gmra.mxu0 %v2790
    %v3139 = vpop.f32.mrf.mxu0
    %v3140 = vadd.f32 %v2826, %v3139
    %v3141 = vpop.f32.mrf.mxu0
    %3142 = vmatprep.mubr.f32.mxu0 0.0
    %3143 = vmatmul.mubr.f32.gmra.mxu0 %v2791
    %v3144 = vpop.f32.mrf.mxu0
    %v3145 = vadd.f32 %v2826, %v3144
    %v3146 = vpop.f32.mrf.mxu0
    %3147 = vmatprep.mubr.f32.mxu0 0.0
    %3148 = vmatmul.mubr.f32.gmra.mxu0 %v2792
    %v3149 = vpop.f32.mrf.mxu0
    %v3150 = vadd.f32 %v2826, %v3149
    %v3151 = vpop.f32.mrf.mxu0
    %3152 = vmatprep.mubr.f32.mxu0 0.0
    %3153 = vmatmul.mubr.f32.gmra.mxu0 %v2793
    %v3154 = vpop.f32.mrf.mxu0
    %v3155 = vadd.f32 %v2826, %v3154
    %v3156 = vpop.f32.mrf.mxu0
    %3157 = vmatprep.mubr.f32.mxu0 0.0
    %3158 = vmatmul.mubr.f32.gmra.mxu0 %v2794
    %v3159 = vpop.f32.mrf.mxu0
    %v3160 = vadd.f32 %v2826, %v3159
    %v3161 = vpop.f32.mrf.mxu0
    %3162 = vmatprep.mubr.f32.mxu0 0.0
    %3163 = vmatmul.mubr.f32.gmra.mxu0 %v2795
    %v3164 = vpop.f32.mrf.mxu0
    %v3165 = vadd.f32 %v2826, %v3164
    %v3166 = vpop.f32.mrf.mxu0
    %3167 = vmatprep.mubr.f32.mxu0 0.0
    %3168 = vmatmul.mubr.f32.gmra.mxu0 %v2796
    %v3169 = vpop.f32.mrf.mxu0
    %v3170 = vadd.f32 %v2826, %v3169
    %v3171 = vpop.f32.mrf.mxu0
    %3172 = vmatprep.mubr.f32.mxu0 0.0
    %3173 = vmatmul.mubr.f32.gmra.mxu0 %v2797
    %v3174 = vpop.f32.mrf.mxu0
    %v3175 = vadd.f32 %v2826, %v3174
    %v3176 = vpop.f32.mrf.mxu0
    %3177 = vmatprep.mubr.f32.mxu0 0.0
    %3178 = vmatmul.mubr.f32.gmra.mxu0 %v2798
    %v3179 = vpop.f32.mrf.mxu0
    %v3180 = vadd.f32 %v2826, %v3179
    %v3181 = vpop.f32.mrf.mxu0
    %3182 = vmatprep.mubr.f32.mxu0 0.0
    %3183 = vmatmul.mubr.f32.gmra.mxu0 %v2799
    %v3184 = vpop.f32.mrf.mxu0
    %v3185 = vadd.f32 %v2826, %v3184
    %v3186 = vpop.f32.mrf.mxu0
    %3187 = vmatprep.mubr.f32.mxu0 0.0
    %3188 = vmatmul.mubr.f32.gmra.mxu0 %v2800
    %v3189 = vpop.f32.mrf.mxu0
    %v3190 = vadd.f32 %v2826, %v3189
    %v3191 = vpop.f32.mrf.mxu0
    %3192 = vmatprep.mubr.f32.mxu0 0.0
    %3193 = vmatmul.mubr.f32.gmra.mxu0 %v2801
    %v3194 = vpop.f32.mrf.mxu0
    %v3195 = vadd.f32 %v2826, %v3194
    %v3196 = vpop.f32.mrf.mxu0
    %3197 = vmatprep.mubr.f32.mxu0 0.0
    %3198 = vmatmul.mubr.f32.gmra.mxu0 %v2802
    %v3199 = vpop.f32.mrf.mxu0
    %v3200 = vadd.f32 %v2826, %v3199
    %v3201 = vpop.f32.mrf.mxu0
    %3202 = vmatprep.mubr.f32.mxu0 0.0
    %3203 = vmatmul.mubr.f32.gmra.mxu0 %v2803
    %v3204 = vpop.f32.mrf.mxu0
    %v3205 = vadd.f32 %v2826, %v3204
    %v3206 = vpop.f32.mrf.mxu0
    %3207 = vmatprep.mubr.f32.mxu0 0.0
    %3208 = vmatmul.mubr.f32.gmra.mxu0 %v2804
    %v3209 = vpop.f32.mrf.mxu0
    %v3210 = vadd.f32 %v2826, %v3209
    %v3211 = vpop.f32.mrf.mxu0
    %3212 = vdwg.mxu0
    %3213 = vst.msk [vmem:[%s7] sm:$0xff] %vm104, %v2895
    %3214 = vst.msk [vmem:[%s7 + $0x8] sm:$0xff] %vm104, %v2900
    %3215 = vst.msk [vmem:[%s7 + $0x10] sm:$0xff] %vm104, %v2905
    %3216 = vst.msk [vmem:[%s7 + $0x18] sm:$0xff] %vm104, %v2910
    %3217 = vst.msk [vmem:[%s7 + $0x20] sm:$0xff] %vm104, %v2915
    %3218 = vst.msk [vmem:[%s7 + $0x28] sm:$0xff] %vm104, %v2920
    %3219 = vst.msk [vmem:[%s7 + $0x30] sm:$0xff] %vm104, %v2925
    %3220 = vst.msk [vmem:[%s7 + $0x38] sm:$0xff] %vm104, %v2930
    %3221 = vst.msk [vmem:[%s7 + $0x40] sm:$0xff] %vm104, %v2935
    %3222 = vst.msk [vmem:[%s7 + $0x48] sm:$0xff] %vm104, %v2940
    %3223 = vst.msk [vmem:[%s7 + $0x50] sm:$0xff] %vm104, %v2945
    %3224 = vst.msk [vmem:[%s7 + $0x58] sm:$0xff] %vm104, %v2950
    %3225 = vst.msk [vmem:[%s7 + $0x60] sm:$0xff] %vm104, %v2955
    %3226 = vst.msk [vmem:[%s7 + $0x68] sm:$0xff] %vm104, %v2960
    %3227 = vst.msk [vmem:[%s7 + $0x70] sm:$0xff] %vm104, %v2965
    %3228 = vst.msk [vmem:[%s7 + $0x78] sm:$0xff] %vm104, %v2970
    %3229 = vst.msk [vmem:[%s7 + $0x80] sm:$0xff] %vm104, %v2975
    %3230 = vst.msk [vmem:[%s7 + $0x88] sm:$0xff] %vm104, %v2980
    %3231 = vst.msk [vmem:[%s7 + $0x90] sm:$0xff] %vm104, %v2985
    %3232 = vst.msk [vmem:[%s7 + $0x98] sm:$0xff] %vm104, %v2990
    %3233 = vst.msk [vmem:[%s7 + $0xa0] sm:$0xff] %vm104, %v2995
    %3234 = vst.msk [vmem:[%s7 + $0xa8] sm:$0xff] %vm104, %v3000
    %3235 = vst.msk [vmem:[%s7 + $0xb0] sm:$0xff] %vm104, %v3005
    %3236 = vst.msk [vmem:[%s7 + $0xb8] sm:$0xff] %vm104, %v3010
    %3237 = vst.msk [vmem:[%s7 + $0xc0] sm:$0xff] %vm104, %v3015
    %3238 = vst.msk [vmem:[%s7 + $0xc8] sm:$0xff] %vm104, %v3020
    %3239 = vst.msk [vmem:[%s7 + $0xd0] sm:$0xff] %vm104, %v3025
    %3240 = vst.msk [vmem:[%s7 + $0xd8] sm:$0xff] %vm104, %v3030
    %3241 = vst.msk [vmem:[%s7 + $0xe0] sm:$0xff] %vm104, %v3035
    %3242 = vst.msk [vmem:[%s7 + $0xe8] sm:$0xff] %vm104, %v3040
    %3243 = vst.msk [vmem:[%s7 + $0xf0] sm:$0xff] %vm104, %v3045
    %3244 = vst.msk [vmem:[%s7 + $0xf8] sm:$0xff] %vm104, %v3050
    %3245 = vst.msk [vmem:[%s7 + $0x100] sm:$0xff] %vm104, %v3055
    %3246 = vst.msk [vmem:[%s7 + $0x108] sm:$0xff] %vm104, %v3060
    %3247 = vst.msk [vmem:[%s7 + $0x110] sm:$0xff] %vm104, %v3065
    %3248 = vst.msk [vmem:[%s7 + $0x118] sm:$0xff] %vm104, %v3070
    %3249 = vst.msk [vmem:[%s7 + $0x120] sm:$0xff] %vm104, %v3075
    %3250 = vst.msk [vmem:[%s7 + $0x128] sm:$0xff] %vm104, %v3080
    %3251 = vst.msk [vmem:[%s7 + $0x130] sm:$0xff] %vm104, %v3085
    %3252 = vst.msk [vmem:[%s7 + $0x138] sm:$0xff] %vm104, %v3090
    %3253 = vst.msk [vmem:[%s7 + $0x140] sm:$0xff] %vm104, %v3095
    %3254 = vst.msk [vmem:[%s7 + $0x148] sm:$0xff] %vm104, %v3100
    %3255 = vst.msk [vmem:[%s7 + $0x150] sm:$0xff] %vm104, %v3105
    %3256 = vst.msk [vmem:[%s7 + $0x158] sm:$0xff] %vm104, %v3110
    %3257 = vst.msk [vmem:[%s7 + $0x160] sm:$0xff] %vm104, %v3115
    %3258 = vst.msk [vmem:[%s7 + $0x168] sm:$0xff] %vm104, %v3120
    %3259 = vst.msk [vmem:[%s7 + $0x170] sm:$0xff] %vm104, %v3125
    %3260 = vst.msk [vmem:[%s7 + $0x178] sm:$0xff] %vm104, %v3130
    %3261 = vst.msk [vmem:[%s7 + $0x180] sm:$0xff] %vm104, %v3135
    %3262 = vst.msk [vmem:[%s7 + $0x188] sm:$0xff] %vm104, %v3140
    %3263 = vst.msk [vmem:[%s7 + $0x190] sm:$0xff] %vm104, %v3145
    %3264 = vst.msk [vmem:[%s7 + $0x198] sm:$0xff] %vm104, %v3150
    %3265 = vst.msk [vmem:[%s7 + $0x1a0] sm:$0xff] %vm104, %v3155
    %3266 = vst.msk [vmem:[%s7 + $0x1a8] sm:$0xff] %vm104, %v3160
    %3267 = vst.msk [vmem:[%s7 + $0x1b0] sm:$0xff] %vm104, %v3165
    %3268 = vst.msk [vmem:[%s7 + $0x1b8] sm:$0xff] %vm104, %v3170
    %3269 = vst.msk [vmem:[%s7 + $0x1c0] sm:$0xff] %vm104, %v3175
    %3270 = vst.msk [vmem:[%s7 + $0x1c8] sm:$0xff] %vm104, %v3180
    %3271 = vst.msk [vmem:[%s7 + $0x1d0] sm:$0xff] %vm104, %v3185
    %3272 = vst.msk [vmem:[%s7 + $0x1d8] sm:$0xff] %vm104, %v3190
    %3273 = vst.msk [vmem:[%s7 + $0x1e0] sm:$0xff] %vm104, %v3195
    %3274 = vst.msk [vmem:[%s7 + $0x1e8] sm:$0xff] %vm104, %v3200
    %3275 = vst.msk [vmem:[%s7 + $0x1f0] sm:$0xff] %vm104, %v3205
    %3276 = vst.msk [vmem:[%s7 + $0x1f8] sm:$0xff] %vm104, %v3210
    %v3277 = vmul.f32 %v364, %v364
    %v3278 = vmul.f32 %v369, %v369
    %v3279 = vmul.f32 %v374, %v374
    %v3280 = vmul.f32 %v379, %v379
    %v3281 = vmul.f32 %v384, %v384
    %v3282 = vmul.f32 %v389, %v389
    %v3283 = vmul.f32 %v394, %v394
    %v3284 = vmul.f32 %v399, %v399
    %v3285 = vmul.f32 %v404, %v404
    %v3286 = vmul.f32 %v409, %v409
    %v3287 = vmul.f32 %v414, %v414
    %v3288 = vmul.f32 %v419, %v419
    %v3289 = vmul.f32 %v424, %v424
    %v3290 = vmul.f32 %v429, %v429
    %v3291 = vmul.f32 %v434, %v434
    %v3292 = vmul.f32 %v439, %v439
    %v3293 = vmul.f32 %v444, %v444
    %v3294 = vmul.f32 %v449, %v449
    %v3295 = vmul.f32 %v454, %v454
    %v3296 = vmul.f32 %v459, %v459
    %v3297 = vmul.f32 %v464, %v464
    %v3298 = vmul.f32 %v469, %v469
    %v3299 = vmul.f32 %v474, %v474
    %v3300 = vmul.f32 %v479, %v479
    %v3301 = vmul.f32 %v484, %v484
    %v3302 = vmul.f32 %v489, %v489
    %v3303 = vmul.f32 %v494, %v494
    %v3304 = vmul.f32 %v499, %v499
    %v3305 = vmul.f32 %v504, %v504
    %v3306 = vmul.f32 %v509, %v509
    %v3307 = vmul.f32 %v514, %v514
    %v3308 = vmul.f32 %v519, %v519
    %v3309 = vmul.f32 %v524, %v524
    %v3310 = vmul.f32 %v529, %v529
    %v3311 = vmul.f32 %v534, %v534
    %v3312 = vmul.f32 %v539, %v539
    %v3313 = vmul.f32 %v544, %v544
    %v3314 = vmul.f32 %v549, %v549
    %v3315 = vmul.f32 %v554, %v554
    %v3316 = vmul.f32 %v559, %v559
    %v3317 = vmul.f32 %v564, %v564
    %v3318 = vmul.f32 %v569, %v569
    %v3319 = vmul.f32 %v574, %v574
    %v3320 = vmul.f32 %v579, %v579
    %v3321 = vmul.f32 %v584, %v584
    %v3322 = vmul.f32 %v589, %v589
    %v3323 = vmul.f32 %v594, %v594
    %v3324 = vmul.f32 %v599, %v599
    %v3325 = vmul.f32 %v604, %v604
    %v3326 = vmul.f32 %v609, %v609
    %v3327 = vmul.f32 %v614, %v614
    %v3328 = vmul.f32 %v619, %v619
    %v3329 = vmul.f32 %v624, %v624
    %v3330 = vmul.f32 %v629, %v629
    %v3331 = vmul.f32 %v634, %v634
    %v3332 = vmul.f32 %v639, %v639
    %v3333 = vmul.f32 %v644, %v644
    %v3334 = vmul.f32 %v649, %v649
    %v3335 = vmul.f32 %v654, %v654
    %v3336 = vmul.f32 %v659, %v659
    %v3337 = vmul.f32 %v664, %v664
    %v3338 = vmul.f32 %v669, %v669
    %v3339 = vmul.f32 %v674, %v674
    %v3340 = vmul.f32 %v679, %v679
    %v3341 = vsel %vm698, %v3277, 0.0
    %3342 = vadd.xlane.f32.xlu0 %v3341
    %v3343 = vpop.xlane.xlu0 %3342
    %v3344 = vsel %vm698, %v3278, 0.0
    %3345 = vadd.xlane.f32.xlu0 %v3344
    %v3346 = vpop.xlane.xlu0 %3345
    %v3347 = vsel %vm698, %v3279, 0.0
    %3348 = vadd.xlane.f32.xlu0 %v3347
    %v3349 = vpop.xlane.xlu0 %3348
    %v3350 = vsel %vm698, %v3280, 0.0
    %3351 = vadd.xlane.f32.xlu0 %v3350
    %v3352 = vpop.xlane.xlu0 %3351
    %v3353 = vsel %vm698, %v3281, 0.0
    %3354 = vadd.xlane.f32.xlu0 %v3353
    %v3355 = vpop.xlane.xlu0 %3354
    %v3356 = vsel %vm698, %v3282, 0.0
    %3357 = vadd.xlane.f32.xlu0 %v3356
    %v3358 = vpop.xlane.xlu0 %3357
    %v3359 = vsel %vm698, %v3283, 0.0
    %3360 = vadd.xlane.f32.xlu0 %v3359
    %v3361 = vpop.xlane.xlu0 %3360
    %v3362 = vsel %vm698, %v3284, 0.0
    %3363 = vadd.xlane.f32.xlu0 %v3362
    %v3364 = vpop.xlane.xlu0 %3363
    %v3365 = vsel %vm698, %v3285, 0.0
    %3366 = vadd.xlane.f32.xlu0 %v3365
    %v3367 = vpop.xlane.xlu0 %3366
    %v3368 = vsel %vm698, %v3286, 0.0
    %3369 = vadd.xlane.f32.xlu0 %v3368
    %v3370 = vpop.xlane.xlu0 %3369
    %v3371 = vsel %vm698, %v3287, 0.0
    %3372 = vadd.xlane.f32.xlu0 %v3371
    %v3373 = vpop.xlane.xlu0 %3372
    %v3374 = vsel %vm698, %v3288, 0.0
    %3375 = vadd.xlane.f32.xlu0 %v3374
    %v3376 = vpop.xlane.xlu0 %3375
    %v3377 = vsel %vm698, %v3289, 0.0
    %3378 = vadd.xlane.f32.xlu0 %v3377
    %v3379 = vpop.xlane.xlu0 %3378
    %v3380 = vsel %vm698, %v3290, 0.0
    %3381 = vadd.xlane.f32.xlu0 %v3380
    %v3382 = vpop.xlane.xlu0 %3381
    %v3383 = vsel %vm698, %v3291, 0.0
    %3384 = vadd.xlane.f32.xlu0 %v3383
    %v3385 = vpop.xlane.xlu0 %3384
    %v3386 = vsel %vm698, %v3292, 0.0
    %3387 = vadd.xlane.f32.xlu0 %v3386
    %v3388 = vpop.xlane.xlu0 %3387
    %v3389 = vsel %vm698, %v3293, 0.0
    %3390 = vadd.xlane.f32.xlu0 %v3389
    %v3391 = vpop.xlane.xlu0 %3390
    %v3392 = vsel %vm698, %v3294, 0.0
    %3393 = vadd.xlane.f32.xlu0 %v3392
    %v3394 = vpop.xlane.xlu0 %3393
    %v3395 = vsel %vm698, %v3295, 0.0
    %3396 = vadd.xlane.f32.xlu0 %v3395
    %v3397 = vpop.xlane.xlu0 %3396
    %v3398 = vsel %vm698, %v3296, 0.0
    %3399 = vadd.xlane.f32.xlu0 %v3398
    %v3400 = vpop.xlane.xlu0 %3399
    %v3401 = vsel %vm698, %v3297, 0.0
    %3402 = vadd.xlane.f32.xlu0 %v3401
    %v3403 = vpop.xlane.xlu0 %3402
    %v3404 = vsel %vm698, %v3298, 0.0
    %3405 = vadd.xlane.f32.xlu0 %v3404
    %v3406 = vpop.xlane.xlu0 %3405
    %v3407 = vsel %vm698, %v3299, 0.0
    %3408 = vadd.xlane.f32.xlu0 %v3407
    %v3409 = vpop.xlane.xlu0 %3408
    %v3410 = vsel %vm698, %v3300, 0.0
    %3411 = vadd.xlane.f32.xlu0 %v3410
    %v3412 = vpop.xlane.xlu0 %3411
    %v3413 = vsel %vm698, %v3301, 0.0
    %3414 = vadd.xlane.f32.xlu0 %v3413
    %v3415 = vpop.xlane.xlu0 %3414
    %v3416 = vsel %vm698, %v3302, 0.0
    %3417 = vadd.xlane.f32.xlu0 %v3416
    %v3418 = vpop.xlane.xlu0 %3417
    %v3419 = vsel %vm698, %v3303, 0.0
    %3420 = vadd.xlane.f32.xlu0 %v3419
    %v3421 = vpop.xlane.xlu0 %3420
    %v3422 = vsel %vm698, %v3304, 0.0
    %3423 = vadd.xlane.f32.xlu0 %v3422
    %v3424 = vpop.xlane.xlu0 %3423
    %v3425 = vsel %vm698, %v3305, 0.0
    %3426 = vadd.xlane.f32.xlu0 %v3425
    %v3427 = vpop.xlane.xlu0 %3426
    %v3428 = vsel %vm698, %v3306, 0.0
    %3429 = vadd.xlane.f32.xlu0 %v3428
    %v3430 = vpop.xlane.xlu0 %3429
    %v3431 = vsel %vm698, %v3307, 0.0
    %3432 = vadd.xlane.f32.xlu0 %v3431
    %v3433 = vpop.xlane.xlu0 %3432
    %v3434 = vsel %vm698, %v3308, 0.0
    %3435 = vadd.xlane.f32.xlu0 %v3434
    %v3436 = vpop.xlane.xlu0 %3435
    %v3437 = vsel %vm698, %v3309, 0.0
    %3438 = vadd.xlane.f32.xlu0 %v3437
    %v3439 = vpop.xlane.xlu0 %3438
    %v3440 = vsel %vm698, %v3310, 0.0
    %3441 = vadd.xlane.f32.xlu0 %v3440
    %v3442 = vpop.xlane.xlu0 %3441
    %v3443 = vsel %vm698, %v3311, 0.0
    %3444 = vadd.xlane.f32.xlu0 %v3443
    %v3445 = vpop.xlane.xlu0 %3444
    %v3446 = vsel %vm698, %v3312, 0.0
    %3447 = vadd.xlane.f32.xlu0 %v3446
    %v3448 = vpop.xlane.xlu0 %3447
    %v3449 = vsel %vm698, %v3313, 0.0
    %3450 = vadd.xlane.f32.xlu0 %v3449
    %v3451 = vpop.xlane.xlu0 %3450
    %v3452 = vsel %vm698, %v3314, 0.0
    %3453 = vadd.xlane.f32.xlu0 %v3452
    %v3454 = vpop.xlane.xlu0 %3453
    %v3455 = vsel %vm698, %v3315, 0.0
    %3456 = vadd.xlane.f32.xlu0 %v3455
    %v3457 = vpop.xlane.xlu0 %3456
    %v3458 = vsel %vm698, %v3316, 0.0
    %3459 = vadd.xlane.f32.xlu0 %v3458
    %v3460 = vpop.xlane.xlu0 %3459
    %v3461 = vsel %vm698, %v3317, 0.0
    %3462 = vadd.xlane.f32.xlu0 %v3461
    %v3463 = vpop.xlane.xlu0 %3462
    %v3464 = vsel %vm698, %v3318, 0.0
    %3465 = vadd.xlane.f32.xlu0 %v3464
    %v3466 = vpop.xlane.xlu0 %3465
    %v3467 = vsel %vm698, %v3319, 0.0
    %3468 = vadd.xlane.f32.xlu0 %v3467
    %v3469 = vpop.xlane.xlu0 %3468
    %v3470 = vsel %vm698, %v3320, 0.0
    %3471 = vadd.xlane.f32.xlu0 %v3470
    %v3472 = vpop.xlane.xlu0 %3471
    %v3473 = vsel %vm698, %v3321, 0.0
    %3474 = vadd.xlane.f32.xlu0 %v3473
    %v3475 = vpop.xlane.xlu0 %3474
    %v3476 = vsel %vm698, %v3322, 0.0
    %3477 = vadd.xlane.f32.xlu0 %v3476
    %v3478 = vpop.xlane.xlu0 %3477
    %v3479 = vsel %vm698, %v3323, 0.0
    %3480 = vadd.xlane.f32.xlu0 %v3479
    %v3481 = vpop.xlane.xlu0 %3480
    %v3482 = vsel %vm698, %v3324, 0.0
    %3483 = vadd.xlane.f32.xlu0 %v3482
    %v3484 = vpop.xlane.xlu0 %3483
    %v3485 = vsel %vm698, %v3325, 0.0
    %3486 = vadd.xlane.f32.xlu0 %v3485
    %v3487 = vpop.xlane.xlu0 %3486
    %v3488 = vsel %vm698, %v3326, 0.0
    %3489 = vadd.xlane.f32.xlu0 %v3488
    %v3490 = vpop.xlane.xlu0 %3489
    %v3491 = vsel %vm698, %v3327, 0.0
    %3492 = vadd.xlane.f32.xlu0 %v3491
    %v3493 = vpop.xlane.xlu0 %3492
    %v3494 = vsel %vm698, %v3328, 0.0
    %3495 = vadd.xlane.f32.xlu0 %v3494
    %v3496 = vpop.xlane.xlu0 %3495
    %v3497 = vsel %vm698, %v3329, 0.0
    %3498 = vadd.xlane.f32.xlu0 %v3497
    %v3499 = vpop.xlane.xlu0 %3498
    %v3500 = vsel %vm698, %v3330, 0.0
    %3501 = vadd.xlane.f32.xlu0 %v3500
    %v3502 = vpop.xlane.xlu0 %3501
    %v3503 = vsel %vm698, %v3331, 0.0
    %3504 = vadd.xlane.f32.xlu0 %v3503
    %v3505 = vpop.xlane.xlu0 %3504
    %v3506 = vsel %vm698, %v3332, 0.0
    %3507 = vadd.xlane.f32.xlu0 %v3506
    %v3508 = vpop.xlane.xlu0 %3507
    %v3509 = vsel %vm698, %v3333, 0.0
    %3510 = vadd.xlane.f32.xlu0 %v3509
    %v3511 = vpop.xlane.xlu0 %3510
    %v3512 = vsel %vm698, %v3334, 0.0
    %3513 = vadd.xlane.f32.xlu0 %v3512
    %v3514 = vpop.xlane.xlu0 %3513
    %v3515 = vsel %vm698, %v3335, 0.0
    %3516 = vadd.xlane.f32.xlu0 %v3515
    %v3517 = vpop.xlane.xlu0 %3516
    %v3518 = vsel %vm698, %v3336, 0.0
    %3519 = vadd.xlane.f32.xlu0 %v3518
    %v3520 = vpop.xlane.xlu0 %3519
    %v3521 = vsel %vm698, %v3337, 0.0
    %3522 = vadd.xlane.f32.xlu0 %v3521
    %v3523 = vpop.xlane.xlu0 %3522
    %v3524 = vsel %vm698, %v3338, 0.0
    %3525 = vadd.xlane.f32.xlu0 %v3524
    %v3526 = vpop.xlane.xlu0 %3525
    %v3527 = vsel %vm698, %v3339, 0.0
    %3528 = vadd.xlane.f32.xlu0 %v3527
    %v3529 = vpop.xlane.xlu0 %3528
    %v3530 = vsel %vm698, %v3340, 0.0
    %3531 = vadd.xlane.f32.xlu0 %v3530
    %v3532 = vpop.xlane.xlu0 %3531
    %v3533 = vadd.f32 %v3343, %v1460
    %v3534 = vadd.f32 %v3346, %v1462
    %v3535 = vadd.f32 %v3349, %v1464
    %v3536 = vadd.f32 %v3352, %v1466
    %v3537 = vadd.f32 %v3355, %v1468
    %v3538 = vadd.f32 %v3358, %v1470
    %v3539 = vadd.f32 %v3361, %v1472
    %v3540 = vadd.f32 %v3364, %v1474
    %v3541 = vadd.f32 %v3367, %v1476
    %v3542 = vadd.f32 %v3370, %v1478
    %v3543 = vadd.f32 %v3373, %v1480
    %v3544 = vadd.f32 %v3376, %v1482
    %v3545 = vadd.f32 %v3379, %v1484
    %v3546 = vadd.f32 %v3382, %v1486
    %v3547 = vadd.f32 %v3385, %v1488
    %v3548 = vadd.f32 %v3388, %v1490
    %v3549 = vadd.f32 %v3391, %v1492
    %v3550 = vadd.f32 %v3394, %v1494
    %v3551 = vadd.f32 %v3397, %v1496
    %v3552 = vadd.f32 %v3400, %v1498
    %v3553 = vadd.f32 %v3403, %v1500
    %v3554 = vadd.f32 %v3406, %v1502
    %v3555 = vadd.f32 %v3409, %v1504
    %v3556 = vadd.f32 %v3412, %v1506
    %v3557 = vadd.f32 %v3415, %v1508
    %v3558 = vadd.f32 %v3418, %v1510
    %v3559 = vadd.f32 %v3421, %v1512
    %v3560 = vadd.f32 %v3424, %v1514
    %v3561 = vadd.f32 %v3427, %v1516
    %v3562 = vadd.f32 %v3430, %v1518
    %v3563 = vadd.f32 %v3433, %v1520
    %v3564 = vadd.f32 %v3436, %v1522
    %v3565 = vadd.f32 %v3439, %v1524
    %v3566 = vadd.f32 %v3442, %v1526
    %v3567 = vadd.f32 %v3445, %v1528
    %v3568 = vadd.f32 %v3448, %v1530
    %v3569 = vadd.f32 %v3451, %v1532
    %v3570 = vadd.f32 %v3454, %v1534
    %v3571 = vadd.f32 %v3457, %v1536
    %v3572 = vadd.f32 %v3460, %v1538
    %v3573 = vadd.f32 %v3463, %v1540
    %v3574 = vadd.f32 %v3466, %v1542
    %v3575 = vadd.f32 %v3469, %v1544
    %v3576 = vadd.f32 %v3472, %v1546
    %v3577 = vadd.f32 %v3475, %v1548
    %v3578 = vadd.f32 %v3478, %v1550
    %v3579 = vadd.f32 %v3481, %v1552
    %v3580 = vadd.f32 %v3484, %v1554
    %v3581 = vadd.f32 %v3487, %v1556
    %v3582 = vadd.f32 %v3490, %v1558
    %v3583 = vadd.f32 %v3493, %v1560
    %v3584 = vadd.f32 %v3496, %v1562
    %v3585 = vadd.f32 %v3499, %v1564
    %v3586 = vadd.f32 %v3502, %v1566
    %v3587 = vadd.f32 %v3505, %v1568
    %v3588 = vadd.f32 %v3508, %v1570
    %v3589 = vadd.f32 %v3511, %v1572
    %v3590 = vadd.f32 %v3514, %v1574
    %v3591 = vadd.f32 %v3517, %v1576
    %v3592 = vadd.f32 %v3520, %v1578
    %v3593 = vadd.f32 %v3523, %v1580
    %v3594 = vadd.f32 %v3526, %v1582
    %v3595 = vadd.f32 %v3529, %v1584
    %v3596 = vadd.f32 %v3532, %v1586
    %s3597 = smul.u32 0, 512
    %v3598 = vlaneseq
    %v3599 = vshrl.u32 %v3598, 7
    %v3600 = vadd.s32 %v3599, 8
    %v3601 = vadd.s32 %v3599, 16
    %v3602 = vadd.s32 %v3599, 24
    %v3603 = vadd.s32 %v3599, 32
    %v3604 = vadd.s32 %v3599, 40
    %v3605 = vadd.s32 %v3599, 48
    %v3606 = vadd.s32 %v3599, 56
    %v3607 = vadd.s32 %v3599, 64
    %v3608 = vadd.s32 %v3599, 72
    %v3609 = vadd.s32 %v3599, 80
    %v3610 = vadd.s32 %v3599, 88
    %v3611 = vadd.s32 %v3599, 96
    %v3612 = vadd.s32 %v3599, 104
    %v3613 = vadd.s32 %v3599, 112
    %v3614 = vadd.s32 %v3599, 120
    %v3615 = vadd.s32 %v3599, 128
    %v3616 = vadd.s32 %v3599, 136
    %v3617 = vadd.s32 %v3599, 144
    %v3618 = vadd.s32 %v3599, 152
    %v3619 = vadd.s32 %v3599, 160
    %v3620 = vadd.s32 %v3599, 168
    %v3621 = vadd.s32 %v3599, 176
    %v3622 = vadd.s32 %v3599, 184
    %v3623 = vadd.s32 %v3599, 192
    %v3624 = vadd.s32 %v3599, 200
    %v3625 = vadd.s32 %v3599, 208
    %v3626 = vadd.s32 %v3599, 216
    %v3627 = vadd.s32 %v3599, 224
    %v3628 = vadd.s32 %v3599, 232
    %v3629 = vadd.s32 %v3599, 240
    %v3630 = vadd.s32 %v3599, 248
    %v3631 = vadd.s32 %v3599, 256
    %v3632 = vadd.s32 %v3599, 264
    %v3633 = vadd.s32 %v3599, 272
    %v3634 = vadd.s32 %v3599, 280
    %v3635 = vadd.s32 %v3599, 288
    %v3636 = vadd.s32 %v3599, 296
    %v3637 = vadd.s32 %v3599, 304
    %v3638 = vadd.s32 %v3599, 312
    %v3639 = vadd.s32 %v3599, 320
    %v3640 = vadd.s32 %v3599, 328
    %v3641 = vadd.s32 %v3599, 336
    %v3642 = vadd.s32 %v3599, 344
    %v3643 = vadd.s32 %v3599, 352
    %v3644 = vadd.s32 %v3599, 360
    %v3645 = vadd.s32 %v3599, 368
    %v3646 = vadd.s32 %v3599, 376
    %v3647 = vadd.s32 %v3599, 384
    %v3648 = vadd.s32 %v3599, 392
    %v3649 = vadd.s32 %v3599, 400
    %v3650 = vadd.s32 %v3599, 408
    %v3651 = vadd.s32 %v3599, 416
    %v3652 = vadd.s32 %v3599, 424
    %v3653 = vadd.s32 %v3599, 432
    %v3654 = vadd.s32 %v3599, 440
    %v3655 = vadd.s32 %v3599, 448
    %v3656 = vadd.s32 %v3599, 456
    %v3657 = vadd.s32 %v3599, 464
    %v3658 = vadd.s32 %v3599, 472
    %v3659 = vadd.s32 %v3599, 480
    %v3660 = vadd.s32 %v3599, 488
    %v3661 = vadd.s32 %v3599, 496
    %v3662 = vadd.s32 %v3599, 504
    %v3663 = vstv %s3597
    %v3664 = vadd.s32 %v3663, %v3599
    %v3665 = vadd.s32 %v3663, %v3600
    %v3666 = vadd.s32 %v3663, %v3601
    %v3667 = vadd.s32 %v3663, %v3602
    %v3668 = vadd.s32 %v3663, %v3603
    %v3669 = vadd.s32 %v3663, %v3604
    %v3670 = vadd.s32 %v3663, %v3605
    %v3671 = vadd.s32 %v3663, %v3606
    %v3672 = vadd.s32 %v3663, %v3607
    %v3673 = vadd.s32 %v3663, %v3608
    %v3674 = vadd.s32 %v3663, %v3609
    %v3675 = vadd.s32 %v3663, %v3610
    %v3676 = vadd.s32 %v3663, %v3611
    %v3677 = vadd.s32 %v3663, %v3612
    %v3678 = vadd.s32 %v3663, %v3613
    %v3679 = vadd.s32 %v3663, %v3614
    %v3680 = vadd.s32 %v3663, %v3615
    %v3681 = vadd.s32 %v3663, %v3616
    %v3682 = vadd.s32 %v3663, %v3617
    %v3683 = vadd.s32 %v3663, %v3618
    %v3684 = vadd.s32 %v3663, %v3619
    %v3685 = vadd.s32 %v3663, %v3620
    %v3686 = vadd.s32 %v3663, %v3621
    %v3687 = vadd.s32 %v3663, %v3622
    %v3688 = vadd.s32 %v3663, %v3623
    %v3689 = vadd.s32 %v3663, %v3624
    %v3690 = vadd.s32 %v3663, %v3625
    %v3691 = vadd.s32 %v3663, %v3626
    %v3692 = vadd.s32 %v3663, %v3627
    %v3693 = vadd.s32 %v3663, %v3628
    %v3694 = vadd.s32 %v3663, %v3629
    %v3695 = vadd.s32 %v3663, %v3630
    %v3696 = vadd.s32 %v3663, %v3631
    %v3697 = vadd.s32 %v3663, %v3632
    %v3698 = vadd.s32 %v3663, %v3633
    %v3699 = vadd.s32 %v3663, %v3634
    %v3700 = vadd.s32 %v3663, %v3635
    %v3701 = vadd.s32 %v3663, %v3636
    %v3702 = vadd.s32 %v3663, %v3637
    %v3703 = vadd.s32 %v3663, %v3638
    %v3704 = vadd.s32 %v3663, %v3639
    %v3705 = vadd.s32 %v3663, %v3640
    %v3706 = vadd.s32 %v3663, %v3641
    %v3707 = vadd.s32 %v3663, %v3642
    %v3708 = vadd.s32 %v3663, %v3643
    %v3709 = vadd.s32 %v3663, %v3644
    %v3710 = vadd.s32 %v3663, %v3645
    %v3711 = vadd.s32 %v3663, %v3646
    %v3712 = vadd.s32 %v3663, %v3647
    %v3713 = vadd.s32 %v3663, %v3648
    %v3714 = vadd.s32 %v3663, %v3649
    %v3715 = vadd.s32 %v3663, %v3650
    %v3716 = vadd.s32 %v3663, %v3651
    %v3717 = vadd.s32 %v3663, %v3652
    %v3718 = vadd.s32 %v3663, %v3653
    %v3719 = vadd.s32 %v3663, %v3654
    %v3720 = vadd.s32 %v3663, %v3655
    %v3721 = vadd.s32 %v3663, %v3656
    %v3722 = vadd.s32 %v3663, %v3657
    %v3723 = vadd.s32 %v3663, %v3658
    %v3724 = vadd.s32 %v3663, %v3659
    %v3725 = vadd.s32 %v3663, %v3660
    %v3726 = vadd.s32 %v3663, %v3661
    %v3727 = vadd.s32 %v3663, %v3662
    %vm3728 = vcmp.lt.s32.totalorder %v3664, 512
    %vm3729 = vcmp.lt.s32.totalorder %v3665, 512
    %vm3730 = vcmp.lt.s32.totalorder %v3666, 512
    %vm3731 = vcmp.lt.s32.totalorder %v3667, 512
    %vm3732 = vcmp.lt.s32.totalorder %v3668, 512
    %vm3733 = vcmp.lt.s32.totalorder %v3669, 512
    %vm3734 = vcmp.lt.s32.totalorder %v3670, 512
    %vm3735 = vcmp.lt.s32.totalorder %v3671, 512
    %vm3736 = vcmp.lt.s32.totalorder %v3672, 512
    %vm3737 = vcmp.lt.s32.totalorder %v3673, 512
    %vm3738 = vcmp.lt.s32.totalorder %v3674, 512
    %vm3739 = vcmp.lt.s32.totalorder %v3675, 512
    %vm3740 = vcmp.lt.s32.totalorder %v3676, 512
    %vm3741 = vcmp.lt.s32.totalorder %v3677, 512
    %vm3742 = vcmp.lt.s32.totalorder %v3678, 512
    %vm3743 = vcmp.lt.s32.totalorder %v3679, 512
    %vm3744 = vcmp.lt.s32.totalorder %v3680, 512
    %vm3745 = vcmp.lt.s32.totalorder %v3681, 512
    %vm3746 = vcmp.lt.s32.totalorder %v3682, 512
    %vm3747 = vcmp.lt.s32.totalorder %v3683, 512
    %vm3748 = vcmp.lt.s32.totalorder %v3684, 512
    %vm3749 = vcmp.lt.s32.totalorder %v3685, 512
    %vm3750 = vcmp.lt.s32.totalorder %v3686, 512
    %vm3751 = vcmp.lt.s32.totalorder %v3687, 512
    %vm3752 = vcmp.lt.s32.totalorder %v3688, 512
    %vm3753 = vcmp.lt.s32.totalorder %v3689, 512
    %vm3754 = vcmp.lt.s32.totalorder %v3690, 512
    %vm3755 = vcmp.lt.s32.totalorder %v3691, 512
    %vm3756 = vcmp.lt.s32.totalorder %v3692, 512
    %vm3757 = vcmp.lt.s32.totalorder %v3693, 512
    %vm3758 = vcmp.lt.s32.totalorder %v3694, 512
    %vm3759 = vcmp.lt.s32.totalorder %v3695, 512
    %vm3760 = vcmp.lt.s32.totalorder %v3696, 512
    %vm3761 = vcmp.lt.s32.totalorder %v3697, 512
    %vm3762 = vcmp.lt.s32.totalorder %v3698, 512
    %vm3763 = vcmp.lt.s32.totalorder %v3699, 512
    %vm3764 = vcmp.lt.s32.totalorder %v3700, 512
    %vm3765 = vcmp.lt.s32.totalorder %v3701, 512
    %vm3766 = vcmp.lt.s32.totalorder %v3702, 512
    %vm3767 = vcmp.lt.s32.totalorder %v3703, 512
    %vm3768 = vcmp.lt.s32.totalorder %v3704, 512
    %vm3769 = vcmp.lt.s32.totalorder %v3705, 512
    %vm3770 = vcmp.lt.s32.totalorder %v3706, 512
    %vm3771 = vcmp.lt.s32.totalorder %v3707, 512
    %vm3772 = vcmp.lt.s32.totalorder %v3708, 512
    %vm3773 = vcmp.lt.s32.totalorder %v3709, 512
    %vm3774 = vcmp.lt.s32.totalorder %v3710, 512
    %vm3775 = vcmp.lt.s32.totalorder %v3711, 512
    %vm3776 = vcmp.lt.s32.totalorder %v3712, 512
    %vm3777 = vcmp.lt.s32.totalorder %v3713, 512
    %vm3778 = vcmp.lt.s32.totalorder %v3714, 512
    %vm3779 = vcmp.lt.s32.totalorder %v3715, 512
    %vm3780 = vcmp.lt.s32.totalorder %v3716, 512
    %vm3781 = vcmp.lt.s32.totalorder %v3717, 512
    %vm3782 = vcmp.lt.s32.totalorder %v3718, 512
    %vm3783 = vcmp.lt.s32.totalorder %v3719, 512
    %vm3784 = vcmp.lt.s32.totalorder %v3720, 512
    %vm3785 = vcmp.lt.s32.totalorder %v3721, 512
    %vm3786 = vcmp.lt.s32.totalorder %v3722, 512
    %vm3787 = vcmp.lt.s32.totalorder %v3723, 512
    %vm3788 = vcmp.lt.s32.totalorder %v3724, 512
    %vm3789 = vcmp.lt.s32.totalorder %v3725, 512
    %vm3790 = vcmp.lt.s32.totalorder %v3726, 512
    %vm3791 = vcmp.lt.s32.totalorder %v3727, 512
    %v3792 = vsel %vm3728, %v3533, 0.0
    %v3793 = vsel %vm3729, %v3534, 0.0
    %v3794 = vsel %vm3730, %v3535, 0.0
    %v3795 = vsel %vm3731, %v3536, 0.0
    %v3796 = vsel %vm3732, %v3537, 0.0
    %v3797 = vsel %vm3733, %v3538, 0.0
    %v3798 = vsel %vm3734, %v3539, 0.0
    %v3799 = vsel %vm3735, %v3540, 0.0
    %v3800 = vsel %vm3736, %v3541, 0.0
    %v3801 = vsel %vm3737, %v3542, 0.0
    %v3802 = vsel %vm3738, %v3543, 0.0
    %v3803 = vsel %vm3739, %v3544, 0.0
    %v3804 = vsel %vm3740, %v3545, 0.0
    %v3805 = vsel %vm3741, %v3546, 0.0
    %v3806 = vsel %vm3742, %v3547, 0.0
    %v3807 = vsel %vm3743, %v3548, 0.0
    %v3808 = vsel %vm3744, %v3549, 0.0
    %v3809 = vsel %vm3745, %v3550, 0.0
    %v3810 = vsel %vm3746, %v3551, 0.0
    %v3811 = vsel %vm3747, %v3552, 0.0
    %v3812 = vsel %vm3748, %v3553, 0.0
    %v3813 = vsel %vm3749, %v3554, 0.0
    %v3814 = vsel %vm3750, %v3555, 0.0
    %v3815 = vsel %vm3751, %v3556, 0.0
    %v3816 = vsel %vm3752, %v3557, 0.0
    %v3817 = vsel %vm3753, %v3558, 0.0
    %v3818 = vsel %vm3754, %v3559, 0.0
    %v3819 = vsel %vm3755, %v3560, 0.0
    %v3820 = vsel %vm3756, %v3561, 0.0
    %v3821 = vsel %vm3757, %v3562, 0.0
    %v3822 = vsel %vm3758, %v3563, 0.0
    %v3823 = vsel %vm3759, %v3564, 0.0
    %v3824 = vsel %vm3760, %v3565, 0.0
    %v3825 = vsel %vm3761, %v3566, 0.0
    %v3826 = vsel %vm3762, %v3567, 0.0
    %v3827 = vsel %vm3763, %v3568, 0.0
    %v3828 = vsel %vm3764, %v3569, 0.0
    %v3829 = vsel %vm3765, %v3570, 0.0
    %v3830 = vsel %vm3766, %v3571, 0.0
    %v3831 = vsel %vm3767, %v3572, 0.0
    %v3832 = vsel %vm3768, %v3573, 0.0
    %v3833 = vsel %vm3769, %v3574, 0.0
    %v3834 = vsel %vm3770, %v3575, 0.0
    %v3835 = vsel %vm3771, %v3576, 0.0
    %v3836 = vsel %vm3772, %v3577, 0.0
    %v3837 = vsel %vm3773, %v3578, 0.0
    %v3838 = vsel %vm3774, %v3579, 0.0
    %v3839 = vsel %vm3775, %v3580, 0.0
    %v3840 = vsel %vm3776, %v3581, 0.0
    %v3841 = vsel %vm3777, %v3582, 0.0
    %v3842 = vsel %vm3778, %v3583, 0.0
    %v3843 = vsel %vm3779, %v3584, 0.0
    %v3844 = vsel %vm3780, %v3585, 0.0
    %v3845 = vsel %vm3781, %v3586, 0.0
    %v3846 = vsel %vm3782, %v3587, 0.0
    %v3847 = vsel %vm3783, %v3588, 0.0
    %v3848 = vsel %vm3784, %v3589, 0.0
    %v3849 = vsel %vm3785, %v3590, 0.0
    %v3850 = vsel %vm3786, %v3591, 0.0
    %v3851 = vsel %vm3787, %v3592, 0.0
    %v3852 = vsel %vm3788, %v3593, 0.0
    %v3853 = vsel %vm3789, %v3594, 0.0
    %v3854 = vsel %vm3790, %v3595, 0.0
    %v3855 = vsel %vm3791, %v3596, 0.0
    %vm3856 = vcmask 7168
    %v3857 = vsel %vm3856, %v3792, 0.0
    %v3858 = vsel %vm3856, %v3793, 0.0
    %v3859 = vadd.f32 %v3857, %v3858
    %v3860 = vsel %vm3856, %v3794, 0.0
    %v3861 = vadd.f32 %v3859, %v3860
    %v3862 = vsel %vm3856, %v3795, 0.0
    %v3863 = vadd.f32 %v3861, %v3862
    %v3864 = vsel %vm3856, %v3796, 0.0
    %v3865 = vadd.f32 %v3863, %v3864
    %v3866 = vsel %vm3856, %v3797, 0.0
    %v3867 = vadd.f32 %v3865, %v3866
    %v3868 = vsel %vm3856, %v3798, 0.0
    %v3869 = vadd.f32 %v3867, %v3868
    %v3870 = vsel %vm3856, %v3799, 0.0
    %v3871 = vadd.f32 %v3869, %v3870
    %v3872 = vsel %vm3856, %v3800, 0.0
    %v3873 = vadd.f32 %v3871, %v3872
    %v3874 = vsel %vm3856, %v3801, 0.0
    %v3875 = vadd.f32 %v3873, %v3874
    %v3876 = vsel %vm3856, %v3802, 0.0
    %v3877 = vadd.f32 %v3875, %v3876
    %v3878 = vsel %vm3856, %v3803, 0.0
    %v3879 = vadd.f32 %v3877, %v3878
    %v3880 = vsel %vm3856, %v3804, 0.0
    %v3881 = vadd.f32 %v3879, %v3880
    %v3882 = vsel %vm3856, %v3805, 0.0
    %v3883 = vadd.f32 %v3881, %v3882
    %v3884 = vsel %vm3856, %v3806, 0.0
    %v3885 = vadd.f32 %v3883, %v3884
    %v3886 = vsel %vm3856, %v3807, 0.0
    %v3887 = vadd.f32 %v3885, %v3886
    %v3888 = vsel %vm3856, %v3808, 0.0
    %v3889 = vadd.f32 %v3887, %v3888
    %v3890 = vsel %vm3856, %v3809, 0.0
    %v3891 = vadd.f32 %v3889, %v3890
    %v3892 = vsel %vm3856, %v3810, 0.0
    %v3893 = vadd.f32 %v3891, %v3892
    %v3894 = vsel %vm3856, %v3811, 0.0
    %v3895 = vadd.f32 %v3893, %v3894
    %v3896 = vsel %vm3856, %v3812, 0.0
    %v3897 = vadd.f32 %v3895, %v3896
    %v3898 = vsel %vm3856, %v3813, 0.0
    %v3899 = vadd.f32 %v3897, %v3898
    %v3900 = vsel %vm3856, %v3814, 0.0
    %v3901 = vadd.f32 %v3899, %v3900
    %v3902 = vsel %vm3856, %v3815, 0.0
    %v3903 = vadd.f32 %v3901, %v3902
    %v3904 = vsel %vm3856, %v3816, 0.0
    %v3905 = vadd.f32 %v3903, %v3904
    %v3906 = vsel %vm3856, %v3817, 0.0
    %v3907 = vadd.f32 %v3905, %v3906
    %v3908 = vsel %vm3856, %v3818, 0.0
    %v3909 = vadd.f32 %v3907, %v3908
    %v3910 = vsel %vm3856, %v3819, 0.0
    %v3911 = vadd.f32 %v3909, %v3910
    %v3912 = vsel %vm3856, %v3820, 0.0
    %v3913 = vadd.f32 %v3911, %v3912
    %v3914 = vsel %vm3856, %v3821, 0.0
    %v3915 = vadd.f32 %v3913, %v3914
    %v3916 = vsel %vm3856, %v3822, 0.0
    %v3917 = vadd.f32 %v3915, %v3916
    %v3918 = vsel %vm3856, %v3823, 0.0
    %v3919 = vadd.f32 %v3917, %v3918
    %v3920 = vsel %vm3856, %v3824, 0.0
    %v3921 = vadd.f32 %v3919, %v3920
    %v3922 = vsel %vm3856, %v3825, 0.0
    %v3923 = vadd.f32 %v3921, %v3922
    %v3924 = vsel %vm3856, %v3826, 0.0
    %v3925 = vadd.f32 %v3923, %v3924
    %v3926 = vsel %vm3856, %v3827, 0.0
    %v3927 = vadd.f32 %v3925, %v3926
    %v3928 = vsel %vm3856, %v3828, 0.0
    %v3929 = vadd.f32 %v3927, %v3928
    %v3930 = vsel %vm3856, %v3829, 0.0
    %v3931 = vadd.f32 %v3929, %v3930
    %v3932 = vsel %vm3856, %v3830, 0.0
    %v3933 = vadd.f32 %v3931, %v3932
    %v3934 = vsel %vm3856, %v3831, 0.0
    %v3935 = vadd.f32 %v3933, %v3934
    %v3936 = vsel %vm3856, %v3832, 0.0
    %v3937 = vadd.f32 %v3935, %v3936
    %v3938 = vsel %vm3856, %v3833, 0.0
    %v3939 = vadd.f32 %v3937, %v3938
    %v3940 = vsel %vm3856, %v3834, 0.0
    %v3941 = vadd.f32 %v3939, %v3940
    %v3942 = vsel %vm3856, %v3835, 0.0
    %v3943 = vadd.f32 %v3941, %v3942
    %v3944 = vsel %vm3856, %v3836, 0.0
    %v3945 = vadd.f32 %v3943, %v3944
    %v3946 = vsel %vm3856, %v3837, 0.0
    %v3947 = vadd.f32 %v3945, %v3946
    %v3948 = vsel %vm3856, %v3838, 0.0
    %v3949 = vadd.f32 %v3947, %v3948
    %v3950 = vsel %vm3856, %v3839, 0.0
    %v3951 = vadd.f32 %v3949, %v3950
    %v3952 = vsel %vm3856, %v3840, 0.0
    %v3953 = vadd.f32 %v3951, %v3952
    %v3954 = vsel %vm3856, %v3841, 0.0
    %v3955 = vadd.f32 %v3953, %v3954
    %v3956 = vsel %vm3856, %v3842, 0.0
    %v3957 = vadd.f32 %v3955, %v3956
    %v3958 = vsel %vm3856, %v3843, 0.0
    %v3959 = vadd.f32 %v3957, %v3958
    %v3960 = vsel %vm3856, %v3844, 0.0
    %v3961 = vadd.f32 %v3959, %v3960
    %v3962 = vsel %vm3856, %v3845, 0.0
    %v3963 = vadd.f32 %v3961, %v3962
    %v3964 = vsel %vm3856, %v3846, 0.0
    %v3965 = vadd.f32 %v3963, %v3964
    %v3966 = vsel %vm3856, %v3847, 0.0
    %v3967 = vadd.f32 %v3965, %v3966
    %v3968 = vsel %vm3856, %v3848, 0.0
    %v3969 = vadd.f32 %v3967, %v3968
    %v3970 = vsel %vm3856, %v3849, 0.0
    %v3971 = vadd.f32 %v3969, %v3970
    %v3972 = vsel %vm3856, %v3850, 0.0
    %v3973 = vadd.f32 %v3971, %v3972
    %v3974 = vsel %vm3856, %v3851, 0.0
    %v3975 = vadd.f32 %v3973, %v3974
    %v3976 = vsel %vm3856, %v3852, 0.0
    %v3977 = vadd.f32 %v3975, %v3976
    %v3978 = vsel %vm3856, %v3853, 0.0
    %v3979 = vadd.f32 %v3977, %v3978
    %v3980 = vsel %vm3856, %v3854, 0.0
    %v3981 = vadd.f32 %v3979, %v3980
    %v3982 = vsel %vm3856, %v3855, 0.0
    %v3983 = vadd.f32 %v3981, %v3982
    %3984 = vadd.xlane.f32.xlu0 %v3983
    %v3985 = vpop.xlane.xlu0 %3984
    %v3986 = vrot.slane %v3985, 4
    %v3987 = vadd.f32 %v3985, %v3986
    %v3988 = vrot.slane %v3987, 2
    %v3989 = vadd.f32 %v3987, %v3988
    %v3990 = vrot.slane %v3989, 1
    %v3991 = vadd.f32 %v3989, %v3990
    %s3992 = vtos %v3991
    %v3993 = vstv %s3992
    %3994 = vst [vmem:[#allocation2] sm:$0xff] %v3993
    // Predicated region
    $region30: #{tpu_custom_call.1} parent=1 // pred_check
      _
    $region31: #{tpu_custom_call.1} parent=1 // pred_check_branch
      %3996 = sbr.rel (0) target = $region33
    $region32: #{tpu_custom_call.1} parent=1 // pred_region
      _
    $region33: #{tpu_custom_call.1} parent=1 // pred_fallthru
      _
    // Predicated region
    $region34: #{tpu_custom_call.1} parent=1 // pred_check
      _
    $region35: #{tpu_custom_call.1} parent=1 // pred_check_branch
      %3998 = sbr.rel (0) target = $region37
    $region36: #{tpu_custom_call.1} parent=1 // pred_region
      %s4000 = ssub.s32 128, 128
      %4001 = vsyncadd [#allocation3], %s4000
      %s4003 = sshll.u32 [#allocation2], 4
      %s4004 = int_to_ptr.vmem [resolvable:$true] %s4003
      %4006 = dma.vmem_to_hbm [thread:$0]  %s4004, 128, %s8, [#allocation3]
    $region37: #{tpu_custom_call.1} parent=1 // pred_fallthru
      _
    // Predicated region
    $region38: #{tpu_custom_call.1} parent=1 // pred_check
      _
    $region39: #{tpu_custom_call.1} parent=1 // pred_check_branch
      %4008 = sbr.rel (0) target = $region41
    $region40: #{tpu_custom_call.1} parent=1 // pred_region
      _
    $region41: #{tpu_custom_call.1} parent=1 // pred_fallthru
      _
    // Predicated region
    $region42: #{tpu_custom_call.1} parent=1 // pred_check
      _
    $region43: #{tpu_custom_call.1} parent=1 // pred_check_branch
      %4010 = sbr.rel (0) target = $region45
    $region44: #{tpu_custom_call.1} parent=1 // pred_region
      %4011 = dma.done [#allocation3], 128
    $region45: #{tpu_custom_call.1} parent=1 // pred_fallthru
      _
    %4012 = vsyncpa [#allocation3], 1

</llo_original>
